<compile_context>
chip_gen: v6e
topology: v6e:2x2x1
jax: 0.10.0
libtpu: 0.0.40
codegen_flags: <defaults>
</compile_context>

<pallas_src>
import jax
import jax.numpy as jnp
from jax.experimental import pallas as pl
from jax.experimental.pallas import tpu as pltpu

ORG_SIZE = 1152   # input / output feature size
H1 = 512
H2 = 128
LATENT = 64
LATENT_PAD = 128  # lane-dense latent (vreg lane width = 128)


def _round_up(n, m):
    return ((n + m - 1) // m) * m


def _choose_tb(B):
    """Pick the batch tile.

    Small B: one sublane-aligned tile (padding-dominated otherwise).
    Larger B: split the batch across >= 2 grid steps so v7x's two TensorCores
    both get work; cap at 512 rows so the per-step VMEM footprint stays small.
    """
    if B <= 128:
        return _round_up(B, 8)
    return min(512, _round_up(pl.cdiv(B, 2), 128))


def autoencoder_kernel(
    x_ref,
    ew1_ref, eb1_ref, ew2_ref, eb2_ref, ew3_ref, eb3_ref,   # encoder
    dw1_ref, db1_ref, dw2_ref, db2_ref, dw3_ref, db3_ref,   # decoder
    feat_ref, out_ref,
):
    # bf16 only at the MXU boundary; accumulation, bias-add and ReLU in f32.
    x = x_ref[...]  # already bf16 (cast at the pallas_call boundary)

    # ---- Encoder ----
    h = jnp.dot(x, ew1_ref[...], preferred_element_type=jnp.float32) + eb1_ref[...]
    h = jnp.maximum(h, 0.0)
    h = jnp.dot(h.astype(jnp.bfloat16), ew2_ref[...],
                preferred_element_type=jnp.float32) + eb2_ref[...]
    h = jnp.maximum(h, 0.0)
    feat = jnp.dot(h.astype(jnp.bfloat16), ew3_ref[...],
                   preferred_element_type=jnp.float32) + eb3_ref[...]
    # (TB, 128); pad lanes [64:128] are exactly zero (zero-padded ew3/eb3).
    feat_ref[...] = feat

    # ---- Decoder ----
    h = jnp.dot(feat.astype(jnp.bfloat16), dw1_ref[...],
                preferred_element_type=jnp.float32) + db1_ref[...]
    h = jnp.maximum(h, 0.0)
    h = jnp.dot(h.astype(jnp.bfloat16), dw2_ref[...],
                preferred_element_type=jnp.float32) + db2_ref[...]
    h = jnp.maximum(h, 0.0)
    out = jnp.dot(h.astype(jnp.bfloat16), dw3_ref[...],
                  preferred_element_type=jnp.float32) + db3_ref[...]
    out_ref[...] = out.astype(out_ref.dtype)  # bf16 writeback (halves HBM traffic)


def prepare_params(params):
    """Cast weights to bf16 and pad the 64-wide latent boundary to 128 lanes."""
    p = {}
    p["ew1"] = params["ew1"].astype(jnp.bfloat16)
    p["eb1"] = params["eb1"]
    p["ew2"] = params["ew2"].astype(jnp.bfloat16)
    p["eb2"] = params["eb2"]
    p["ew3"] = jnp.pad(params["ew3"], ((0, 0), (0, LATENT_PAD - LATENT))
                       ).astype(jnp.bfloat16)
    p["eb3"] = jnp.pad(params["eb3"], ((0, 0), (0, LATENT_PAD - LATENT)))
    p["dw1"] = jnp.pad(params["dw1"], ((0, LATENT_PAD - LATENT), (0, 0))
                       ).astype(jnp.bfloat16)
    p["db1"] = params["db1"]
    p["dw2"] = params["dw2"].astype(jnp.bfloat16)
    p["db2"] = params["db2"]
    p["dw3"] = params["dw3"].astype(jnp.bfloat16)
    p["db3"] = params["db3"]
    return p


def autoencoder_forward(x, prepared, *, tb=None, padded_latent=False):
    """Fused autoencoder forward.

    Returns (feature, recon). recon is bf16 (cast back to f32 outside if
    needed). With padded_latent=True the 128-wide zero-padded latent is
    returned (rows-only slice), avoiding a post-kernel lane relayout.
    """
    B = x.shape[0]
    assert x.shape[1] == ORG_SIZE
    if tb is None:
        tb = _choose_tb(B)
    Bp = _round_up(B, tb)

    # Activation I/O in bf16 (kernel accumulates in f32). Cast + pad together
    # so XLA fuses them with the producer when this wrapper is jitted.
    x = x.astype(jnp.bfloat16)
    if Bp != B:
        x = jnp.pad(x, ((0, Bp - B), (0, 0)))
    grid = (Bp // tb,)

    names = ["ew1", "eb1", "ew2", "eb2", "ew3", "eb3",
             "dw1", "db1", "dw2", "db2", "dw3", "db3"]
    flat = [prepared[n] for n in names]

    # Weights/biases: full-array blocks, constant index_map -> VMEM-resident;
    # single-buffered (they never change block index).
    w_specs = [
        pl.BlockSpec(p.shape, lambda i: (0, 0), pipeline_mode=pl.Buffered(1))
        for p in flat
    ]

    x_spec = pl.BlockSpec((tb, ORG_SIZE), lambda i: (i, 0))
    feat_spec = pl.BlockSpec((tb, LATENT_PAD), lambda i: (i, 0))
    out_spec = pl.BlockSpec((tb, ORG_SIZE), lambda i: (i, 0))

    weight_bytes = sum(int(p.size) * p.dtype.itemsize for p in flat)
    flops = 2 * Bp * (ORG_SIZE * H1 + H1 * H2 + H2 * LATENT_PAD
                      + LATENT_PAD * H2 + H2 * H1 + H1 * ORG_SIZE)
    bytes_accessed = (weight_bytes
                      + Bp * ORG_SIZE * 2      # x  (bf16 in)
                      + Bp * ORG_SIZE * 2      # recon (bf16 out)
                      + Bp * LATENT_PAD * 4)   # feat (f32 out)

    feat, recon = pl.pallas_call(
        autoencoder_kernel,
        grid=grid,
        out_shape=(
            jax.ShapeDtypeStruct((Bp, LATENT_PAD), jnp.float32),
            jax.ShapeDtypeStruct((Bp, ORG_SIZE), jnp.bfloat16),
        ),
        in_specs=[x_spec] + w_specs,
        out_specs=(feat_spec, out_spec),
        compiler_params=pltpu.CompilerParams(
            dimension_semantics=("parallel",),   # shards batch across v7x's 2 TCs
            vmem_limit_bytes=48 << 20,           # safe on v7x's 64 MiB per-TC VMEM
        ),
        cost_estimate=pl.CostEstimate(
            flops=flops, transcendentals=0, bytes_accessed=bytes_accessed),
    )(x, *flat)

    if padded_latent:
        # Rows-only slice: keeps the lane-dense 128-wide latent layout and
        # avoids an XLA relayout/copy of the whole feat buffer.
        return feat[:B], recon[:B]
    return feat[:B, :LATENT], recon[:B]


def init_params(key):
    """Deterministic parameter init (PyTorch-style uniform fan-in bound), f32."""
    sizes = [
        ("ew1", "eb1", ORG_SIZE, H1),
        ("ew2", "eb2", H1, H2),
        ("ew3", "eb3", H2, LATENT),
        ("dw1", "db1", LATENT, H2),
        ("dw2", "db2", H2, H1),
        ("dw3", "db3", H1, ORG_SIZE),
    ]
    params = {}
    for wname, bname, fan_in, fan_out in sizes:
        key, kw, kb = jax.random.split(key, 3)
        bound = 1.0 / jnp.sqrt(fan_in)
        params[wname] = jax.random.uniform(
            kw, (fan_in, fan_out), jnp.float32, -bound, bound)
        # biases 2D (1, out) for clean lane broadcast inside the kernel
        params[bname] = jax.random.uniform(
            kb, (1, fan_out), jnp.float32, -bound, bound)
    return params


def reference_forward(x, p):
    """Pure-f32 reference matching the PyTorch module semantics."""
    h = jnp.maximum(x @ p["ew1"] + p["eb1"], 0.0)
    h = jnp.maximum(h @ p["ew2"] + p["eb2"], 0.0)
    feat = h @ p["ew3"] + p["eb3"]
    h = jnp.maximum(feat @ p["dw1"] + p["db1"], 0.0)
    h = jnp.maximum(h @ p["dw2"] + p["db2"], 0.0)
    out = h @ p["dw3"] + p["db3"]
    return feat, out


if __name__ == "__main__":
    key = jax.random.PRNGKey(0)
    params = init_params(key)
    prepared = prepare_params(params)

    fwd = jax.jit(autoencoder_forward)

    # Small batch: single tile.
    key, kx = jax.random.split(key)
    B = 8
    x = jax.random.normal(kx, (B, ORG_SIZE), jnp.float32)
    feature, recon = fwd(x, prepared)
    jax.block_until_ready((feature, recon))

    ref_feat, ref_recon = reference_forward(x, params)
    assert feature.shape == (B, LATENT)
    assert recon.shape == (B, ORG_SIZE)
    # bf16 inputs/weights with f32 accumulation + bf16 recon writeback
    # -> loosened tolerance vs the f32 reference.
    assert jnp.allclose(feature, ref_feat, atol=3e-2, rtol=3e-2)
    assert jnp.allclose(recon.astype(jnp.float32), ref_recon, atol=3e-2, rtol=3e-2)

    # Medium batch: exercises the multi-step grid (>= 2 steps for v7x's 2 TCs).
    key, kx2 = jax.random.split(key)
    B2 = 260
    x2 = jax.random.normal(kx2, (B2, ORG_SIZE), jnp.float32)
    feature2, recon2 = fwd(x2, prepared)
    jax.block_until_ready((feature2, recon2))

    ref_feat2, ref_recon2 = reference_forward(x2, params)
    assert feature2.shape == (B2, LATENT)
    assert recon2.shape == (B2, ORG_SIZE)
    assert jnp.allclose(feature2, ref_feat2, atol=3e-2, rtol=3e-2)
    assert jnp.allclose(recon2.astype(jnp.float32), ref_recon2, atol=3e-2, rtol=3e-2)

    print("KERNEL_OK")
</pallas_src>

<mosaic_0001>
module attributes {stable_mosaic.version = 11 : i64} {
  func.func @autoencoder_kernel(%arg0: i32, %arg1: memref<8x1152xbf16, #tpu.memory_space<vmem>>, %arg2: memref<1152x512xbf16, #tpu.memory_space<vmem>>, %arg3: memref<1x512xf32, #tpu.memory_space<vmem>>, %arg4: memref<512x128xbf16, #tpu.memory_space<vmem>>, %arg5: memref<1x128xf32, #tpu.memory_space<vmem>>, %arg6: memref<128x128xbf16, #tpu.memory_space<vmem>>, %arg7: memref<1x128xf32, #tpu.memory_space<vmem>>, %arg8: memref<128x128xbf16, #tpu.memory_space<vmem>>, %arg9: memref<1x128xf32, #tpu.memory_space<vmem>>, %arg10: memref<128x512xbf16, #tpu.memory_space<vmem>>, %arg11: memref<1x512xf32, #tpu.memory_space<vmem>>, %arg12: memref<512x1152xbf16, #tpu.memory_space<vmem>>, %arg13: memref<1x1152xf32, #tpu.memory_space<vmem>>, %arg14: memref<8x128xf32, #tpu.memory_space<vmem>>, %arg15: memref<8x1152xbf16, #tpu.memory_space<vmem>>) attributes {dimension_semantics = [#tpu.dimension_semantics<parallel>], iteration_bounds = array<i64: 1>, scalar_prefetch = 0 : i64, scratch_operands = 0 : i64, tpu.core_type = #tpu.core_type<tc>, window_params = [{transform_indices = @transform_0, window_bounds = array<i64: 8, 1152>}, {pipeline_mode = #tpu.pipeline_mode<synchronous>, transform_indices = @transform_1, window_bounds = array<i64: 1152, 512>}, {pipeline_mode = #tpu.pipeline_mode<synchronous>, transform_indices = @transform_2, window_bounds = array<i64: 1, 512>}, {pipeline_mode = #tpu.pipeline_mode<synchronous>, transform_indices = @transform_3, window_bounds = array<i64: 512, 128>}, {pipeline_mode = #tpu.pipeline_mode<synchronous>, transform_indices = @transform_4, window_bounds = array<i64: 1, 128>}, {pipeline_mode = #tpu.pipeline_mode<synchronous>, transform_indices = @transform_5, window_bounds = array<i64: 128, 128>}, {pipeline_mode = #tpu.pipeline_mode<synchronous>, transform_indices = @transform_6, window_bounds = array<i64: 1, 128>}, {pipeline_mode = #tpu.pipeline_mode<synchronous>, transform_indices = @transform_7, window_bounds = array<i64: 128, 128>}, {pipeline_mode = #tpu.pipeline_mode<synchronous>, transform_indices = @transform_8, window_bounds = array<i64: 1, 128>}, {pipeline_mode = #tpu.pipeline_mode<synchronous>, transform_indices = @transform_9, window_bounds = array<i64: 128, 512>}, {pipeline_mode = #tpu.pipeline_mode<synchronous>, transform_indices = @transform_10, window_bounds = array<i64: 1, 512>}, {pipeline_mode = #tpu.pipeline_mode<synchronous>, transform_indices = @transform_11, window_bounds = array<i64: 512, 1152>}, {pipeline_mode = #tpu.pipeline_mode<synchronous>, transform_indices = @transform_12, window_bounds = array<i64: 1, 1152>}, {transform_indices = @transform_13, window_bounds = array<i64: 8, 128>}, {transform_indices = @transform_14, window_bounds = array<i64: 8, 1152>}]} {
    %c0 = arith.constant 0 : index
    %c0_0 = arith.constant 0 : index
    %0 = vector.load %arg1[%c0, %c0_0] : memref<8x1152xbf16, #tpu.memory_space<vmem>>, vector<8x1152xbf16>
    %c0_1 = arith.constant 0 : index
    %c0_2 = arith.constant 0 : index
    %1 = vector.load %arg2[%c0_1, %c0_2] : memref<1152x512xbf16, #tpu.memory_space<vmem>>, vector<1152x512xbf16>
    %cst = arith.constant dense<0.000000e+00> : vector<8x512xf32>
    %2 = tpu.matmul %0, %1, %cst {dimension_numbers = #tpu.dot_dimension_numbers<[1], [0], [0], [1], [0, 0, 1, 1], [], []>} : vector<8x1152xbf16>, vector<1152x512xbf16>, vector<8x512xf32> -> vector<8x512xf32>
    %c0_3 = arith.constant 0 : index
    %c0_4 = arith.constant 0 : index
    %3 = vector.load %arg3[%c0_3, %c0_4] : memref<1x512xf32, #tpu.memory_space<vmem>>, vector<1x512xf32>
    %4 = vector.broadcast %3 : vector<1x512xf32> to vector<8x512xf32>
    %5 = arith.addf %2, %4 : vector<8x512xf32>
    %cst_5 = arith.constant 0.000000e+00 : f32
    %6 = vector.broadcast %cst_5 : f32 to vector<8x512xf32>
    %7 = arith.maximumf %5, %6 : vector<8x512xf32>
    %8 = arith.truncf %7 : vector<8x512xf32> to vector<8x512xbf16>
    %c0_6 = arith.constant 0 : index
    %c0_7 = arith.constant 0 : index
    %9 = vector.load %arg4[%c0_6, %c0_7] : memref<512x128xbf16, #tpu.memory_space<vmem>>, vector<512x128xbf16>
    %cst_8 = arith.constant dense<0.000000e+00> : vector<8x128xf32>
    %10 = tpu.matmul %8, %9, %cst_8 {dimension_numbers = #tpu.dot_dimension_numbers<[1], [0], [0], [1], [0, 0, 1, 1], [], []>} : vector<8x512xbf16>, vector<512x128xbf16>, vector<8x128xf32> -> vector<8x128xf32>
    %c0_9 = arith.constant 0 : index
    %c0_10 = arith.constant 0 : index
    %11 = vector.load %arg5[%c0_9, %c0_10] : memref<1x128xf32, #tpu.memory_space<vmem>>, vector<1x128xf32>
    %12 = vector.broadcast %11 : vector<1x128xf32> to vector<8x128xf32>
    %13 = arith.addf %10, %12 : vector<8x128xf32>
    %cst_11 = arith.constant 0.000000e+00 : f32
    %14 = vector.broadcast %cst_11 : f32 to vector<8x128xf32>
    %15 = arith.maximumf %13, %14 : vector<8x128xf32>
    %16 = arith.truncf %15 : vector<8x128xf32> to vector<8x128xbf16>
    %c0_12 = arith.constant 0 : index
    %c0_13 = arith.constant 0 : index
    %17 = vector.load %arg6[%c0_12, %c0_13] : memref<128x128xbf16, #tpu.memory_space<vmem>>, vector<128x128xbf16>
    %cst_14 = arith.constant dense<0.000000e+00> : vector<8x128xf32>
    %18 = tpu.matmul %16, %17, %cst_14 {dimension_numbers = #tpu.dot_dimension_numbers<[1], [0], [0], [1], [0, 0, 1, 1], [], []>} : vector<8x128xbf16>, vector<128x128xbf16>, vector<8x128xf32> -> vector<8x128xf32>
    %c0_15 = arith.constant 0 : index
    %c0_16 = arith.constant 0 : index
    %19 = vector.load %arg7[%c0_15, %c0_16] : memref<1x128xf32, #tpu.memory_space<vmem>>, vector<1x128xf32>
    %20 = vector.broadcast %19 : vector<1x128xf32> to vector<8x128xf32>
    %21 = arith.addf %18, %20 : vector<8x128xf32>
    %c0_17 = arith.constant 0 : index
    %c0_18 = arith.constant 0 : index
    %22 = vector.load %arg14[%c0_17, %c0_18] : memref<8x128xf32, #tpu.memory_space<vmem>>, vector<8x128xf32>
    tpu.vector_store %arg14[%c0_17, %c0_18], %21 {strides = array<i32>} : memref<8x128xf32, #tpu.memory_space<vmem>>, vector<8x128xf32>,
    %23 = arith.truncf %21 : vector<8x128xf32> to vector<8x128xbf16>
    %c0_19 = arith.constant 0 : index
    %c0_20 = arith.constant 0 : index
    %24 = vector.load %arg8[%c0_19, %c0_20] : memref<128x128xbf16, #tpu.memory_space<vmem>>, vector<128x128xbf16>
    %cst_21 = arith.constant dense<0.000000e+00> : vector<8x128xf32>
    %25 = tpu.matmul %23, %24, %cst_21 {dimension_numbers = #tpu.dot_dimension_numbers<[1], [0], [0], [1], [0, 0, 1, 1], [], []>} : vector<8x128xbf16>, vector<128x128xbf16>, vector<8x128xf32> -> vector<8x128xf32>
    %c0_22 = arith.constant 0 : index
    %c0_23 = arith.constant 0 : index
    %26 = vector.load %arg9[%c0_22, %c0_23] : memref<1x128xf32, #tpu.memory_space<vmem>>, vector<1x128xf32>
    %27 = vector.broadcast %26 : vector<1x128xf32> to vector<8x128xf32>
    %28 = arith.addf %25, %27 : vector<8x128xf32>
    %cst_24 = arith.constant 0.000000e+00 : f32
    %29 = vector.broadcast %cst_24 : f32 to vector<8x128xf32>
    %30 = arith.maximumf %28, %29 : vector<8x128xf32>
    %31 = arith.truncf %30 : vector<8x128xf32> to vector<8x128xbf16>
    %c0_25 = arith.constant 0 : index
    %c0_26 = arith.constant 0 : index
    %32 = vector.load %arg10[%c0_25, %c0_26] : memref<128x512xbf16, #tpu.memory_space<vmem>>, vector<128x512xbf16>
    %cst_27 = arith.constant dense<0.000000e+00> : vector<8x512xf32>
    %33 = tpu.matmul %31, %32, %cst_27 {dimension_numbers = #tpu.dot_dimension_numbers<[1], [0], [0], [1], [0, 0, 1, 1], [], []>} : vector<8x128xbf16>, vector<128x512xbf16>, vector<8x512xf32> -> vector<8x512xf32>
    %c0_28 = arith.constant 0 : index
    %c0_29 = arith.constant 0 : index
    %34 = vector.load %arg11[%c0_28, %c0_29] : memref<1x512xf32, #tpu.memory_space<vmem>>, vector<1x512xf32>
    %35 = vector.broadcast %34 : vector<1x512xf32> to vector<8x512xf32>
    %36 = arith.addf %33, %35 : vector<8x512xf32>
    %cst_30 = arith.constant 0.000000e+00 : f32
    %37 = vector.broadcast %cst_30 : f32 to vector<8x512xf32>
    %38 = arith.maximumf %36, %37 : vector<8x512xf32>
    %39 = arith.truncf %38 : vector<8x512xf32> to vector<8x512xbf16>
    %c0_31 = arith.constant 0 : index
    %c0_32 = arith.constant 0 : index
    %40 = vector.load %arg12[%c0_31, %c0_32] : memref<512x1152xbf16, #tpu.memory_space<vmem>>, vector<512x1152xbf16>
    %cst_33 = arith.constant dense<0.000000e+00> : vector<8x1152xf32>
    %41 = tpu.matmul %39, %40, %cst_33 {dimension_numbers = #tpu.dot_dimension_numbers<[1], [0], [0], [1], [0, 0, 1, 1], [], []>} : vector<8x512xbf16>, vector<512x1152xbf16>, vector<8x1152xf32> -> vector<8x1152xf32>
    %c0_34 = arith.constant 0 : index
    %c0_35 = arith.constant 0 : index
    %42 = vector.load %arg13[%c0_34, %c0_35] : memref<1x1152xf32, #tpu.memory_space<vmem>>, vector<1x1152xf32>
    %43 = vector.broadcast %42 : vector<1x1152xf32> to vector<8x1152xf32>
    %44 = arith.addf %41, %43 : vector<8x1152xf32>
    %45 = arith.truncf %44 : vector<8x1152xf32> to vector<8x1152xbf16>
    %c0_36 = arith.constant 0 : index
    %c0_37 = arith.constant 0 : index
    %46 = vector.load %arg15[%c0_36, %c0_37] : memref<8x1152xbf16, #tpu.memory_space<vmem>>, vector<8x1152xbf16>
    tpu.vector_store %arg15[%c0_36, %c0_37], %45 {strides = array<i32>} : memref<8x1152xbf16, #tpu.memory_space<vmem>>, vector<8x1152xbf16>,
    return
  }
  func.func @transform_0(%arg0: i32) -> (i32, i32) {
    %c0_i32 = arith.constant 0 : i32
    %c0_i32_0 = arith.constant 0 : i32
    return %arg0, %c0_i32 : i32, i32
  }
  func.func @transform_1(%arg0: i32) -> (i32, i32) {
    %c0_i32 = arith.constant 0 : i32
    %c0_i32_0 = arith.constant 0 : i32
    %c0_i32_1 = arith.constant 0 : i32
    return %c0_i32, %c0_i32_0 : i32, i32
  }
  func.func @transform_2(%arg0: i32) -> (i32, i32) {
    %c0_i32 = arith.constant 0 : i32
    %c0_i32_0 = arith.constant 0 : i32
    %c0_i32_1 = arith.constant 0 : i32
    return %c0_i32, %c0_i32_0 : i32, i32
  }
  func.func @transform_3(%arg0: i32) -> (i32, i32) {
    %c0_i32 = arith.constant 0 : i32
    %c0_i32_0 = arith.constant 0 : i32
    %c0_i32_1 = arith.constant 0 : i32
    return %c0_i32, %c0_i32_0 : i32, i32
  }
  func.func @transform_4(%arg0: i32) -> (i32, i32) {
    %c0_i32 = arith.constant 0 : i32
    %c0_i32_0 = arith.constant 0 : i32
    %c0_i32_1 = arith.constant 0 : i32
    return %c0_i32, %c0_i32_0 : i32, i32
  }
  func.func @transform_5(%arg0: i32) -> (i32, i32) {
    %c0_i32 = arith.constant 0 : i32
    %c0_i32_0 = arith.constant 0 : i32
    %c0_i32_1 = arith.constant 0 : i32
    return %c0_i32, %c0_i32_0 : i32, i32
  }
  func.func @transform_6(%arg0: i32) -> (i32, i32) {
    %c0_i32 = arith.constant 0 : i32
    %c0_i32_0 = arith.constant 0 : i32
    %c0_i32_1 = arith.constant 0 : i32
    return %c0_i32, %c0_i32_0 : i32, i32
  }
  func.func @transform_7(%arg0: i32) -> (i32, i32) {
    %c0_i32 = arith.constant 0 : i32
    %c0_i32_0 = arith.constant 0 : i32
    %c0_i32_1 = arith.constant 0 : i32
    return %c0_i32, %c0_i32_0 : i32, i32
  }
  func.func @transform_8(%arg0: i32) -> (i32, i32) {
    %c0_i32 = arith.constant 0 : i32
    %c0_i32_0 = arith.constant 0 : i32
    %c0_i32_1 = arith.constant 0 : i32
    return %c0_i32, %c0_i32_0 : i32, i32
  }
  func.func @transform_9(%arg0: i32) -> (i32, i32) {
    %c0_i32 = arith.constant 0 : i32
    %c0_i32_0 = arith.constant 0 : i32
    %c0_i32_1 = arith.constant 0 : i32
    return %c0_i32, %c0_i32_0 : i32, i32
  }
  func.func @transform_10(%arg0: i32) -> (i32, i32) {
    %c0_i32 = arith.constant 0 : i32
    %c0_i32_0 = arith.constant 0 : i32
    %c0_i32_1 = arith.constant 0 : i32
    return %c0_i32, %c0_i32_0 : i32, i32
  }
  func.func @transform_11(%arg0: i32) -> (i32, i32) {
    %c0_i32 = arith.constant 0 : i32
    %c0_i32_0 = arith.constant 0 : i32
    %c0_i32_1 = arith.constant 0 : i32
    return %c0_i32, %c0_i32_0 : i32, i32
  }
  func.func @transform_12(%arg0: i32) -> (i32, i32) {
    %c0_i32 = arith.constant 0 : i32
    %c0_i32_0 = arith.constant 0 : i32
    %c0_i32_1 = arith.constant 0 : i32
    return %c0_i32, %c0_i32_0 : i32, i32
  }
  func.func @transform_13(%arg0: i32) -> (i32, i32) {
    %c0_i32 = arith.constant 0 : i32
    %c0_i32_0 = arith.constant 0 : i32
    return %arg0, %c0_i32 : i32, i32
  }
  func.func @transform_14(%arg0: i32) -> (i32, i32) {
    %c0_i32 = arith.constant 0 : i32
    %c0_i32_0 = arith.constant 0 : i32
    return %arg0, %c0_i32 : i32, i32
  }
}

</mosaic_0001>

<llo_original>
// kernel: autoencoder_forward.1
$region0: #{autoencoder_forward.1}
  #allocation0 [shape = 'u32[]', space=smem, size = 0x4, offset = 0x4, fixed_abs, tag = 'smem constant byte address 0x4 - core index']
  #allocation1 [shape = 'u32[144,128]{1,0:T(1,128)}', space=vmem, size = 0x12000, scoped, tag = 'internal scratch']
  %s0 = inlined_call_operand.vmem [shape: bf16[8,1152], index: 0, kind: input, shape index: {}]
  %s1 = inlined_call_operand.hbm [shape: bf16[1152,512], index: 1, kind: input, shape index: {}]
  %s2 = inlined_call_operand.hbm [shape: f32[1,512], index: 2, kind: input, shape index: {}]
  %s3 = inlined_call_operand.hbm [shape: bf16[512,128], index: 3, kind: input, shape index: {}]
  %s4 = inlined_call_operand.hbm [shape: f32[1,128], index: 4, kind: input, shape index: {}]
  %s5 = inlined_call_operand.hbm [shape: bf16[128,128], index: 5, kind: input, shape index: {}]
  %s6 = inlined_call_operand.hbm [shape: f32[1,128], index: 6, kind: input, shape index: {}]
  %s7 = inlined_call_operand.hbm [shape: bf16[128,128], index: 7, kind: input, shape index: {}]
  %s8 = inlined_call_operand.hbm [shape: f32[1,128], index: 8, kind: input, shape index: {}]
  %s9 = inlined_call_operand.hbm [shape: bf16[128,512], index: 9, kind: input, shape index: {}]
  %s10 = inlined_call_operand.hbm [shape: f32[1,512], index: 10, kind: input, shape index: {}]
  %s11 = inlined_call_operand.hbm [shape: bf16[512,1152], index: 11, kind: input, shape index: {}]
  %s12 = inlined_call_operand.hbm [shape: f32[1,1152], index: 12, kind: input, shape index: {}]
  %s13 = inlined_call_operand.hbm [shape: f32[8,128], index: 13, kind: output, shape index: {0}]
  %s14 = inlined_call_operand.hbm [shape: bf16[8,1152], index: 14, kind: output, shape index: {1}]
  %15 = xla_tuple %s13, %s14
  %s16 = sld [smem:[#allocation0]]
  $region118: #{autoencoder_forward.1} parent=0
    _
  %s18 = ssub.s32 1, %s16
  %s19 = scalar_select 0, %s18, %s16
  $region1: #{autoencoder_forward.1} parent=0
    #allocation2 [shape = 'u8[1179648]{0}', space=vmem, size = 0x120000, scoped, tag = 'input window, operand 1, single buffered']
    #allocation3 [shape = 's32[1]{0}', space=sflag, size = 0x4, scoped, tag = 'scoped memory for autoencoder_forward.1']
    #allocation4 [shape = 's32[1]{0}', space=sflag, size = 0x4, scoped, tag = 'scoped memory for autoencoder_forward.1']
    #allocation5 [shape = 'u8[2048]{0}', space=vmem, size = 0x800, scoped, tag = 'input window, operand 2, single buffered']
    #allocation6 [shape = 's32[1]{0}', space=sflag, size = 0x4, scoped, tag = 'scoped memory for autoencoder_forward.1']
    #allocation7 [shape = 'u8[131072]{0}', space=vmem, size = 0x20000, scoped, tag = 'input window, operand 3, single buffered']
    #allocation8 [shape = 'u8[512]{0}', space=vmem, size = 0x400, scoped, tag = 'input window, operand 4, single buffered']
    #allocation9 [shape = 's32[1]{0}', space=sflag, size = 0x4, scoped, tag = 'scoped memory for autoencoder_forward.1']
    #allocation10 [shape = 'u8[32768]{0}', space=vmem, size = 0x8000, scoped, tag = 'input window, operand 5, single buffered']
    #allocation11 [shape = 'u8[512]{0}', space=vmem, size = 0x400, scoped, tag = 'input window, operand 6, single buffered']
    #allocation12 [shape = 's32[1]{0}', space=sflag, size = 0x4, scoped, tag = 'scoped memory for autoencoder_forward.1']
    #allocation13 [shape = 'u8[32768]{0}', space=vmem, size = 0x8000, scoped, tag = 'input window, operand 7, single buffered']
    #allocation14 [shape = 'u8[512]{0}', space=vmem, size = 0x400, scoped, tag = 'input window, operand 8, single buffered']
    #allocation15 [shape = 's32[1]{0}', space=sflag, size = 0x4, scoped, tag = 'scoped memory for autoencoder_forward.1']
    #allocation16 [shape = 'u8[131072]{0}', space=vmem, size = 0x20000, scoped, tag = 'input window, operand 9, single buffered']
    #allocation17 [shape = 'u8[2048]{0}', space=vmem, size = 0x800, scoped, tag = 'input window, operand 10, single buffered']
    #allocation18 [shape = 's32[1]{0}', space=sflag, size = 0x4, scoped, tag = 'scoped memory for autoencoder_forward.1']
    #allocation19 [shape = 'u8[1179648]{0}', space=vmem, size = 0x120000, scoped, tag = 'input window, operand 11, single buffered']
    #allocation20 [shape = 'u8[4608]{0}', space=vmem, size = 0x1400, scoped, tag = 'input window, operand 12, single buffered']
    #allocation21 [shape = 's32[1]{0}', space=sflag, size = 0x4, scoped, tag = 'scoped memory for autoencoder_forward.1']
    #allocation22 [shape = 'u8[4096]{0}', space=vmem, size = 0x1000, scoped, tag = 'output window, operand 0, single buffered']
    #allocation23 [shape = 'u8[18432]{0}', space=vmem, size = 0x4800, scoped, tag = 'output window, operand 1, single buffered']
    #allocation24 [shape = 's32[1]{0}', space=sflag, size = 0x4, scoped, tag = 'scoped memory for autoencoder_forward.1']
    %20 = vsyncpa [#allocation3], 0
    %21 = vsyncpa [#allocation6], 0
    %22 = vsyncpa [#allocation9], 0
    %23 = vsyncpa [#allocation12], 0
    %24 = vsyncpa [#allocation15], 0
    %25 = vsyncpa [#allocation18], 0
    %26 = vsyncpa [#allocation21], 0
    %27 = vsyncpa [#allocation4], 0
    %28 = vsyncpa [#allocation24], 0
    // Predicated region
    $region2: #{autoencoder_forward.1} parent=1 // pred_check
      _
    $region3: #{autoencoder_forward.1} parent=1 // pred_check_branch
      %30 = sbr.rel (0) target = $region5
    $region4: #{autoencoder_forward.1} parent=1 // pred_region
      _
    $region5: #{autoencoder_forward.1} parent=1 // pred_fallthru
      _
    // Predicated region
    $region6: #{autoencoder_forward.1} parent=1 // pred_check
      _
    $region7: #{autoencoder_forward.1} parent=1 // pred_check_branch
      %32 = sbr.rel (0) target = $region9
    $region8: #{autoencoder_forward.1} parent=1 // pred_region
      %s34 = ssub.s32 36864, 36864
      %35 = vsyncadd [#allocation3], %s34
      %s36 = sshll.u32 [#allocation2], 4
      %s37 = int_to_ptr.vmem [resolvable:$true] %s36
      %42 = dma.hbm_to_vmem [thread:$0]  %s1, 36864, %s37, [#allocation3], 256, 256, 16
    $region9: #{autoencoder_forward.1} parent=1 // pred_fallthru
      _
    // Predicated region
    $region10: #{autoencoder_forward.1} parent=1 // pred_check
      _
    $region11: #{autoencoder_forward.1} parent=1 // pred_check_branch
      %44 = sbr.rel (0) target = $region13
    $region12: #{autoencoder_forward.1} parent=1 // pred_region
      %s46 = ssub.s32 64, 64
      %47 = vsyncadd [#allocation6], %s46
      %s49 = sshll.u32 [#allocation5], 4
      %s50 = int_to_ptr.vmem [resolvable:$true] %s49
      %52 = dma.hbm_to_vmem [thread:$0]  %s2, 64, %s50, [#allocation6]
    $region13: #{autoencoder_forward.1} parent=1 // pred_fallthru
      _
    // Predicated region
    $region14: #{autoencoder_forward.1} parent=1 // pred_check
      _
    $region15: #{autoencoder_forward.1} parent=1 // pred_check_branch
      %54 = sbr.rel (0) target = $region17
    $region16: #{autoencoder_forward.1} parent=1 // pred_region
      %s56 = ssub.s32 4096, 4096
      %57 = vsyncadd [#allocation6], %s56
      %s58 = sshll.u32 [#allocation7], 4
      %s59 = int_to_ptr.vmem [resolvable:$true] %s58
      %64 = dma.hbm_to_vmem [thread:$0]  %s3, 4096, %s59, [#allocation6], 64, 64, 4
    $region17: #{autoencoder_forward.1} parent=1 // pred_fallthru
      _
    // Predicated region
    $region18: #{autoencoder_forward.1} parent=1 // pred_check
      _
    $region19: #{autoencoder_forward.1} parent=1 // pred_check_branch
      %66 = sbr.rel (0) target = $region21
    $region20: #{autoencoder_forward.1} parent=1 // pred_region
      %s68 = ssub.s32 16, 16
      %69 = vsyncadd [#allocation9], %s68
      %s71 = sshll.u32 [#allocation8], 4
      %s72 = int_to_ptr.vmem [resolvable:$true] %s71
      %74 = dma.hbm_to_vmem [thread:$0]  %s4, 16, %s72, [#allocation9]
    $region21: #{autoencoder_forward.1} parent=1 // pred_fallthru
      _
    // Predicated region
    $region22: #{autoencoder_forward.1} parent=1 // pred_check
      _
    $region23: #{autoencoder_forward.1} parent=1 // pred_check_branch
      %76 = sbr.rel (0) target = $region25
    $region24: #{autoencoder_forward.1} parent=1 // pred_region
      %s78 = ssub.s32 1024, 1024
      %79 = vsyncadd [#allocation9], %s78
      %s80 = sshll.u32 [#allocation10], 4
      %s81 = int_to_ptr.vmem [resolvable:$true] %s80
      %86 = dma.hbm_to_vmem [thread:$0]  %s5, 1024, %s81, [#allocation9], 64, 64, 4
    $region25: #{autoencoder_forward.1} parent=1 // pred_fallthru
      _
    // Predicated region
    $region26: #{autoencoder_forward.1} parent=1 // pred_check
      _
    $region27: #{autoencoder_forward.1} parent=1 // pred_check_branch
      %88 = sbr.rel (0) target = $region29
    $region28: #{autoencoder_forward.1} parent=1 // pred_region
      %s90 = ssub.s32 16, 16
      %91 = vsyncadd [#allocation12], %s90
      %s93 = sshll.u32 [#allocation11], 4
      %s94 = int_to_ptr.vmem [resolvable:$true] %s93
      %96 = dma.hbm_to_vmem [thread:$0]  %s6, 16, %s94, [#allocation12]
    $region29: #{autoencoder_forward.1} parent=1 // pred_fallthru
      _
    // Predicated region
    $region30: #{autoencoder_forward.1} parent=1 // pred_check
      _
    $region31: #{autoencoder_forward.1} parent=1 // pred_check_branch
      %98 = sbr.rel (0) target = $region33
    $region32: #{autoencoder_forward.1} parent=1 // pred_region
      %s100 = ssub.s32 1024, 1024
      %101 = vsyncadd [#allocation12], %s100
      %s102 = sshll.u32 [#allocation13], 4
      %s103 = int_to_ptr.vmem [resolvable:$true] %s102
      %108 = dma.hbm_to_vmem [thread:$0]  %s7, 1024, %s103, [#allocation12], 64, 64, 4
    $region33: #{autoencoder_forward.1} parent=1 // pred_fallthru
      _
    // Predicated region
    $region34: #{autoencoder_forward.1} parent=1 // pred_check
      _
    $region35: #{autoencoder_forward.1} parent=1 // pred_check_branch
      %110 = sbr.rel (0) target = $region37
    $region36: #{autoencoder_forward.1} parent=1 // pred_region
      %s112 = ssub.s32 16, 16
      %113 = vsyncadd [#allocation15], %s112
      %s115 = sshll.u32 [#allocation14], 4
      %s116 = int_to_ptr.vmem [resolvable:$true] %s115
      %118 = dma.hbm_to_vmem [thread:$0]  %s8, 16, %s116, [#allocation15]
    $region37: #{autoencoder_forward.1} parent=1 // pred_fallthru
      _
    // Predicated region
    $region38: #{autoencoder_forward.1} parent=1 // pred_check
      _
    $region39: #{autoencoder_forward.1} parent=1 // pred_check_branch
      %120 = sbr.rel (0) target = $region41
    $region40: #{autoencoder_forward.1} parent=1 // pred_region
      %s122 = ssub.s32 4096, 4096
      %123 = vsyncadd [#allocation15], %s122
      %s124 = sshll.u32 [#allocation16], 4
      %s125 = int_to_ptr.vmem [resolvable:$true] %s124
      %130 = dma.hbm_to_vmem [thread:$0]  %s9, 4096, %s125, [#allocation15], 256, 256, 16
    $region41: #{autoencoder_forward.1} parent=1 // pred_fallthru
      _
    // Predicated region
    $region42: #{autoencoder_forward.1} parent=1 // pred_check
      _
    $region43: #{autoencoder_forward.1} parent=1 // pred_check_branch
      %132 = sbr.rel (0) target = $region45
    $region44: #{autoencoder_forward.1} parent=1 // pred_region
      %s134 = ssub.s32 64, 64
      %135 = vsyncadd [#allocation18], %s134
      %s137 = sshll.u32 [#allocation17], 4
      %s138 = int_to_ptr.vmem [resolvable:$true] %s137
      %140 = dma.hbm_to_vmem [thread:$0]  %s10, 64, %s138, [#allocation18]
    $region45: #{autoencoder_forward.1} parent=1 // pred_fallthru
      _
    // Predicated region
    $region46: #{autoencoder_forward.1} parent=1 // pred_check
      _
    $region47: #{autoencoder_forward.1} parent=1 // pred_check_branch
      %142 = sbr.rel (0) target = $region49
    $region48: #{autoencoder_forward.1} parent=1 // pred_region
      %s144 = ssub.s32 36864, 36864
      %145 = vsyncadd [#allocation18], %s144
      %s146 = sshll.u32 [#allocation19], 4
      %s147 = int_to_ptr.vmem [resolvable:$true] %s146
      %152 = dma.hbm_to_vmem [thread:$0]  %s11, 36864, %s147, [#allocation18], 576, 576, 36
    $region49: #{autoencoder_forward.1} parent=1 // pred_fallthru
      _
    // Predicated region
    $region50: #{autoencoder_forward.1} parent=1 // pred_check
      _
    $region51: #{autoencoder_forward.1} parent=1 // pred_check_branch
      %154 = sbr.rel (0) target = $region53
    $region52: #{autoencoder_forward.1} parent=1 // pred_region
      %s156 = ssub.s32 144, 144
      %157 = vsyncadd [#allocation21], %s156
      %s159 = sshll.u32 [#allocation20], 4
      %s160 = int_to_ptr.vmem [resolvable:$true] %s159
      %162 = dma.hbm_to_vmem [thread:$0]  %s12, 144, %s160, [#allocation21]
    $region53: #{autoencoder_forward.1} parent=1 // pred_fallthru
      _
    // Predicated region
    $region54: #{autoencoder_forward.1} parent=1 // pred_check
      _
    $region55: #{autoencoder_forward.1} parent=1 // pred_check_branch
      %164 = sbr.rel (0) target = $region57
    $region56: #{autoencoder_forward.1} parent=1 // pred_region
      %165 = dma.done [#allocation3], 36864
    $region57: #{autoencoder_forward.1} parent=1 // pred_fallthru
      _
    // Predicated region
    $region58: #{autoencoder_forward.1} parent=1 // pred_check
      _
    $region59: #{autoencoder_forward.1} parent=1 // pred_check_branch
      %167 = sbr.rel (0) target = $region61
    $region60: #{autoencoder_forward.1} parent=1 // pred_region
      %168 = dma.done [#allocation6], 64
    $region61: #{autoencoder_forward.1} parent=1 // pred_fallthru
      _
    // Predicated region
    $region62: #{autoencoder_forward.1} parent=1 // pred_check
      _
    $region63: #{autoencoder_forward.1} parent=1 // pred_check_branch
      %170 = sbr.rel (0) target = $region65
    $region64: #{autoencoder_forward.1} parent=1 // pred_region
      %171 = dma.done [#allocation6], 4096
    $region65: #{autoencoder_forward.1} parent=1 // pred_fallthru
      _
    // Predicated region
    $region66: #{autoencoder_forward.1} parent=1 // pred_check
      _
    $region67: #{autoencoder_forward.1} parent=1 // pred_check_branch
      %173 = sbr.rel (0) target = $region69
    $region68: #{autoencoder_forward.1} parent=1 // pred_region
      %174 = dma.done [#allocation9], 16
    $region69: #{autoencoder_forward.1} parent=1 // pred_fallthru
      _
    // Predicated region
    $region70: #{autoencoder_forward.1} parent=1 // pred_check
      _
    $region71: #{autoencoder_forward.1} parent=1 // pred_check_branch
      %176 = sbr.rel (0) target = $region73
    $region72: #{autoencoder_forward.1} parent=1 // pred_region
      %177 = dma.done [#allocation9], 1024
    $region73: #{autoencoder_forward.1} parent=1 // pred_fallthru
      _
    // Predicated region
    $region74: #{autoencoder_forward.1} parent=1 // pred_check
      _
    $region75: #{autoencoder_forward.1} parent=1 // pred_check_branch
      %179 = sbr.rel (0) target = $region77
    $region76: #{autoencoder_forward.1} parent=1 // pred_region
      %180 = dma.done [#allocation12], 16
    $region77: #{autoencoder_forward.1} parent=1 // pred_fallthru
      _
    // Predicated region
    $region78: #{autoencoder_forward.1} parent=1 // pred_check
      _
    $region79: #{autoencoder_forward.1} parent=1 // pred_check_branch
      %182 = sbr.rel (0) target = $region81
    $region80: #{autoencoder_forward.1} parent=1 // pred_region
      %183 = dma.done [#allocation12], 1024
    $region81: #{autoencoder_forward.1} parent=1 // pred_fallthru
      _
    // Predicated region
    $region82: #{autoencoder_forward.1} parent=1 // pred_check
      _
    $region83: #{autoencoder_forward.1} parent=1 // pred_check_branch
      %185 = sbr.rel (0) target = $region85
    $region84: #{autoencoder_forward.1} parent=1 // pred_region
      %186 = dma.done [#allocation15], 16
    $region85: #{autoencoder_forward.1} parent=1 // pred_fallthru
      _
    // Predicated region
    $region86: #{autoencoder_forward.1} parent=1 // pred_check
      _
    $region87: #{autoencoder_forward.1} parent=1 // pred_check_branch
      %188 = sbr.rel (0) target = $region89
    $region88: #{autoencoder_forward.1} parent=1 // pred_region
      %189 = dma.done [#allocation15], 4096
    $region89: #{autoencoder_forward.1} parent=1 // pred_fallthru
      _
    // Predicated region
    $region90: #{autoencoder_forward.1} parent=1 // pred_check
      _
    $region91: #{autoencoder_forward.1} parent=1 // pred_check_branch
      %191 = sbr.rel (0) target = $region93
    $region92: #{autoencoder_forward.1} parent=1 // pred_region
      %192 = dma.done [#allocation18], 64
    $region93: #{autoencoder_forward.1} parent=1 // pred_fallthru
      _
    // Predicated region
    $region94: #{autoencoder_forward.1} parent=1 // pred_check
      _
    $region95: #{autoencoder_forward.1} parent=1 // pred_check_branch
      %194 = sbr.rel (0) target = $region97
    $region96: #{autoencoder_forward.1} parent=1 // pred_region
      %195 = dma.done [#allocation18], 36864
    $region97: #{autoencoder_forward.1} parent=1 // pred_fallthru
      _
    // Predicated region
    $region98: #{autoencoder_forward.1} parent=1 // pred_check
      _
    $region99: #{autoencoder_forward.1} parent=1 // pred_check_branch
      %197 = sbr.rel (0) target = $region101
    $region100: #{autoencoder_forward.1} parent=1 // pred_region
      %198 = dma.done [#allocation21], 144
    $region101: #{autoencoder_forward.1} parent=1 // pred_fallthru
      _
    %v200 = vld [vmem:[%s0] sm:$0xff]
    %v201 = vld [vmem:[%s0 + $0x8] sm:$0xff]
    %v202 = vld [vmem:[%s0 + $0x10] sm:$0xff]
    %v203 = vld [vmem:[%s0 + $0x18] sm:$0xff]
    %v204 = vld [vmem:[%s0 + $0x20] sm:$0xf]
    %v205 = vld [vmem:[#allocation2] sm:$0xff]
    %v206 = vld [vmem:[#allocation2 + $0x8] sm:$0xff]
    %v207 = vld [vmem:[#allocation2 + $0x10] sm:$0xff]
    %v208 = vld [vmem:[#allocation2 + $0x18] sm:$0xff]
    %v209 = vld [vmem:[#allocation2 + $0x20] sm:$0xff]
    %v210 = vld [vmem:[#allocation2 + $0x28] sm:$0xff]
    %v211 = vld [vmem:[#allocation2 + $0x30] sm:$0xff]
    %v212 = vld [vmem:[#allocation2 + $0x38] sm:$0xff]
    %v213 = vld [vmem:[#allocation2 + $0x40] sm:$0xff]
    %v214 = vld [vmem:[#allocation2 + $0x48] sm:$0xff]
    %v215 = vld [vmem:[#allocation2 + $0x50] sm:$0xff]
    %v216 = vld [vmem:[#allocation2 + $0x58] sm:$0xff]
    %v217 = vld [vmem:[#allocation2 + $0x60] sm:$0xff]
    %v218 = vld [vmem:[#allocation2 + $0x68] sm:$0xff]
    %v219 = vld [vmem:[#allocation2 + $0x70] sm:$0xff]
    %v220 = vld [vmem:[#allocation2 + $0x78] sm:$0xff]
    %v221 = vld [vmem:[#allocation2 + $0x80] sm:$0xff]
    %v222 = vld [vmem:[#allocation2 + $0x88] sm:$0xff]
    %v223 = vld [vmem:[#allocation2 + $0x90] sm:$0xff]
    %v224 = vld [vmem:[#allocation2 + $0x98] sm:$0xff]
    %v225 = vld [vmem:[#allocation2 + $0xa0] sm:$0xff]
    %v226 = vld [vmem:[#allocation2 + $0xa8] sm:$0xff]
    %v227 = vld [vmem:[#allocation2 + $0xb0] sm:$0xff]
    %v228 = vld [vmem:[#allocation2 + $0xb8] sm:$0xff]
    %v229 = vld [vmem:[#allocation2 + $0xc0] sm:$0xff]
    %v230 = vld [vmem:[#allocation2 + $0xc8] sm:$0xff]
    %v231 = vld [vmem:[#allocation2 + $0xd0] sm:$0xff]
    %v232 = vld [vmem:[#allocation2 + $0xd8] sm:$0xff]
    %v233 = vld [vmem:[#allocation2 + $0xe0] sm:$0xff]
    %v234 = vld [vmem:[#allocation2 + $0xe8] sm:$0xff]
    %v235 = vld [vmem:[#allocation2 + $0xf0] sm:$0xff]
    %v236 = vld [vmem:[#allocation2 + $0xf8] sm:$0xff]
    %v237 = vld [vmem:[#allocation2 + $0x100] sm:$0xff]
    %v238 = vld [vmem:[#allocation2 + $0x108] sm:$0xff]
    %v239 = vld [vmem:[#allocation2 + $0x110] sm:$0xff]
    %v240 = vld [vmem:[#allocation2 + $0x118] sm:$0xff]
    %v241 = vld [vmem:[#allocation2 + $0x120] sm:$0xff]
    %v242 = vld [vmem:[#allocation2 + $0x128] sm:$0xff]
    %v243 = vld [vmem:[#allocation2 + $0x130] sm:$0xff]
    %v244 = vld [vmem:[#allocation2 + $0x138] sm:$0xff]
    %v245 = vld [vmem:[#allocation2 + $0x140] sm:$0xff]
    %v246 = vld [vmem:[#allocation2 + $0x148] sm:$0xff]
    %v247 = vld [vmem:[#allocation2 + $0x150] sm:$0xff]
    %v248 = vld [vmem:[#allocation2 + $0x158] sm:$0xff]
    %v249 = vld [vmem:[#allocation2 + $0x160] sm:$0xff]
    %v250 = vld [vmem:[#allocation2 + $0x168] sm:$0xff]
    %v251 = vld [vmem:[#allocation2 + $0x170] sm:$0xff]
    %v252 = vld [vmem:[#allocation2 + $0x178] sm:$0xff]
    %v253 = vld [vmem:[#allocation2 + $0x180] sm:$0xff]
    %v254 = vld [vmem:[#allocation2 + $0x188] sm:$0xff]
    %v255 = vld [vmem:[#allocation2 + $0x190] sm:$0xff]
    %v256 = vld [vmem:[#allocation2 + $0x198] sm:$0xff]
    %v257 = vld [vmem:[#allocation2 + $0x1a0] sm:$0xff]
    %v258 = vld [vmem:[#allocation2 + $0x1a8] sm:$0xff]
    %v259 = vld [vmem:[#allocation2 + $0x1b0] sm:$0xff]
    %v260 = vld [vmem:[#allocation2 + $0x1b8] sm:$0xff]
    %v261 = vld [vmem:[#allocation2 + $0x1c0] sm:$0xff]
    %v262 = vld [vmem:[#allocation2 + $0x1c8] sm:$0xff]
    %v263 = vld [vmem:[#allocation2 + $0x1d0] sm:$0xff]
    %v264 = vld [vmem:[#allocation2 + $0x1d8] sm:$0xff]
    %v265 = vld [vmem:[#allocation2 + $0x1e0] sm:$0xff]
    %v266 = vld [vmem:[#allocation2 + $0x1e8] sm:$0xff]
    %v267 = vld [vmem:[#allocation2 + $0x1f0] sm:$0xff]
    %v268 = vld [vmem:[#allocation2 + $0x1f8] sm:$0xff]
    %v269 = vld [vmem:[#allocation2 + $0x200] sm:$0xff]
    %v270 = vld [vmem:[#allocation2 + $0x208] sm:$0xff]
    %v271 = vld [vmem:[#allocation2 + $0x210] sm:$0xff]
    %v272 = vld [vmem:[#allocation2 + $0x218] sm:$0xff]
    %v273 = vld [vmem:[#allocation2 + $0x220] sm:$0xff]
    %v274 = vld [vmem:[#allocation2 + $0x228] sm:$0xff]
    %v275 = vld [vmem:[#allocation2 + $0x230] sm:$0xff]
    %v276 = vld [vmem:[#allocation2 + $0x238] sm:$0xff]
    %v277 = vld [vmem:[#allocation2 + $0x240] sm:$0xff]
    %v278 = vld [vmem:[#allocation2 + $0x248] sm:$0xff]
    %v279 = vld [vmem:[#allocation2 + $0x250] sm:$0xff]
    %v280 = vld [vmem:[#allocation2 + $0x258] sm:$0xff]
    %v281 = vld [vmem:[#allocation2 + $0x260] sm:$0xff]
    %v282 = vld [vmem:[#allocation2 + $0x268] sm:$0xff]
    %v283 = vld [vmem:[#allocation2 + $0x270] sm:$0xff]
    %v284 = vld [vmem:[#allocation2 + $0x278] sm:$0xff]
    %v285 = vld [vmem:[#allocation2 + $0x280] sm:$0xff]
    %v286 = vld [vmem:[#allocation2 + $0x288] sm:$0xff]
    %v287 = vld [vmem:[#allocation2 + $0x290] sm:$0xff]
    %v288 = vld [vmem:[#allocation2 + $0x298] sm:$0xff]
    %v289 = vld [vmem:[#allocation2 + $0x2a0] sm:$0xff]
    %v290 = vld [vmem:[#allocation2 + $0x2a8] sm:$0xff]
    %v291 = vld [vmem:[#allocation2 + $0x2b0] sm:$0xff]
    %v292 = vld [vmem:[#allocation2 + $0x2b8] sm:$0xff]
    %v293 = vld [vmem:[#allocation2 + $0x2c0] sm:$0xff]
    %v294 = vld [vmem:[#allocation2 + $0x2c8] sm:$0xff]
    %v295 = vld [vmem:[#allocation2 + $0x2d0] sm:$0xff]
    %v296 = vld [vmem:[#allocation2 + $0x2d8] sm:$0xff]
    %v297 = vld [vmem:[#allocation2 + $0x2e0] sm:$0xff]
    %v298 = vld [vmem:[#allocation2 + $0x2e8] sm:$0xff]
    %v299 = vld [vmem:[#allocation2 + $0x2f0] sm:$0xff]
    %v300 = vld [vmem:[#allocation2 + $0x2f8] sm:$0xff]
    %v301 = vld [vmem:[#allocation2 + $0x300] sm:$0xff]
    %v302 = vld [vmem:[#allocation2 + $0x308] sm:$0xff]
    %v303 = vld [vmem:[#allocation2 + $0x310] sm:$0xff]
    %v304 = vld [vmem:[#allocation2 + $0x318] sm:$0xff]
    %v305 = vld [vmem:[#allocation2 + $0x320] sm:$0xff]
    %v306 = vld [vmem:[#allocation2 + $0x328] sm:$0xff]
    %v307 = vld [vmem:[#allocation2 + $0x330] sm:$0xff]
    %v308 = vld [vmem:[#allocation2 + $0x338] sm:$0xff]
    %v309 = vld [vmem:[#allocation2 + $0x340] sm:$0xff]
    %v310 = vld [vmem:[#allocation2 + $0x348] sm:$0xff]
    %v311 = vld [vmem:[#allocation2 + $0x350] sm:$0xff]
    %v312 = vld [vmem:[#allocation2 + $0x358] sm:$0xff]
    %v313 = vld [vmem:[#allocation2 + $0x360] sm:$0xff]
    %v314 = vld [vmem:[#allocation2 + $0x368] sm:$0xff]
    %v315 = vld [vmem:[#allocation2 + $0x370] sm:$0xff]
    %v316 = vld [vmem:[#allocation2 + $0x378] sm:$0xff]
    %v317 = vld [vmem:[#allocation2 + $0x380] sm:$0xff]
    %v318 = vld [vmem:[#allocation2 + $0x388] sm:$0xff]
    %v319 = vld [vmem:[#allocation2 + $0x390] sm:$0xff]
    %v320 = vld [vmem:[#allocation2 + $0x398] sm:$0xff]
    %v321 = vld [vmem:[#allocation2 + $0x3a0] sm:$0xff]
    %v322 = vld [vmem:[#allocation2 + $0x3a8] sm:$0xff]
    %v323 = vld [vmem:[#allocation2 + $0x3b0] sm:$0xff]
    %v324 = vld [vmem:[#allocation2 + $0x3b8] sm:$0xff]
    %v325 = vld [vmem:[#allocation2 + $0x3c0] sm:$0xff]
    %v326 = vld [vmem:[#allocation2 + $0x3c8] sm:$0xff]
    %v327 = vld [vmem:[#allocation2 + $0x3d0] sm:$0xff]
    %v328 = vld [vmem:[#allocation2 + $0x3d8] sm:$0xff]
    %v329 = vld [vmem:[#allocation2 + $0x3e0] sm:$0xff]
    %v330 = vld [vmem:[#allocation2 + $0x3e8] sm:$0xff]
    %v331 = vld [vmem:[#allocation2 + $0x3f0] sm:$0xff]
    %v332 = vld [vmem:[#allocation2 + $0x3f8] sm:$0xff]
    %v333 = vld [vmem:[#allocation2 + $0x400] sm:$0xff]
    %v334 = vld [vmem:[#allocation2 + $0x408] sm:$0xff]
    %v335 = vld [vmem:[#allocation2 + $0x410] sm:$0xff]
    %v336 = vld [vmem:[#allocation2 + $0x418] sm:$0xff]
    %v337 = vld [vmem:[#allocation2 + $0x420] sm:$0xff]
    %v338 = vld [vmem:[#allocation2 + $0x428] sm:$0xff]
    %v339 = vld [vmem:[#allocation2 + $0x430] sm:$0xff]
    %v340 = vld [vmem:[#allocation2 + $0x438] sm:$0xff]
    %v341 = vld [vmem:[#allocation2 + $0x440] sm:$0xff]
    %v342 = vld [vmem:[#allocation2 + $0x448] sm:$0xff]
    %v343 = vld [vmem:[#allocation2 + $0x450] sm:$0xff]
    %v344 = vld [vmem:[#allocation2 + $0x458] sm:$0xff]
    %v345 = vld [vmem:[#allocation2 + $0x460] sm:$0xff]
    %v346 = vld [vmem:[#allocation2 + $0x468] sm:$0xff]
    %v347 = vld [vmem:[#allocation2 + $0x470] sm:$0xff]
    %v348 = vld [vmem:[#allocation2 + $0x478] sm:$0xff]
    %v349 = vld [vmem:[#allocation2 + $0x480] sm:$0xff]
    %v350 = vld [vmem:[#allocation2 + $0x488] sm:$0xff]
    %v351 = vld [vmem:[#allocation2 + $0x490] sm:$0xff]
    %v352 = vld [vmem:[#allocation2 + $0x498] sm:$0xff]
    %v353 = vld [vmem:[#allocation2 + $0x4a0] sm:$0xff]
    %v354 = vld [vmem:[#allocation2 + $0x4a8] sm:$0xff]
    %v355 = vld [vmem:[#allocation2 + $0x4b0] sm:$0xff]
    %v356 = vld [vmem:[#allocation2 + $0x4b8] sm:$0xff]
    %v357 = vld [vmem:[#allocation2 + $0x4c0] sm:$0xff]
    %v358 = vld [vmem:[#allocation2 + $0x4c8] sm:$0xff]
    %v359 = vld [vmem:[#allocation2 + $0x4d0] sm:$0xff]
    %v360 = vld [vmem:[#allocation2 + $0x4d8] sm:$0xff]
    %v361 = vld [vmem:[#allocation2 + $0x4e0] sm:$0xff]
    %v362 = vld [vmem:[#allocation2 + $0x4e8] sm:$0xff]
    %v363 = vld [vmem:[#allocation2 + $0x4f0] sm:$0xff]
    %v364 = vld [vmem:[#allocation2 + $0x4f8] sm:$0xff]
    %v365 = vld [vmem:[#allocation2 + $0x500] sm:$0xff]
    %v366 = vld [vmem:[#allocation2 + $0x508] sm:$0xff]
    %v367 = vld [vmem:[#allocation2 + $0x510] sm:$0xff]
    %v368 = vld [vmem:[#allocation2 + $0x518] sm:$0xff]
    %v369 = vld [vmem:[#allocation2 + $0x520] sm:$0xff]
    %v370 = vld [vmem:[#allocation2 + $0x528] sm:$0xff]
    %v371 = vld [vmem:[#allocation2 + $0x530] sm:$0xff]
    %v372 = vld [vmem:[#allocation2 + $0x538] sm:$0xff]
    %v373 = vld [vmem:[#allocation2 + $0x540] sm:$0xff]
    %v374 = vld [vmem:[#allocation2 + $0x548] sm:$0xff]
    %v375 = vld [vmem:[#allocation2 + $0x550] sm:$0xff]
    %v376 = vld [vmem:[#allocation2 + $0x558] sm:$0xff]
    %v377 = vld [vmem:[#allocation2 + $0x560] sm:$0xff]
    %v378 = vld [vmem:[#allocation2 + $0x568] sm:$0xff]
    %v379 = vld [vmem:[#allocation2 + $0x570] sm:$0xff]
    %v380 = vld [vmem:[#allocation2 + $0x578] sm:$0xff]
    %v381 = vld [vmem:[#allocation2 + $0x580] sm:$0xff]
    %v382 = vld [vmem:[#allocation2 + $0x588] sm:$0xff]
    %v383 = vld [vmem:[#allocation2 + $0x590] sm:$0xff]
    %v384 = vld [vmem:[#allocation2 + $0x598] sm:$0xff]
    %v385 = vld [vmem:[#allocation2 + $0x5a0] sm:$0xff]
    %v386 = vld [vmem:[#allocation2 + $0x5a8] sm:$0xff]
    %v387 = vld [vmem:[#allocation2 + $0x5b0] sm:$0xff]
    %v388 = vld [vmem:[#allocation2 + $0x5b8] sm:$0xff]
    %v389 = vld [vmem:[#allocation2 + $0x5c0] sm:$0xff]
    %v390 = vld [vmem:[#allocation2 + $0x5c8] sm:$0xff]
    %v391 = vld [vmem:[#allocation2 + $0x5d0] sm:$0xff]
    %v392 = vld [vmem:[#allocation2 + $0x5d8] sm:$0xff]
    %v393 = vld [vmem:[#allocation2 + $0x5e0] sm:$0xff]
    %v394 = vld [vmem:[#allocation2 + $0x5e8] sm:$0xff]
    %v395 = vld [vmem:[#allocation2 + $0x5f0] sm:$0xff]
    %v396 = vld [vmem:[#allocation2 + $0x5f8] sm:$0xff]
    %v397 = vld [vmem:[#allocation2 + $0x600] sm:$0xff]
    %v398 = vld [vmem:[#allocation2 + $0x608] sm:$0xff]
    %v399 = vld [vmem:[#allocation2 + $0x610] sm:$0xff]
    %v400 = vld [vmem:[#allocation2 + $0x618] sm:$0xff]
    %v401 = vld [vmem:[#allocation2 + $0x620] sm:$0xff]
    %v402 = vld [vmem:[#allocation2 + $0x628] sm:$0xff]
    %v403 = vld [vmem:[#allocation2 + $0x630] sm:$0xff]
    %v404 = vld [vmem:[#allocation2 + $0x638] sm:$0xff]
    %v405 = vld [vmem:[#allocation2 + $0x640] sm:$0xff]
    %v406 = vld [vmem:[#allocation2 + $0x648] sm:$0xff]
    %v407 = vld [vmem:[#allocation2 + $0x650] sm:$0xff]
    %v408 = vld [vmem:[#allocation2 + $0x658] sm:$0xff]
    %v409 = vld [vmem:[#allocation2 + $0x660] sm:$0xff]
    %v410 = vld [vmem:[#allocation2 + $0x668] sm:$0xff]
    %v411 = vld [vmem:[#allocation2 + $0x670] sm:$0xff]
    %v412 = vld [vmem:[#allocation2 + $0x678] sm:$0xff]
    %v413 = vld [vmem:[#allocation2 + $0x680] sm:$0xff]
    %v414 = vld [vmem:[#allocation2 + $0x688] sm:$0xff]
    %v415 = vld [vmem:[#allocation2 + $0x690] sm:$0xff]
    %v416 = vld [vmem:[#allocation2 + $0x698] sm:$0xff]
    %v417 = vld [vmem:[#allocation2 + $0x6a0] sm:$0xff]
    %v418 = vld [vmem:[#allocation2 + $0x6a8] sm:$0xff]
    %v419 = vld [vmem:[#allocation2 + $0x6b0] sm:$0xff]
    %v420 = vld [vmem:[#allocation2 + $0x6b8] sm:$0xff]
    %v421 = vld [vmem:[#allocation2 + $0x6c0] sm:$0xff]
    %v422 = vld [vmem:[#allocation2 + $0x6c8] sm:$0xff]
    %v423 = vld [vmem:[#allocation2 + $0x6d0] sm:$0xff]
    %v424 = vld [vmem:[#allocation2 + $0x6d8] sm:$0xff]
    %v425 = vld [vmem:[#allocation2 + $0x6e0] sm:$0xff]
    %v426 = vld [vmem:[#allocation2 + $0x6e8] sm:$0xff]
    %v427 = vld [vmem:[#allocation2 + $0x6f0] sm:$0xff]
    %v428 = vld [vmem:[#allocation2 + $0x6f8] sm:$0xff]
    %v429 = vld [vmem:[#allocation2 + $0x700] sm:$0xff]
    %v430 = vld [vmem:[#allocation2 + $0x708] sm:$0xff]
    %v431 = vld [vmem:[#allocation2 + $0x710] sm:$0xff]
    %v432 = vld [vmem:[#allocation2 + $0x718] sm:$0xff]
    %v433 = vld [vmem:[#allocation2 + $0x720] sm:$0xff]
    %v434 = vld [vmem:[#allocation2 + $0x728] sm:$0xff]
    %v435 = vld [vmem:[#allocation2 + $0x730] sm:$0xff]
    %v436 = vld [vmem:[#allocation2 + $0x738] sm:$0xff]
    %v437 = vld [vmem:[#allocation2 + $0x740] sm:$0xff]
    %v438 = vld [vmem:[#allocation2 + $0x748] sm:$0xff]
    %v439 = vld [vmem:[#allocation2 + $0x750] sm:$0xff]
    %v440 = vld [vmem:[#allocation2 + $0x758] sm:$0xff]
    %v441 = vld [vmem:[#allocation2 + $0x760] sm:$0xff]
    %v442 = vld [vmem:[#allocation2 + $0x768] sm:$0xff]
    %v443 = vld [vmem:[#allocation2 + $0x770] sm:$0xff]
    %v444 = vld [vmem:[#allocation2 + $0x778] sm:$0xff]
    %v445 = vld [vmem:[#allocation2 + $0x780] sm:$0xff]
    %v446 = vld [vmem:[#allocation2 + $0x788] sm:$0xff]
    %v447 = vld [vmem:[#allocation2 + $0x790] sm:$0xff]
    %v448 = vld [vmem:[#allocation2 + $0x798] sm:$0xff]
    %v449 = vld [vmem:[#allocation2 + $0x7a0] sm:$0xff]
    %v450 = vld [vmem:[#allocation2 + $0x7a8] sm:$0xff]
    %v451 = vld [vmem:[#allocation2 + $0x7b0] sm:$0xff]
    %v452 = vld [vmem:[#allocation2 + $0x7b8] sm:$0xff]
    %v453 = vld [vmem:[#allocation2 + $0x7c0] sm:$0xff]
    %v454 = vld [vmem:[#allocation2 + $0x7c8] sm:$0xff]
    %v455 = vld [vmem:[#allocation2 + $0x7d0] sm:$0xff]
    %v456 = vld [vmem:[#allocation2 + $0x7d8] sm:$0xff]
    %v457 = vld [vmem:[#allocation2 + $0x7e0] sm:$0xff]
    %v458 = vld [vmem:[#allocation2 + $0x7e8] sm:$0xff]
    %v459 = vld [vmem:[#allocation2 + $0x7f0] sm:$0xff]
    %v460 = vld [vmem:[#allocation2 + $0x7f8] sm:$0xff]
    %v461 = vld [vmem:[#allocation2 + $0x800] sm:$0xff]
    %v462 = vld [vmem:[#allocation2 + $0x808] sm:$0xff]
    %v463 = vld [vmem:[#allocation2 + $0x810] sm:$0xff]
    %v464 = vld [vmem:[#allocation2 + $0x818] sm:$0xff]
    %v465 = vld [vmem:[#allocation2 + $0x820] sm:$0xff]
    %v466 = vld [vmem:[#allocation2 + $0x828] sm:$0xff]
    %v467 = vld [vmem:[#allocation2 + $0x830] sm:$0xff]
    %v468 = vld [vmem:[#allocation2 + $0x838] sm:$0xff]
    %v469 = vld [vmem:[#allocation2 + $0x840] sm:$0xff]
    %v470 = vld [vmem:[#allocation2 + $0x848] sm:$0xff]
    %v471 = vld [vmem:[#allocation2 + $0x850] sm:$0xff]
    %v472 = vld [vmem:[#allocation2 + $0x858] sm:$0xff]
    %v473 = vld [vmem:[#allocation2 + $0x860] sm:$0xff]
    %v474 = vld [vmem:[#allocation2 + $0x868] sm:$0xff]
    %v475 = vld [vmem:[#allocation2 + $0x870] sm:$0xff]
    %v476 = vld [vmem:[#allocation2 + $0x878] sm:$0xff]
    %v477 = vld [vmem:[#allocation2 + $0x880] sm:$0xff]
    %v478 = vld [vmem:[#allocation2 + $0x888] sm:$0xff]
    %v479 = vld [vmem:[#allocation2 + $0x890] sm:$0xff]
    %v480 = vld [vmem:[#allocation2 + $0x898] sm:$0xff]
    %v481 = vld [vmem:[#allocation2 + $0x8a0] sm:$0xff]
    %v482 = vld [vmem:[#allocation2 + $0x8a8] sm:$0xff]
    %v483 = vld [vmem:[#allocation2 + $0x8b0] sm:$0xff]
    %v484 = vld [vmem:[#allocation2 + $0x8b8] sm:$0xff]
    %v485 = vld [vmem:[#allocation2 + $0x8c0] sm:$0xff]
    %v486 = vld [vmem:[#allocation2 + $0x8c8] sm:$0xff]
    %v487 = vld [vmem:[#allocation2 + $0x8d0] sm:$0xff]
    %v488 = vld [vmem:[#allocation2 + $0x8d8] sm:$0xff]
    %v489 = vld [vmem:[#allocation2 + $0x8e0] sm:$0xff]
    %v490 = vld [vmem:[#allocation2 + $0x8e8] sm:$0xff]
    %v491 = vld [vmem:[#allocation2 + $0x8f0] sm:$0xff]
    %v492 = vld [vmem:[#allocation2 + $0x8f8] sm:$0xff]
    %v493 = vld [vmem:[#allocation5] sm:$0xf]
    %v495 = vlaneseq
    %v496 = vshrl.u32 %v495, 7
    %v497 = vsub.s32 0, %v496
    %v498 = vrot.slane %v493, %v497
    %v499 = vlaneseq
    %v500 = vshrl.u32 %v499, 7
    %v501 = vsub.s32 1, %v500
    %v502 = vrot.slane %v493, %v501
    %v503 = vlaneseq
    %v504 = vshrl.u32 %v503, 7
    %v505 = vsub.s32 2, %v504
    %v506 = vrot.slane %v493, %v505
    %v507 = vlaneseq
    %v508 = vshrl.u32 %v507, 7
    %v509 = vsub.s32 3, %v508
    %v510 = vrot.slane %v493, %v509
    %v520 = vunpack.c.l.b16 %v200
    %v521 = vunpack.c.h.b16 %v200
    %v522 = vunpack.c.l.b16 %v201
    %v523 = vunpack.c.h.b16 %v201
    %v524 = vunpack.c.l.b16 %v202
    %v525 = vunpack.c.h.b16 %v202
    %v526 = vunpack.c.l.b16 %v203
    %v527 = vunpack.c.h.b16 %v203
    %v528 = vunpack.c.l.b16 %v204
    %v529 = vpack.c.b16 %v520, %v520
    %v530 = vpack.c.b16 %v521, %v521
    %v531 = vpack.c.b16 %v522, %v522
    %v532 = vpack.c.b16 %v523, %v523
    %v533 = vpack.c.b16 %v524, %v524
    %v534 = vpack.c.b16 %v525, %v525
    %v535 = vpack.c.b16 %v526, %v526
    %v536 = vpack.c.b16 %v527, %v527
    %v537 = vpack.c.b16 %v528, %v528
    %v835 = vunpack.c.l.b16 %v205
    %v836 = vunpack.c.h.b16 %v205
    %v837 = vunpack.c.l.b16 %v206
    %v838 = vunpack.c.h.b16 %v206
    %v839 = vunpack.c.l.b16 %v207
    %v840 = vunpack.c.h.b16 %v207
    %v841 = vunpack.c.l.b16 %v208
    %v842 = vunpack.c.h.b16 %v208
    %v843 = vunpack.c.l.b16 %v209
    %v844 = vunpack.c.h.b16 %v209
    %v845 = vunpack.c.l.b16 %v210
    %v846 = vunpack.c.h.b16 %v210
    %v847 = vunpack.c.l.b16 %v211
    %v848 = vunpack.c.h.b16 %v211
    %v849 = vunpack.c.l.b16 %v212
    %v850 = vunpack.c.h.b16 %v212
    %v851 = vunpack.c.l.b16 %v213
    %v852 = vunpack.c.h.b16 %v213
    %v853 = vunpack.c.l.b16 %v214
    %v854 = vunpack.c.h.b16 %v214
    %v855 = vunpack.c.l.b16 %v215
    %v856 = vunpack.c.h.b16 %v215
    %v857 = vunpack.c.l.b16 %v216
    %v858 = vunpack.c.h.b16 %v216
    %v859 = vunpack.c.l.b16 %v217
    %v860 = vunpack.c.h.b16 %v217
    %v861 = vunpack.c.l.b16 %v218
    %v862 = vunpack.c.h.b16 %v218
    %v863 = vunpack.c.l.b16 %v219
    %v864 = vunpack.c.h.b16 %v219
    %v865 = vunpack.c.l.b16 %v220
    %v866 = vunpack.c.h.b16 %v220
    %v867 = vunpack.c.l.b16 %v221
    %v868 = vunpack.c.h.b16 %v221
    %v869 = vunpack.c.l.b16 %v222
    %v870 = vunpack.c.h.b16 %v222
    %v871 = vunpack.c.l.b16 %v223
    %v872 = vunpack.c.h.b16 %v223
    %v873 = vunpack.c.l.b16 %v224
    %v874 = vunpack.c.h.b16 %v224
    %v875 = vunpack.c.l.b16 %v225
    %v876 = vunpack.c.h.b16 %v225
    %v877 = vunpack.c.l.b16 %v226
    %v878 = vunpack.c.h.b16 %v226
    %v879 = vunpack.c.l.b16 %v227
    %v880 = vunpack.c.h.b16 %v227
    %v881 = vunpack.c.l.b16 %v228
    %v882 = vunpack.c.h.b16 %v228
    %v883 = vunpack.c.l.b16 %v229
    %v884 = vunpack.c.h.b16 %v229
    %v885 = vunpack.c.l.b16 %v230
    %v886 = vunpack.c.h.b16 %v230
    %v887 = vunpack.c.l.b16 %v231
    %v888 = vunpack.c.h.b16 %v231
    %v889 = vunpack.c.l.b16 %v232
    %v890 = vunpack.c.h.b16 %v232
    %v891 = vunpack.c.l.b16 %v233
    %v892 = vunpack.c.h.b16 %v233
    %v893 = vunpack.c.l.b16 %v234
    %v894 = vunpack.c.h.b16 %v234
    %v895 = vunpack.c.l.b16 %v235
    %v896 = vunpack.c.h.b16 %v235
    %v897 = vunpack.c.l.b16 %v236
    %v898 = vunpack.c.h.b16 %v236
    %v899 = vunpack.c.l.b16 %v237
    %v900 = vunpack.c.h.b16 %v237
    %v901 = vunpack.c.l.b16 %v238
    %v902 = vunpack.c.h.b16 %v238
    %v903 = vunpack.c.l.b16 %v239
    %v904 = vunpack.c.h.b16 %v239
    %v905 = vunpack.c.l.b16 %v240
    %v906 = vunpack.c.h.b16 %v240
    %v907 = vunpack.c.l.b16 %v241
    %v908 = vunpack.c.h.b16 %v241
    %v909 = vunpack.c.l.b16 %v242
    %v910 = vunpack.c.h.b16 %v242
    %v911 = vunpack.c.l.b16 %v243
    %v912 = vunpack.c.h.b16 %v243
    %v913 = vunpack.c.l.b16 %v244
    %v914 = vunpack.c.h.b16 %v244
    %v915 = vunpack.c.l.b16 %v245
    %v916 = vunpack.c.h.b16 %v245
    %v917 = vunpack.c.l.b16 %v246
    %v918 = vunpack.c.h.b16 %v246
    %v919 = vunpack.c.l.b16 %v247
    %v920 = vunpack.c.h.b16 %v247
    %v921 = vunpack.c.l.b16 %v248
    %v922 = vunpack.c.h.b16 %v248
    %v923 = vunpack.c.l.b16 %v249
    %v924 = vunpack.c.h.b16 %v249
    %v925 = vunpack.c.l.b16 %v250
    %v926 = vunpack.c.h.b16 %v250
    %v927 = vunpack.c.l.b16 %v251
    %v928 = vunpack.c.h.b16 %v251
    %v929 = vunpack.c.l.b16 %v252
    %v930 = vunpack.c.h.b16 %v252
    %v931 = vunpack.c.l.b16 %v253
    %v932 = vunpack.c.h.b16 %v253
    %v933 = vunpack.c.l.b16 %v254
    %v934 = vunpack.c.h.b16 %v254
    %v935 = vunpack.c.l.b16 %v255
    %v936 = vunpack.c.h.b16 %v255
    %v937 = vunpack.c.l.b16 %v256
    %v938 = vunpack.c.h.b16 %v256
    %v939 = vunpack.c.l.b16 %v257
    %v940 = vunpack.c.h.b16 %v257
    %v941 = vunpack.c.l.b16 %v258
    %v942 = vunpack.c.h.b16 %v258
    %v943 = vunpack.c.l.b16 %v259
    %v944 = vunpack.c.h.b16 %v259
    %v945 = vunpack.c.l.b16 %v260
    %v946 = vunpack.c.h.b16 %v260
    %v947 = vunpack.c.l.b16 %v261
    %v948 = vunpack.c.h.b16 %v261
    %v949 = vunpack.c.l.b16 %v262
    %v950 = vunpack.c.h.b16 %v262
    %v951 = vunpack.c.l.b16 %v263
    %v952 = vunpack.c.h.b16 %v263
    %v953 = vunpack.c.l.b16 %v264
    %v954 = vunpack.c.h.b16 %v264
    %v955 = vunpack.c.l.b16 %v265
    %v956 = vunpack.c.h.b16 %v265
    %v957 = vunpack.c.l.b16 %v266
    %v958 = vunpack.c.h.b16 %v266
    %v959 = vunpack.c.l.b16 %v267
    %v960 = vunpack.c.h.b16 %v267
    %v961 = vunpack.c.l.b16 %v268
    %v962 = vunpack.c.h.b16 %v268
    %v963 = vunpack.c.l.b16 %v269
    %v964 = vunpack.c.h.b16 %v269
    %v965 = vunpack.c.l.b16 %v270
    %v966 = vunpack.c.h.b16 %v270
    %v967 = vunpack.c.l.b16 %v271
    %v968 = vunpack.c.h.b16 %v271
    %v969 = vunpack.c.l.b16 %v272
    %v970 = vunpack.c.h.b16 %v272
    %v971 = vunpack.c.l.b16 %v273
    %v972 = vunpack.c.h.b16 %v273
    %v973 = vunpack.c.l.b16 %v274
    %v974 = vunpack.c.h.b16 %v274
    %v975 = vunpack.c.l.b16 %v275
    %v976 = vunpack.c.h.b16 %v275
    %v977 = vunpack.c.l.b16 %v276
    %v978 = vunpack.c.h.b16 %v276
    %v979 = vunpack.c.l.b16 %v277
    %v980 = vunpack.c.h.b16 %v277
    %v981 = vunpack.c.l.b16 %v278
    %v982 = vunpack.c.h.b16 %v278
    %v983 = vunpack.c.l.b16 %v279
    %v984 = vunpack.c.h.b16 %v279
    %v985 = vunpack.c.l.b16 %v280
    %v986 = vunpack.c.h.b16 %v280
    %v987 = vunpack.c.l.b16 %v281
    %v988 = vunpack.c.h.b16 %v281
    %v989 = vunpack.c.l.b16 %v282
    %v990 = vunpack.c.h.b16 %v282
    %v991 = vunpack.c.l.b16 %v283
    %v992 = vunpack.c.h.b16 %v283
    %v993 = vunpack.c.l.b16 %v284
    %v994 = vunpack.c.h.b16 %v284
    %v995 = vunpack.c.l.b16 %v285
    %v996 = vunpack.c.h.b16 %v285
    %v997 = vunpack.c.l.b16 %v286
    %v998 = vunpack.c.h.b16 %v286
    %v999 = vunpack.c.l.b16 %v287
    %v1000 = vunpack.c.h.b16 %v287
    %v1001 = vunpack.c.l.b16 %v288
    %v1002 = vunpack.c.h.b16 %v288
    %v1003 = vunpack.c.l.b16 %v289
    %v1004 = vunpack.c.h.b16 %v289
    %v1005 = vunpack.c.l.b16 %v290
    %v1006 = vunpack.c.h.b16 %v290
    %v1007 = vunpack.c.l.b16 %v291
    %v1008 = vunpack.c.h.b16 %v291
    %v1009 = vunpack.c.l.b16 %v292
    %v1010 = vunpack.c.h.b16 %v292
    %v1011 = vunpack.c.l.b16 %v293
    %v1012 = vunpack.c.h.b16 %v293
    %v1013 = vunpack.c.l.b16 %v294
    %v1014 = vunpack.c.h.b16 %v294
    %v1015 = vunpack.c.l.b16 %v295
    %v1016 = vunpack.c.h.b16 %v295
    %v1017 = vunpack.c.l.b16 %v296
    %v1018 = vunpack.c.h.b16 %v296
    %v1019 = vunpack.c.l.b16 %v297
    %v1020 = vunpack.c.h.b16 %v297
    %v1021 = vunpack.c.l.b16 %v298
    %v1022 = vunpack.c.h.b16 %v298
    %v1023 = vunpack.c.l.b16 %v299
    %v1024 = vunpack.c.h.b16 %v299
    %v1025 = vunpack.c.l.b16 %v300
    %v1026 = vunpack.c.h.b16 %v300
    %v1027 = vunpack.c.l.b16 %v301
    %v1028 = vunpack.c.h.b16 %v301
    %v1029 = vunpack.c.l.b16 %v302
    %v1030 = vunpack.c.h.b16 %v302
    %v1031 = vunpack.c.l.b16 %v303
    %v1032 = vunpack.c.h.b16 %v303
    %v1033 = vunpack.c.l.b16 %v304
    %v1034 = vunpack.c.h.b16 %v304
    %v1035 = vunpack.c.l.b16 %v305
    %v1036 = vunpack.c.h.b16 %v305
    %v1037 = vunpack.c.l.b16 %v306
    %v1038 = vunpack.c.h.b16 %v306
    %v1039 = vunpack.c.l.b16 %v307
    %v1040 = vunpack.c.h.b16 %v307
    %v1041 = vunpack.c.l.b16 %v308
    %v1042 = vunpack.c.h.b16 %v308
    %v1043 = vunpack.c.l.b16 %v309
    %v1044 = vunpack.c.h.b16 %v309
    %v1045 = vunpack.c.l.b16 %v310
    %v1046 = vunpack.c.h.b16 %v310
    %v1047 = vunpack.c.l.b16 %v311
    %v1048 = vunpack.c.h.b16 %v311
    %v1049 = vunpack.c.l.b16 %v312
    %v1050 = vunpack.c.h.b16 %v312
    %v1051 = vunpack.c.l.b16 %v313
    %v1052 = vunpack.c.h.b16 %v313
    %v1053 = vunpack.c.l.b16 %v314
    %v1054 = vunpack.c.h.b16 %v314
    %v1055 = vunpack.c.l.b16 %v315
    %v1056 = vunpack.c.h.b16 %v315
    %v1057 = vunpack.c.l.b16 %v316
    %v1058 = vunpack.c.h.b16 %v316
    %v1059 = vunpack.c.l.b16 %v317
    %v1060 = vunpack.c.h.b16 %v317
    %v1061 = vunpack.c.l.b16 %v318
    %v1062 = vunpack.c.h.b16 %v318
    %v1063 = vunpack.c.l.b16 %v319
    %v1064 = vunpack.c.h.b16 %v319
    %v1065 = vunpack.c.l.b16 %v320
    %v1066 = vunpack.c.h.b16 %v320
    %v1067 = vunpack.c.l.b16 %v321
    %v1068 = vunpack.c.h.b16 %v321
    %v1069 = vunpack.c.l.b16 %v322
    %v1070 = vunpack.c.h.b16 %v322
    %v1071 = vunpack.c.l.b16 %v323
    %v1072 = vunpack.c.h.b16 %v323
    %v1073 = vunpack.c.l.b16 %v324
    %v1074 = vunpack.c.h.b16 %v324
    %v1075 = vunpack.c.l.b16 %v325
    %v1076 = vunpack.c.h.b16 %v325
    %v1077 = vunpack.c.l.b16 %v326
    %v1078 = vunpack.c.h.b16 %v326
    %v1079 = vunpack.c.l.b16 %v327
    %v1080 = vunpack.c.h.b16 %v327
    %v1081 = vunpack.c.l.b16 %v328
    %v1082 = vunpack.c.h.b16 %v328
    %v1083 = vunpack.c.l.b16 %v329
    %v1084 = vunpack.c.h.b16 %v329
    %v1085 = vunpack.c.l.b16 %v330
    %v1086 = vunpack.c.h.b16 %v330
    %v1087 = vunpack.c.l.b16 %v331
    %v1088 = vunpack.c.h.b16 %v331
    %v1089 = vunpack.c.l.b16 %v332
    %v1090 = vunpack.c.h.b16 %v332
    %v1091 = vunpack.c.l.b16 %v333
    %v1092 = vunpack.c.h.b16 %v333
    %v1093 = vunpack.c.l.b16 %v334
    %v1094 = vunpack.c.h.b16 %v334
    %v1095 = vunpack.c.l.b16 %v335
    %v1096 = vunpack.c.h.b16 %v335
    %v1097 = vunpack.c.l.b16 %v336
    %v1098 = vunpack.c.h.b16 %v336
    %v1099 = vunpack.c.l.b16 %v337
    %v1100 = vunpack.c.h.b16 %v337
    %v1101 = vunpack.c.l.b16 %v338
    %v1102 = vunpack.c.h.b16 %v338
    %v1103 = vunpack.c.l.b16 %v339
    %v1104 = vunpack.c.h.b16 %v339
    %v1105 = vunpack.c.l.b16 %v340
    %v1106 = vunpack.c.h.b16 %v340
    %v1107 = vunpack.c.l.b16 %v341
    %v1108 = vunpack.c.h.b16 %v341
    %v1109 = vunpack.c.l.b16 %v342
    %v1110 = vunpack.c.h.b16 %v342
    %v1111 = vunpack.c.l.b16 %v343
    %v1112 = vunpack.c.h.b16 %v343
    %v1113 = vunpack.c.l.b16 %v344
    %v1114 = vunpack.c.h.b16 %v344
    %v1115 = vunpack.c.l.b16 %v345
    %v1116 = vunpack.c.h.b16 %v345
    %v1117 = vunpack.c.l.b16 %v346
    %v1118 = vunpack.c.h.b16 %v346
    %v1119 = vunpack.c.l.b16 %v347
    %v1120 = vunpack.c.h.b16 %v347
    %v1121 = vunpack.c.l.b16 %v348
    %v1122 = vunpack.c.h.b16 %v348
    %v1123 = vunpack.c.l.b16 %v349
    %v1124 = vunpack.c.h.b16 %v349
    %v1125 = vunpack.c.l.b16 %v350
    %v1126 = vunpack.c.h.b16 %v350
    %v1127 = vunpack.c.l.b16 %v351
    %v1128 = vunpack.c.h.b16 %v351
    %v1129 = vunpack.c.l.b16 %v352
    %v1130 = vunpack.c.h.b16 %v352
    %v1131 = vunpack.c.l.b16 %v353
    %v1132 = vunpack.c.h.b16 %v353
    %v1133 = vunpack.c.l.b16 %v354
    %v1134 = vunpack.c.h.b16 %v354
    %v1135 = vunpack.c.l.b16 %v355
    %v1136 = vunpack.c.h.b16 %v355
    %v1137 = vunpack.c.l.b16 %v356
    %v1138 = vunpack.c.h.b16 %v356
    %v1139 = vunpack.c.l.b16 %v357
    %v1140 = vunpack.c.h.b16 %v357
    %v1141 = vunpack.c.l.b16 %v358
    %v1142 = vunpack.c.h.b16 %v358
    %v1143 = vunpack.c.l.b16 %v359
    %v1144 = vunpack.c.h.b16 %v359
    %v1145 = vunpack.c.l.b16 %v360
    %v1146 = vunpack.c.h.b16 %v360
    %v1147 = vunpack.c.l.b16 %v361
    %v1148 = vunpack.c.h.b16 %v361
    %v1149 = vunpack.c.l.b16 %v362
    %v1150 = vunpack.c.h.b16 %v362
    %v1151 = vunpack.c.l.b16 %v363
    %v1152 = vunpack.c.h.b16 %v363
    %v1153 = vunpack.c.l.b16 %v364
    %v1154 = vunpack.c.h.b16 %v364
    %v1155 = vunpack.c.l.b16 %v365
    %v1156 = vunpack.c.h.b16 %v365
    %v1157 = vunpack.c.l.b16 %v366
    %v1158 = vunpack.c.h.b16 %v366
    %v1159 = vunpack.c.l.b16 %v367
    %v1160 = vunpack.c.h.b16 %v367
    %v1161 = vunpack.c.l.b16 %v368
    %v1162 = vunpack.c.h.b16 %v368
    %v1163 = vunpack.c.l.b16 %v369
    %v1164 = vunpack.c.h.b16 %v369
    %v1165 = vunpack.c.l.b16 %v370
    %v1166 = vunpack.c.h.b16 %v370
    %v1167 = vunpack.c.l.b16 %v371
    %v1168 = vunpack.c.h.b16 %v371
    %v1169 = vunpack.c.l.b16 %v372
    %v1170 = vunpack.c.h.b16 %v372
    %v1171 = vunpack.c.l.b16 %v373
    %v1172 = vunpack.c.h.b16 %v373
    %v1173 = vunpack.c.l.b16 %v374
    %v1174 = vunpack.c.h.b16 %v374
    %v1175 = vunpack.c.l.b16 %v375
    %v1176 = vunpack.c.h.b16 %v375
    %v1177 = vunpack.c.l.b16 %v376
    %v1178 = vunpack.c.h.b16 %v376
    %v1179 = vunpack.c.l.b16 %v377
    %v1180 = vunpack.c.h.b16 %v377
    %v1181 = vunpack.c.l.b16 %v378
    %v1182 = vunpack.c.h.b16 %v378
    %v1183 = vunpack.c.l.b16 %v379
    %v1184 = vunpack.c.h.b16 %v379
    %v1185 = vunpack.c.l.b16 %v380
    %v1186 = vunpack.c.h.b16 %v380
    %v1187 = vunpack.c.l.b16 %v381
    %v1188 = vunpack.c.h.b16 %v381
    %v1189 = vunpack.c.l.b16 %v382
    %v1190 = vunpack.c.h.b16 %v382
    %v1191 = vunpack.c.l.b16 %v383
    %v1192 = vunpack.c.h.b16 %v383
    %v1193 = vunpack.c.l.b16 %v384
    %v1194 = vunpack.c.h.b16 %v384
    %v1195 = vunpack.c.l.b16 %v385
    %v1196 = vunpack.c.h.b16 %v385
    %v1197 = vunpack.c.l.b16 %v386
    %v1198 = vunpack.c.h.b16 %v386
    %v1199 = vunpack.c.l.b16 %v387
    %v1200 = vunpack.c.h.b16 %v387
    %v1201 = vunpack.c.l.b16 %v388
    %v1202 = vunpack.c.h.b16 %v388
    %v1203 = vunpack.c.l.b16 %v389
    %v1204 = vunpack.c.h.b16 %v389
    %v1205 = vunpack.c.l.b16 %v390
    %v1206 = vunpack.c.h.b16 %v390
    %v1207 = vunpack.c.l.b16 %v391
    %v1208 = vunpack.c.h.b16 %v391
    %v1209 = vunpack.c.l.b16 %v392
    %v1210 = vunpack.c.h.b16 %v392
    %v1211 = vunpack.c.l.b16 %v393
    %v1212 = vunpack.c.h.b16 %v393
    %v1213 = vunpack.c.l.b16 %v394
    %v1214 = vunpack.c.h.b16 %v394
    %v1215 = vunpack.c.l.b16 %v395
    %v1216 = vunpack.c.h.b16 %v395
    %v1217 = vunpack.c.l.b16 %v396
    %v1218 = vunpack.c.h.b16 %v396
    %v1219 = vunpack.c.l.b16 %v397
    %v1220 = vunpack.c.h.b16 %v397
    %v1221 = vunpack.c.l.b16 %v398
    %v1222 = vunpack.c.h.b16 %v398
    %v1223 = vunpack.c.l.b16 %v399
    %v1224 = vunpack.c.h.b16 %v399
    %v1225 = vunpack.c.l.b16 %v400
    %v1226 = vunpack.c.h.b16 %v400
    %v1227 = vunpack.c.l.b16 %v401
    %v1228 = vunpack.c.h.b16 %v401
    %v1229 = vunpack.c.l.b16 %v402
    %v1230 = vunpack.c.h.b16 %v402
    %v1231 = vunpack.c.l.b16 %v403
    %v1232 = vunpack.c.h.b16 %v403
    %v1233 = vunpack.c.l.b16 %v404
    %v1234 = vunpack.c.h.b16 %v404
    %v1235 = vunpack.c.l.b16 %v405
    %v1236 = vunpack.c.h.b16 %v405
    %v1237 = vunpack.c.l.b16 %v406
    %v1238 = vunpack.c.h.b16 %v406
    %v1239 = vunpack.c.l.b16 %v407
    %v1240 = vunpack.c.h.b16 %v407
    %v1241 = vunpack.c.l.b16 %v408
    %v1242 = vunpack.c.h.b16 %v408
    %v1243 = vunpack.c.l.b16 %v409
    %v1244 = vunpack.c.h.b16 %v409
    %v1245 = vunpack.c.l.b16 %v410
    %v1246 = vunpack.c.h.b16 %v410
    %v1247 = vunpack.c.l.b16 %v411
    %v1248 = vunpack.c.h.b16 %v411
    %v1249 = vunpack.c.l.b16 %v412
    %v1250 = vunpack.c.h.b16 %v412
    %v1251 = vunpack.c.l.b16 %v413
    %v1252 = vunpack.c.h.b16 %v413
    %v1253 = vunpack.c.l.b16 %v414
    %v1254 = vunpack.c.h.b16 %v414
    %v1255 = vunpack.c.l.b16 %v415
    %v1256 = vunpack.c.h.b16 %v415
    %v1257 = vunpack.c.l.b16 %v416
    %v1258 = vunpack.c.h.b16 %v416
    %v1259 = vunpack.c.l.b16 %v417
    %v1260 = vunpack.c.h.b16 %v417
    %v1261 = vunpack.c.l.b16 %v418
    %v1262 = vunpack.c.h.b16 %v418
    %v1263 = vunpack.c.l.b16 %v419
    %v1264 = vunpack.c.h.b16 %v419
    %v1265 = vunpack.c.l.b16 %v420
    %v1266 = vunpack.c.h.b16 %v420
    %v1267 = vunpack.c.l.b16 %v421
    %v1268 = vunpack.c.h.b16 %v421
    %v1269 = vunpack.c.l.b16 %v422
    %v1270 = vunpack.c.h.b16 %v422
    %v1271 = vunpack.c.l.b16 %v423
    %v1272 = vunpack.c.h.b16 %v423
    %v1273 = vunpack.c.l.b16 %v424
    %v1274 = vunpack.c.h.b16 %v424
    %v1275 = vunpack.c.l.b16 %v425
    %v1276 = vunpack.c.h.b16 %v425
    %v1277 = vunpack.c.l.b16 %v426
    %v1278 = vunpack.c.h.b16 %v426
    %v1279 = vunpack.c.l.b16 %v427
    %v1280 = vunpack.c.h.b16 %v427
    %v1281 = vunpack.c.l.b16 %v428
    %v1282 = vunpack.c.h.b16 %v428
    %v1283 = vunpack.c.l.b16 %v429
    %v1284 = vunpack.c.h.b16 %v429
    %v1285 = vunpack.c.l.b16 %v430
    %v1286 = vunpack.c.h.b16 %v430
    %v1287 = vunpack.c.l.b16 %v431
    %v1288 = vunpack.c.h.b16 %v431
    %v1289 = vunpack.c.l.b16 %v432
    %v1290 = vunpack.c.h.b16 %v432
    %v1291 = vunpack.c.l.b16 %v433
    %v1292 = vunpack.c.h.b16 %v433
    %v1293 = vunpack.c.l.b16 %v434
    %v1294 = vunpack.c.h.b16 %v434
    %v1295 = vunpack.c.l.b16 %v435
    %v1296 = vunpack.c.h.b16 %v435
    %v1297 = vunpack.c.l.b16 %v436
    %v1298 = vunpack.c.h.b16 %v436
    %v1299 = vunpack.c.l.b16 %v437
    %v1300 = vunpack.c.h.b16 %v437
    %v1301 = vunpack.c.l.b16 %v438
    %v1302 = vunpack.c.h.b16 %v438
    %v1303 = vunpack.c.l.b16 %v439
    %v1304 = vunpack.c.h.b16 %v439
    %v1305 = vunpack.c.l.b16 %v440
    %v1306 = vunpack.c.h.b16 %v440
    %v1307 = vunpack.c.l.b16 %v441
    %v1308 = vunpack.c.h.b16 %v441
    %v1309 = vunpack.c.l.b16 %v442
    %v1310 = vunpack.c.h.b16 %v442
    %v1311 = vunpack.c.l.b16 %v443
    %v1312 = vunpack.c.h.b16 %v443
    %v1313 = vunpack.c.l.b16 %v444
    %v1314 = vunpack.c.h.b16 %v444
    %v1315 = vunpack.c.l.b16 %v445
    %v1316 = vunpack.c.h.b16 %v445
    %v1317 = vunpack.c.l.b16 %v446
    %v1318 = vunpack.c.h.b16 %v446
    %v1319 = vunpack.c.l.b16 %v447
    %v1320 = vunpack.c.h.b16 %v447
    %v1321 = vunpack.c.l.b16 %v448
    %v1322 = vunpack.c.h.b16 %v448
    %v1323 = vunpack.c.l.b16 %v449
    %v1324 = vunpack.c.h.b16 %v449
    %v1325 = vunpack.c.l.b16 %v450
    %v1326 = vunpack.c.h.b16 %v450
    %v1327 = vunpack.c.l.b16 %v451
    %v1328 = vunpack.c.h.b16 %v451
    %v1329 = vunpack.c.l.b16 %v452
    %v1330 = vunpack.c.h.b16 %v452
    %v1331 = vunpack.c.l.b16 %v453
    %v1332 = vunpack.c.h.b16 %v453
    %v1333 = vunpack.c.l.b16 %v454
    %v1334 = vunpack.c.h.b16 %v454
    %v1335 = vunpack.c.l.b16 %v455
    %v1336 = vunpack.c.h.b16 %v455
    %v1337 = vunpack.c.l.b16 %v456
    %v1338 = vunpack.c.h.b16 %v456
    %v1339 = vunpack.c.l.b16 %v457
    %v1340 = vunpack.c.h.b16 %v457
    %v1341 = vunpack.c.l.b16 %v458
    %v1342 = vunpack.c.h.b16 %v458
    %v1343 = vunpack.c.l.b16 %v459
    %v1344 = vunpack.c.h.b16 %v459
    %v1345 = vunpack.c.l.b16 %v460
    %v1346 = vunpack.c.h.b16 %v460
    %v1347 = vunpack.c.l.b16 %v461
    %v1348 = vunpack.c.h.b16 %v461
    %v1349 = vunpack.c.l.b16 %v462
    %v1350 = vunpack.c.h.b16 %v462
    %v1351 = vunpack.c.l.b16 %v463
    %v1352 = vunpack.c.h.b16 %v463
    %v1353 = vunpack.c.l.b16 %v464
    %v1354 = vunpack.c.h.b16 %v464
    %v1355 = vunpack.c.l.b16 %v465
    %v1356 = vunpack.c.h.b16 %v465
    %v1357 = vunpack.c.l.b16 %v466
    %v1358 = vunpack.c.h.b16 %v466
    %v1359 = vunpack.c.l.b16 %v467
    %v1360 = vunpack.c.h.b16 %v467
    %v1361 = vunpack.c.l.b16 %v468
    %v1362 = vunpack.c.h.b16 %v468
    %v1363 = vunpack.c.l.b16 %v469
    %v1364 = vunpack.c.h.b16 %v469
    %v1365 = vunpack.c.l.b16 %v470
    %v1366 = vunpack.c.h.b16 %v470
    %v1367 = vunpack.c.l.b16 %v471
    %v1368 = vunpack.c.h.b16 %v471
    %v1369 = vunpack.c.l.b16 %v472
    %v1370 = vunpack.c.h.b16 %v472
    %v1371 = vunpack.c.l.b16 %v473
    %v1372 = vunpack.c.h.b16 %v473
    %v1373 = vunpack.c.l.b16 %v474
    %v1374 = vunpack.c.h.b16 %v474
    %v1375 = vunpack.c.l.b16 %v475
    %v1376 = vunpack.c.h.b16 %v475
    %v1377 = vunpack.c.l.b16 %v476
    %v1378 = vunpack.c.h.b16 %v476
    %v1379 = vunpack.c.l.b16 %v477
    %v1380 = vunpack.c.h.b16 %v477
    %v1381 = vunpack.c.l.b16 %v478
    %v1382 = vunpack.c.h.b16 %v478
    %v1383 = vunpack.c.l.b16 %v479
    %v1384 = vunpack.c.h.b16 %v479
    %v1385 = vunpack.c.l.b16 %v480
    %v1386 = vunpack.c.h.b16 %v480
    %v1387 = vunpack.c.l.b16 %v481
    %v1388 = vunpack.c.h.b16 %v481
    %v1389 = vunpack.c.l.b16 %v482
    %v1390 = vunpack.c.h.b16 %v482
    %v1391 = vunpack.c.l.b16 %v483
    %v1392 = vunpack.c.h.b16 %v483
    %v1393 = vunpack.c.l.b16 %v484
    %v1394 = vunpack.c.h.b16 %v484
    %v1395 = vunpack.c.l.b16 %v485
    %v1396 = vunpack.c.h.b16 %v485
    %v1397 = vunpack.c.l.b16 %v486
    %v1398 = vunpack.c.h.b16 %v486
    %v1399 = vunpack.c.l.b16 %v487
    %v1400 = vunpack.c.h.b16 %v487
    %v1401 = vunpack.c.l.b16 %v488
    %v1402 = vunpack.c.h.b16 %v488
    %v1403 = vunpack.c.l.b16 %v489
    %v1404 = vunpack.c.h.b16 %v489
    %v1405 = vunpack.c.l.b16 %v490
    %v1406 = vunpack.c.h.b16 %v490
    %v1407 = vunpack.c.l.b16 %v491
    %v1408 = vunpack.c.h.b16 %v491
    %v1409 = vunpack.c.l.b16 %v492
    %v1410 = vunpack.c.h.b16 %v492
    %v1411 = vpack.c.b16 %v839, %v835
    %v1412 = vpack.c.b16 %v840, %v836
    %v1413 = vpack.c.b16 %v841, %v837
    %v1414 = vpack.c.b16 %v842, %v838
    %v1415 = vpack.c.b16 %v847, %v843
    %v1416 = vpack.c.b16 %v848, %v844
    %v1417 = vpack.c.b16 %v849, %v845
    %v1418 = vpack.c.b16 %v850, %v846
    %v1419 = vpack.c.b16 %v855, %v851
    %v1420 = vpack.c.b16 %v856, %v852
    %v1421 = vpack.c.b16 %v857, %v853
    %v1422 = vpack.c.b16 %v858, %v854
    %v1423 = vpack.c.b16 %v863, %v859
    %v1424 = vpack.c.b16 %v864, %v860
    %v1425 = vpack.c.b16 %v865, %v861
    %v1426 = vpack.c.b16 %v866, %v862
    %v1427 = vpack.c.b16 %v871, %v867
    %v1428 = vpack.c.b16 %v872, %v868
    %v1429 = vpack.c.b16 %v873, %v869
    %v1430 = vpack.c.b16 %v874, %v870
    %v1431 = vpack.c.b16 %v879, %v875
    %v1432 = vpack.c.b16 %v880, %v876
    %v1433 = vpack.c.b16 %v881, %v877
    %v1434 = vpack.c.b16 %v882, %v878
    %v1435 = vpack.c.b16 %v887, %v883
    %v1436 = vpack.c.b16 %v888, %v884
    %v1437 = vpack.c.b16 %v889, %v885
    %v1438 = vpack.c.b16 %v890, %v886
    %v1439 = vpack.c.b16 %v895, %v891
    %v1440 = vpack.c.b16 %v896, %v892
    %v1441 = vpack.c.b16 %v897, %v893
    %v1442 = vpack.c.b16 %v898, %v894
    %v1443 = vpack.c.b16 %v903, %v899
    %v1444 = vpack.c.b16 %v904, %v900
    %v1445 = vpack.c.b16 %v905, %v901
    %v1446 = vpack.c.b16 %v906, %v902
    %v1447 = vpack.c.b16 %v911, %v907
    %v1448 = vpack.c.b16 %v912, %v908
    %v1449 = vpack.c.b16 %v913, %v909
    %v1450 = vpack.c.b16 %v914, %v910
    %v1451 = vpack.c.b16 %v919, %v915
    %v1452 = vpack.c.b16 %v920, %v916
    %v1453 = vpack.c.b16 %v921, %v917
    %v1454 = vpack.c.b16 %v922, %v918
    %v1455 = vpack.c.b16 %v927, %v923
    %v1456 = vpack.c.b16 %v928, %v924
    %v1457 = vpack.c.b16 %v929, %v925
    %v1458 = vpack.c.b16 %v930, %v926
    %v1459 = vpack.c.b16 %v935, %v931
    %v1460 = vpack.c.b16 %v936, %v932
    %v1461 = vpack.c.b16 %v937, %v933
    %v1462 = vpack.c.b16 %v938, %v934
    %v1463 = vpack.c.b16 %v943, %v939
    %v1464 = vpack.c.b16 %v944, %v940
    %v1465 = vpack.c.b16 %v945, %v941
    %v1466 = vpack.c.b16 %v946, %v942
    %v1467 = vpack.c.b16 %v951, %v947
    %v1468 = vpack.c.b16 %v952, %v948
    %v1469 = vpack.c.b16 %v953, %v949
    %v1470 = vpack.c.b16 %v954, %v950
    %v1471 = vpack.c.b16 %v959, %v955
    %v1472 = vpack.c.b16 %v960, %v956
    %v1473 = vpack.c.b16 %v961, %v957
    %v1474 = vpack.c.b16 %v962, %v958
    %v1475 = vpack.c.b16 %v967, %v963
    %v1476 = vpack.c.b16 %v968, %v964
    %v1477 = vpack.c.b16 %v969, %v965
    %v1478 = vpack.c.b16 %v970, %v966
    %v1479 = vpack.c.b16 %v975, %v971
    %v1480 = vpack.c.b16 %v976, %v972
    %v1481 = vpack.c.b16 %v977, %v973
    %v1482 = vpack.c.b16 %v978, %v974
    %v1483 = vpack.c.b16 %v983, %v979
    %v1484 = vpack.c.b16 %v984, %v980
    %v1485 = vpack.c.b16 %v985, %v981
    %v1486 = vpack.c.b16 %v986, %v982
    %v1487 = vpack.c.b16 %v991, %v987
    %v1488 = vpack.c.b16 %v992, %v988
    %v1489 = vpack.c.b16 %v993, %v989
    %v1490 = vpack.c.b16 %v994, %v990
    %v1491 = vpack.c.b16 %v999, %v995
    %v1492 = vpack.c.b16 %v1000, %v996
    %v1493 = vpack.c.b16 %v1001, %v997
    %v1494 = vpack.c.b16 %v1002, %v998
    %v1495 = vpack.c.b16 %v1007, %v1003
    %v1496 = vpack.c.b16 %v1008, %v1004
    %v1497 = vpack.c.b16 %v1009, %v1005
    %v1498 = vpack.c.b16 %v1010, %v1006
    %v1499 = vpack.c.b16 %v1015, %v1011
    %v1500 = vpack.c.b16 %v1016, %v1012
    %v1501 = vpack.c.b16 %v1017, %v1013
    %v1502 = vpack.c.b16 %v1018, %v1014
    %v1503 = vpack.c.b16 %v1023, %v1019
    %v1504 = vpack.c.b16 %v1024, %v1020
    %v1505 = vpack.c.b16 %v1025, %v1021
    %v1506 = vpack.c.b16 %v1026, %v1022
    %v1507 = vpack.c.b16 %v1031, %v1027
    %v1508 = vpack.c.b16 %v1032, %v1028
    %v1509 = vpack.c.b16 %v1033, %v1029
    %v1510 = vpack.c.b16 %v1034, %v1030
    %v1511 = vpack.c.b16 %v1039, %v1035
    %v1512 = vpack.c.b16 %v1040, %v1036
    %v1513 = vpack.c.b16 %v1041, %v1037
    %v1514 = vpack.c.b16 %v1042, %v1038
    %v1515 = vpack.c.b16 %v1047, %v1043
    %v1516 = vpack.c.b16 %v1048, %v1044
    %v1517 = vpack.c.b16 %v1049, %v1045
    %v1518 = vpack.c.b16 %v1050, %v1046
    %v1519 = vpack.c.b16 %v1055, %v1051
    %v1520 = vpack.c.b16 %v1056, %v1052
    %v1521 = vpack.c.b16 %v1057, %v1053
    %v1522 = vpack.c.b16 %v1058, %v1054
    %v1523 = vpack.c.b16 %v1063, %v1059
    %v1524 = vpack.c.b16 %v1064, %v1060
    %v1525 = vpack.c.b16 %v1065, %v1061
    %v1526 = vpack.c.b16 %v1066, %v1062
    %v1527 = vpack.c.b16 %v1071, %v1067
    %v1528 = vpack.c.b16 %v1072, %v1068
    %v1529 = vpack.c.b16 %v1073, %v1069
    %v1530 = vpack.c.b16 %v1074, %v1070
    %v1531 = vpack.c.b16 %v1079, %v1075
    %v1532 = vpack.c.b16 %v1080, %v1076
    %v1533 = vpack.c.b16 %v1081, %v1077
    %v1534 = vpack.c.b16 %v1082, %v1078
    %v1535 = vpack.c.b16 %v1087, %v1083
    %v1536 = vpack.c.b16 %v1088, %v1084
    %v1537 = vpack.c.b16 %v1089, %v1085
    %v1538 = vpack.c.b16 %v1090, %v1086
    %v1539 = vpack.c.b16 %v1095, %v1091
    %v1540 = vpack.c.b16 %v1096, %v1092
    %v1541 = vpack.c.b16 %v1097, %v1093
    %v1542 = vpack.c.b16 %v1098, %v1094
    %v1543 = vpack.c.b16 %v1103, %v1099
    %v1544 = vpack.c.b16 %v1104, %v1100
    %v1545 = vpack.c.b16 %v1105, %v1101
    %v1546 = vpack.c.b16 %v1106, %v1102
    %v1547 = vpack.c.b16 %v1111, %v1107
    %v1548 = vpack.c.b16 %v1112, %v1108
    %v1549 = vpack.c.b16 %v1113, %v1109
    %v1550 = vpack.c.b16 %v1114, %v1110
    %v1551 = vpack.c.b16 %v1119, %v1115
    %v1552 = vpack.c.b16 %v1120, %v1116
    %v1553 = vpack.c.b16 %v1121, %v1117
    %v1554 = vpack.c.b16 %v1122, %v1118
    %v1555 = vpack.c.b16 %v1127, %v1123
    %v1556 = vpack.c.b16 %v1128, %v1124
    %v1557 = vpack.c.b16 %v1129, %v1125
    %v1558 = vpack.c.b16 %v1130, %v1126
    %v1559 = vpack.c.b16 %v1135, %v1131
    %v1560 = vpack.c.b16 %v1136, %v1132
    %v1561 = vpack.c.b16 %v1137, %v1133
    %v1562 = vpack.c.b16 %v1138, %v1134
    %v1563 = vpack.c.b16 %v1143, %v1139
    %v1564 = vpack.c.b16 %v1144, %v1140
    %v1565 = vpack.c.b16 %v1145, %v1141
    %v1566 = vpack.c.b16 %v1146, %v1142
    %v1567 = vpack.c.b16 %v1151, %v1147
    %v1568 = vpack.c.b16 %v1152, %v1148
    %v1569 = vpack.c.b16 %v1153, %v1149
    %v1570 = vpack.c.b16 %v1154, %v1150
    %v1571 = vpack.c.b16 %v1159, %v1155
    %v1572 = vpack.c.b16 %v1160, %v1156
    %v1573 = vpack.c.b16 %v1161, %v1157
    %v1574 = vpack.c.b16 %v1162, %v1158
    %v1575 = vpack.c.b16 %v1167, %v1163
    %v1576 = vpack.c.b16 %v1168, %v1164
    %v1577 = vpack.c.b16 %v1169, %v1165
    %v1578 = vpack.c.b16 %v1170, %v1166
    %v1579 = vpack.c.b16 %v1175, %v1171
    %v1580 = vpack.c.b16 %v1176, %v1172
    %v1581 = vpack.c.b16 %v1177, %v1173
    %v1582 = vpack.c.b16 %v1178, %v1174
    %v1583 = vpack.c.b16 %v1183, %v1179
    %v1584 = vpack.c.b16 %v1184, %v1180
    %v1585 = vpack.c.b16 %v1185, %v1181
    %v1586 = vpack.c.b16 %v1186, %v1182
    %v1587 = vpack.c.b16 %v1191, %v1187
    %v1588 = vpack.c.b16 %v1192, %v1188
    %v1589 = vpack.c.b16 %v1193, %v1189
    %v1590 = vpack.c.b16 %v1194, %v1190
    %v1591 = vpack.c.b16 %v1199, %v1195
    %v1592 = vpack.c.b16 %v1200, %v1196
    %v1593 = vpack.c.b16 %v1201, %v1197
    %v1594 = vpack.c.b16 %v1202, %v1198
    %v1595 = vpack.c.b16 %v1207, %v1203
    %v1596 = vpack.c.b16 %v1208, %v1204
    %v1597 = vpack.c.b16 %v1209, %v1205
    %v1598 = vpack.c.b16 %v1210, %v1206
    %v1599 = vpack.c.b16 %v1215, %v1211
    %v1600 = vpack.c.b16 %v1216, %v1212
    %v1601 = vpack.c.b16 %v1217, %v1213
    %v1602 = vpack.c.b16 %v1218, %v1214
    %v1603 = vpack.c.b16 %v1223, %v1219
    %v1604 = vpack.c.b16 %v1224, %v1220
    %v1605 = vpack.c.b16 %v1225, %v1221
    %v1606 = vpack.c.b16 %v1226, %v1222
    %v1607 = vpack.c.b16 %v1231, %v1227
    %v1608 = vpack.c.b16 %v1232, %v1228
    %v1609 = vpack.c.b16 %v1233, %v1229
    %v1610 = vpack.c.b16 %v1234, %v1230
    %v1611 = vpack.c.b16 %v1239, %v1235
    %v1612 = vpack.c.b16 %v1240, %v1236
    %v1613 = vpack.c.b16 %v1241, %v1237
    %v1614 = vpack.c.b16 %v1242, %v1238
    %v1615 = vpack.c.b16 %v1247, %v1243
    %v1616 = vpack.c.b16 %v1248, %v1244
    %v1617 = vpack.c.b16 %v1249, %v1245
    %v1618 = vpack.c.b16 %v1250, %v1246
    %v1619 = vpack.c.b16 %v1255, %v1251
    %v1620 = vpack.c.b16 %v1256, %v1252
    %v1621 = vpack.c.b16 %v1257, %v1253
    %v1622 = vpack.c.b16 %v1258, %v1254
    %v1623 = vpack.c.b16 %v1263, %v1259
    %v1624 = vpack.c.b16 %v1264, %v1260
    %v1625 = vpack.c.b16 %v1265, %v1261
    %v1626 = vpack.c.b16 %v1266, %v1262
    %v1627 = vpack.c.b16 %v1271, %v1267
    %v1628 = vpack.c.b16 %v1272, %v1268
    %v1629 = vpack.c.b16 %v1273, %v1269
    %v1630 = vpack.c.b16 %v1274, %v1270
    %v1631 = vpack.c.b16 %v1279, %v1275
    %v1632 = vpack.c.b16 %v1280, %v1276
    %v1633 = vpack.c.b16 %v1281, %v1277
    %v1634 = vpack.c.b16 %v1282, %v1278
    %v1635 = vpack.c.b16 %v1287, %v1283
    %v1636 = vpack.c.b16 %v1288, %v1284
    %v1637 = vpack.c.b16 %v1289, %v1285
    %v1638 = vpack.c.b16 %v1290, %v1286
    %v1639 = vpack.c.b16 %v1295, %v1291
    %v1640 = vpack.c.b16 %v1296, %v1292
    %v1641 = vpack.c.b16 %v1297, %v1293
    %v1642 = vpack.c.b16 %v1298, %v1294
    %v1643 = vpack.c.b16 %v1303, %v1299
    %v1644 = vpack.c.b16 %v1304, %v1300
    %v1645 = vpack.c.b16 %v1305, %v1301
    %v1646 = vpack.c.b16 %v1306, %v1302
    %v1647 = vpack.c.b16 %v1311, %v1307
    %v1648 = vpack.c.b16 %v1312, %v1308
    %v1649 = vpack.c.b16 %v1313, %v1309
    %v1650 = vpack.c.b16 %v1314, %v1310
    %v1651 = vpack.c.b16 %v1319, %v1315
    %v1652 = vpack.c.b16 %v1320, %v1316
    %v1653 = vpack.c.b16 %v1321, %v1317
    %v1654 = vpack.c.b16 %v1322, %v1318
    %v1655 = vpack.c.b16 %v1327, %v1323
    %v1656 = vpack.c.b16 %v1328, %v1324
    %v1657 = vpack.c.b16 %v1329, %v1325
    %v1658 = vpack.c.b16 %v1330, %v1326
    %v1659 = vpack.c.b16 %v1335, %v1331
    %v1660 = vpack.c.b16 %v1336, %v1332
    %v1661 = vpack.c.b16 %v1337, %v1333
    %v1662 = vpack.c.b16 %v1338, %v1334
    %v1663 = vpack.c.b16 %v1343, %v1339
    %v1664 = vpack.c.b16 %v1344, %v1340
    %v1665 = vpack.c.b16 %v1345, %v1341
    %v1666 = vpack.c.b16 %v1346, %v1342
    %v1667 = vpack.c.b16 %v1351, %v1347
    %v1668 = vpack.c.b16 %v1352, %v1348
    %v1669 = vpack.c.b16 %v1353, %v1349
    %v1670 = vpack.c.b16 %v1354, %v1350
    %v1671 = vpack.c.b16 %v1359, %v1355
    %v1672 = vpack.c.b16 %v1360, %v1356
    %v1673 = vpack.c.b16 %v1361, %v1357
    %v1674 = vpack.c.b16 %v1362, %v1358
    %v1675 = vpack.c.b16 %v1367, %v1363
    %v1676 = vpack.c.b16 %v1368, %v1364
    %v1677 = vpack.c.b16 %v1369, %v1365
    %v1678 = vpack.c.b16 %v1370, %v1366
    %v1679 = vpack.c.b16 %v1375, %v1371
    %v1680 = vpack.c.b16 %v1376, %v1372
    %v1681 = vpack.c.b16 %v1377, %v1373
    %v1682 = vpack.c.b16 %v1378, %v1374
    %v1683 = vpack.c.b16 %v1383, %v1379
    %v1684 = vpack.c.b16 %v1384, %v1380
    %v1685 = vpack.c.b16 %v1385, %v1381
    %v1686 = vpack.c.b16 %v1386, %v1382
    %v1687 = vpack.c.b16 %v1391, %v1387
    %v1688 = vpack.c.b16 %v1392, %v1388
    %v1689 = vpack.c.b16 %v1393, %v1389
    %v1690 = vpack.c.b16 %v1394, %v1390
    %v1691 = vpack.c.b16 %v1399, %v1395
    %v1692 = vpack.c.b16 %v1400, %v1396
    %v1693 = vpack.c.b16 %v1401, %v1397
    %v1694 = vpack.c.b16 %v1402, %v1398
    %v1695 = vpack.c.b16 %v1407, %v1403
    %v1696 = vpack.c.b16 %v1408, %v1404
    %v1697 = vpack.c.b16 %v1409, %v1405
    %v1698 = vpack.c.b16 %v1410, %v1406
    %1987 = vmatprep.subr.bf16.mxu0 %v1440
    %1988 = vmatpush1.bf16.msra.mxu0 %v1439
    %1989 = vmatprep.subr.bf16.mxu0 %v1436
    %1990 = vmatpush1.bf16.msra.mxu0 %v1435
    %1991 = vmatprep.subr.bf16.mxu0 %v1432
    %1992 = vmatpush1.bf16.msra.mxu0 %v1431
    %1993 = vmatprep.subr.bf16.mxu0 %v1428
    %1994 = vmatpush1.bf16.msra.mxu0 %v1427
    %1995 = vmatprep.subr.bf16.mxu0 %v1424
    %1996 = vmatpush1.bf16.msra.mxu0 %v1423
    %1997 = vmatprep.subr.bf16.mxu0 %v1420
    %1998 = vmatpush1.bf16.msra.mxu0 %v1419
    %1999 = vmatprep.subr.bf16.mxu0 %v1416
    %2000 = vmatpush1.bf16.msra.mxu0 %v1415
    %2001 = vmatprep.subr.bf16.mxu0 %v1412
    %2002 = vmatpush1.bf16.msra.mxu0 %v1411
    %2003 = vmatprep.subr.bf16.mxu0 %v1472
    %2004 = vmatpush2.bf16.msra.mxu0 %v1471
    %2005 = vmatprep.subr.bf16.mxu0 %v1468
    %2006 = vmatpush2.bf16.msra.mxu0 %v1467
    %2007 = vmatprep.subr.bf16.mxu0 %v1464
    %2008 = vmatpush2.bf16.msra.mxu0 %v1463
    %2009 = vmatprep.subr.bf16.mxu0 %v1460
    %2010 = vmatpush2.bf16.msra.mxu0 %v1459
    %2011 = vmatprep.subr.bf16.mxu0 %v1456
    %2012 = vmatpush2.bf16.msra.mxu0 %v1455
    %2013 = vmatprep.subr.bf16.mxu0 %v1452
    %2014 = vmatpush2.bf16.msra.mxu0 %v1451
    %2015 = vmatprep.subr.bf16.mxu0 %v1448
    %2016 = vmatpush2.bf16.msra.mxu0 %v1447
    %2017 = vmatprep.subr.bf16.mxu0 %v1444
    %2018 = vmatpush2.bf16.msra.mxu0 %v1443
    %2019 = vmatprep.mubr.bf16.mxu0 %v530
    %2020 = vmatmul.mubr.bf16.gmra.mxu0 %v529
    %v2021 = vpop.f32.mrf.mxu0
    %v2022 = vadd.f32 %v498, %v2021
    %v2023 = vpop.f32.mrf.mxu0
    %v2024 = vadd.f32 %v502, %v2023
    %v2025 = vpop.f32.mrf.mxu0
    %v2026 = vpop.f32.mrf.mxu0
    %2027 = vdwg.mxu0
    %2028 = vmatprep.subr.bf16.mxu0 %v1504
    %2029 = vmatpush1.bf16.msra.mxu0 %v1503
    %2030 = vmatprep.subr.bf16.mxu0 %v1500
    %2031 = vmatpush1.bf16.msra.mxu0 %v1499
    %2032 = vmatprep.subr.bf16.mxu0 %v1496
    %2033 = vmatpush1.bf16.msra.mxu0 %v1495
    %2034 = vmatprep.subr.bf16.mxu0 %v1492
    %2035 = vmatpush1.bf16.msra.mxu0 %v1491
    %2036 = vmatprep.subr.bf16.mxu0 %v1488
    %2037 = vmatpush1.bf16.msra.mxu0 %v1487
    %2038 = vmatprep.subr.bf16.mxu0 %v1484
    %2039 = vmatpush1.bf16.msra.mxu0 %v1483
    %2040 = vmatprep.subr.bf16.mxu0 %v1480
    %2041 = vmatpush1.bf16.msra.mxu0 %v1479
    %2042 = vmatprep.subr.bf16.mxu0 %v1476
    %2043 = vmatpush1.bf16.msra.mxu0 %v1475
    %2044 = vmatprep.subr.bf16.mxu0 %v1536
    %2045 = vmatpush2.bf16.msra.mxu0 %v1535
    %2046 = vmatprep.subr.bf16.mxu0 %v1532
    %2047 = vmatpush2.bf16.msra.mxu0 %v1531
    %2048 = vmatprep.subr.bf16.mxu0 %v1528
    %2049 = vmatpush2.bf16.msra.mxu0 %v1527
    %2050 = vmatprep.subr.bf16.mxu0 %v1524
    %2051 = vmatpush2.bf16.msra.mxu0 %v1523
    %2052 = vmatprep.subr.bf16.mxu0 %v1520
    %2053 = vmatpush2.bf16.msra.mxu0 %v1519
    %2054 = vmatprep.subr.bf16.mxu0 %v1516
    %2055 = vmatpush2.bf16.msra.mxu0 %v1515
    %2056 = vmatprep.subr.bf16.mxu0 %v1512
    %2057 = vmatpush2.bf16.msra.mxu0 %v1511
    %2058 = vmatprep.subr.bf16.mxu0 %v1508
    %2059 = vmatpush2.bf16.msra.mxu0 %v1507
    %2060 = vmatprep.mubr.bf16.mxu0 %v532
    %2061 = vmatmul.mubr.bf16.gmra.mxu0 %v531
    %v2062 = vpop.f32.mrf.mxu0
    %v2063 = vadd.f32 %v2022, %v2062
    %v2064 = vpop.f32.mrf.mxu0
    %v2065 = vadd.f32 %v2024, %v2064
    %v2066 = vpop.f32.mrf.mxu0
    %v2067 = vpop.f32.mrf.mxu0
    %2068 = vdwg.mxu0
    %2069 = vmatprep.subr.bf16.mxu0 %v1568
    %2070 = vmatpush1.bf16.msra.mxu0 %v1567
    %2071 = vmatprep.subr.bf16.mxu0 %v1564
    %2072 = vmatpush1.bf16.msra.mxu0 %v1563
    %2073 = vmatprep.subr.bf16.mxu0 %v1560
    %2074 = vmatpush1.bf16.msra.mxu0 %v1559
    %2075 = vmatprep.subr.bf16.mxu0 %v1556
    %2076 = vmatpush1.bf16.msra.mxu0 %v1555
    %2077 = vmatprep.subr.bf16.mxu0 %v1552
    %2078 = vmatpush1.bf16.msra.mxu0 %v1551
    %2079 = vmatprep.subr.bf16.mxu0 %v1548
    %2080 = vmatpush1.bf16.msra.mxu0 %v1547
    %2081 = vmatprep.subr.bf16.mxu0 %v1544
    %2082 = vmatpush1.bf16.msra.mxu0 %v1543
    %2083 = vmatprep.subr.bf16.mxu0 %v1540
    %2084 = vmatpush1.bf16.msra.mxu0 %v1539
    %2085 = vmatprep.subr.bf16.mxu0 %v1600
    %2086 = vmatpush2.bf16.msra.mxu0 %v1599
    %2087 = vmatprep.subr.bf16.mxu0 %v1596
    %2088 = vmatpush2.bf16.msra.mxu0 %v1595
    %2089 = vmatprep.subr.bf16.mxu0 %v1592
    %2090 = vmatpush2.bf16.msra.mxu0 %v1591
    %2091 = vmatprep.subr.bf16.mxu0 %v1588
    %2092 = vmatpush2.bf16.msra.mxu0 %v1587
    %2093 = vmatprep.subr.bf16.mxu0 %v1584
    %2094 = vmatpush2.bf16.msra.mxu0 %v1583
    %2095 = vmatprep.subr.bf16.mxu0 %v1580
    %2096 = vmatpush2.bf16.msra.mxu0 %v1579
    %2097 = vmatprep.subr.bf16.mxu0 %v1576
    %2098 = vmatpush2.bf16.msra.mxu0 %v1575
    %2099 = vmatprep.subr.bf16.mxu0 %v1572
    %2100 = vmatpush2.bf16.msra.mxu0 %v1571
    %2101 = vmatprep.mubr.bf16.mxu0 %v534
    %2102 = vmatmul.mubr.bf16.gmra.mxu0 %v533
    %v2103 = vpop.f32.mrf.mxu0
    %v2104 = vadd.f32 %v2063, %v2103
    %v2105 = vpop.f32.mrf.mxu0
    %v2106 = vadd.f32 %v2065, %v2105
    %v2107 = vpop.f32.mrf.mxu0
    %v2108 = vpop.f32.mrf.mxu0
    %2109 = vdwg.mxu0
    %2110 = vmatprep.subr.bf16.mxu0 %v1632
    %2111 = vmatpush1.bf16.msra.mxu0 %v1631
    %2112 = vmatprep.subr.bf16.mxu0 %v1628
    %2113 = vmatpush1.bf16.msra.mxu0 %v1627
    %2114 = vmatprep.subr.bf16.mxu0 %v1624
    %2115 = vmatpush1.bf16.msra.mxu0 %v1623
    %2116 = vmatprep.subr.bf16.mxu0 %v1620
    %2117 = vmatpush1.bf16.msra.mxu0 %v1619
    %2118 = vmatprep.subr.bf16.mxu0 %v1616
    %2119 = vmatpush1.bf16.msra.mxu0 %v1615
    %2120 = vmatprep.subr.bf16.mxu0 %v1612
    %2121 = vmatpush1.bf16.msra.mxu0 %v1611
    %2122 = vmatprep.subr.bf16.mxu0 %v1608
    %2123 = vmatpush1.bf16.msra.mxu0 %v1607
    %2124 = vmatprep.subr.bf16.mxu0 %v1604
    %2125 = vmatpush1.bf16.msra.mxu0 %v1603
    %2126 = vmatprep.subr.bf16.mxu0 %v1664
    %2127 = vmatpush2.bf16.msra.mxu0 %v1663
    %2128 = vmatprep.subr.bf16.mxu0 %v1660
    %2129 = vmatpush2.bf16.msra.mxu0 %v1659
    %2130 = vmatprep.subr.bf16.mxu0 %v1656
    %2131 = vmatpush2.bf16.msra.mxu0 %v1655
    %2132 = vmatprep.subr.bf16.mxu0 %v1652
    %2133 = vmatpush2.bf16.msra.mxu0 %v1651
    %2134 = vmatprep.subr.bf16.mxu0 %v1648
    %2135 = vmatpush2.bf16.msra.mxu0 %v1647
    %2136 = vmatprep.subr.bf16.mxu0 %v1644
    %2137 = vmatpush2.bf16.msra.mxu0 %v1643
    %2138 = vmatprep.subr.bf16.mxu0 %v1640
    %2139 = vmatpush2.bf16.msra.mxu0 %v1639
    %2140 = vmatprep.subr.bf16.mxu0 %v1636
    %2141 = vmatpush2.bf16.msra.mxu0 %v1635
    %2142 = vmatprep.mubr.bf16.mxu0 %v536
    %2143 = vmatmul.mubr.bf16.gmra.mxu0 %v535
    %v2144 = vpop.f32.mrf.mxu0
    %v2145 = vadd.f32 %v2104, %v2144
    %v2146 = vpop.f32.mrf.mxu0
    %v2147 = vadd.f32 %v2106, %v2146
    %v2148 = vpop.f32.mrf.mxu0
    %v2149 = vpop.f32.mrf.mxu0
    %2150 = vdwg.mxu0
    %2151 = vmatprep.subr.bf16.mxu0 %v1696
    %2152 = vmatpush1.bf16.msra.mxu0 %v1695
    %2153 = vmatprep.subr.bf16.mxu0 %v1692
    %2154 = vmatpush1.bf16.msra.mxu0 %v1691
    %2155 = vmatprep.subr.bf16.mxu0 %v1688
    %2156 = vmatpush1.bf16.msra.mxu0 %v1687
    %2157 = vmatprep.subr.bf16.mxu0 %v1684
    %2158 = vmatpush1.bf16.msra.mxu0 %v1683
    %2159 = vmatprep.subr.bf16.mxu0 %v1680
    %2160 = vmatpush1.bf16.msra.mxu0 %v1679
    %2161 = vmatprep.subr.bf16.mxu0 %v1676
    %2162 = vmatpush1.bf16.msra.mxu0 %v1675
    %2163 = vmatprep.subr.bf16.mxu0 %v1672
    %2164 = vmatpush1.bf16.msra.mxu0 %v1671
    %2165 = vmatprep.subr.bf16.mxu0 %v1668
    %2166 = vmatpush1.bf16.msra.mxu0 %v1667
    %2167 = vmatprep.subr.bf16.mxu0 0
    %2168 = vmatpush2.bf16.msra.mxu0 0
    %2169 = vmatprep.subr.bf16.mxu0 0
    %2170 = vmatpush2.bf16.msra.mxu0 0
    %2171 = vmatprep.subr.bf16.mxu0 0
    %2172 = vmatpush2.bf16.msra.mxu0 0
    %2173 = vmatprep.subr.bf16.mxu0 0
    %2174 = vmatpush2.bf16.msra.mxu0 0
    %2175 = vmatprep.subr.bf16.mxu0 0
    %2176 = vmatpush2.bf16.msra.mxu0 0
    %2177 = vmatprep.subr.bf16.mxu0 0
    %2178 = vmatpush2.bf16.msra.mxu0 0
    %2179 = vmatprep.subr.bf16.mxu0 0
    %2180 = vmatpush2.bf16.msra.mxu0 0
    %2181 = vmatprep.subr.bf16.mxu0 0
    %2182 = vmatpush2.bf16.msra.mxu0 0
    %2183 = vmatprep.mubr.bf16.mxu0 0
    %2184 = vmatmul.mubr.bf16.gmra.mxu0 %v537
    %v2185 = vpop.f32.mrf.mxu0
    %v2186 = vadd.f32 %v2145, %v2185
    %v2187 = vpop.f32.mrf.mxu0
    %v2188 = vadd.f32 %v2147, %v2187
    %v2189 = vpop.f32.mrf.mxu0
    %v2190 = vpop.f32.mrf.mxu0
    %2191 = vdwg.mxu0
    %2192 = vmatprep.subr.bf16.mxu0 %v1442
    %2193 = vmatpush1.bf16.msra.mxu0 %v1441
    %2194 = vmatprep.subr.bf16.mxu0 %v1438
    %2195 = vmatpush1.bf16.msra.mxu0 %v1437
    %2196 = vmatprep.subr.bf16.mxu0 %v1434
    %2197 = vmatpush1.bf16.msra.mxu0 %v1433
    %2198 = vmatprep.subr.bf16.mxu0 %v1430
    %2199 = vmatpush1.bf16.msra.mxu0 %v1429
    %2200 = vmatprep.subr.bf16.mxu0 %v1426
    %2201 = vmatpush1.bf16.msra.mxu0 %v1425
    %2202 = vmatprep.subr.bf16.mxu0 %v1422
    %2203 = vmatpush1.bf16.msra.mxu0 %v1421
    %2204 = vmatprep.subr.bf16.mxu0 %v1418
    %2205 = vmatpush1.bf16.msra.mxu0 %v1417
    %2206 = vmatprep.subr.bf16.mxu0 %v1414
    %2207 = vmatpush1.bf16.msra.mxu0 %v1413
    %2208 = vmatprep.subr.bf16.mxu0 %v1474
    %2209 = vmatpush2.bf16.msra.mxu0 %v1473
    %2210 = vmatprep.subr.bf16.mxu0 %v1470
    %2211 = vmatpush2.bf16.msra.mxu0 %v1469
    %2212 = vmatprep.subr.bf16.mxu0 %v1466
    %2213 = vmatpush2.bf16.msra.mxu0 %v1465
    %2214 = vmatprep.subr.bf16.mxu0 %v1462
    %2215 = vmatpush2.bf16.msra.mxu0 %v1461
    %2216 = vmatprep.subr.bf16.mxu0 %v1458
    %2217 = vmatpush2.bf16.msra.mxu0 %v1457
    %2218 = vmatprep.subr.bf16.mxu0 %v1454
    %2219 = vmatpush2.bf16.msra.mxu0 %v1453
    %2220 = vmatprep.subr.bf16.mxu0 %v1450
    %2221 = vmatpush2.bf16.msra.mxu0 %v1449
    %2222 = vmatprep.subr.bf16.mxu0 %v1446
    %2223 = vmatpush2.bf16.msra.mxu0 %v1445
    %2224 = vmatprep.mubr.bf16.mxu0 %v530
    %2225 = vmatmul.mubr.bf16.gmra.mxu0 %v529
    %v2226 = vpop.f32.mrf.mxu0
    %v2227 = vadd.f32 %v506, %v2226
    %v2228 = vpop.f32.mrf.mxu0
    %v2229 = vadd.f32 %v510, %v2228
    %v2230 = vpop.f32.mrf.mxu0
    %v2231 = vpop.f32.mrf.mxu0
    %2232 = vdwg.mxu0
    %2233 = vmatprep.subr.bf16.mxu0 %v1506
    %2234 = vmatpush1.bf16.msra.mxu0 %v1505
    %2235 = vmatprep.subr.bf16.mxu0 %v1502
    %2236 = vmatpush1.bf16.msra.mxu0 %v1501
    %2237 = vmatprep.subr.bf16.mxu0 %v1498
    %2238 = vmatpush1.bf16.msra.mxu0 %v1497
    %2239 = vmatprep.subr.bf16.mxu0 %v1494
    %2240 = vmatpush1.bf16.msra.mxu0 %v1493
    %2241 = vmatprep.subr.bf16.mxu0 %v1490
    %2242 = vmatpush1.bf16.msra.mxu0 %v1489
    %2243 = vmatprep.subr.bf16.mxu0 %v1486
    %2244 = vmatpush1.bf16.msra.mxu0 %v1485
    %2245 = vmatprep.subr.bf16.mxu0 %v1482
    %2246 = vmatpush1.bf16.msra.mxu0 %v1481
    %2247 = vmatprep.subr.bf16.mxu0 %v1478
    %2248 = vmatpush1.bf16.msra.mxu0 %v1477
    %2249 = vmatprep.subr.bf16.mxu0 %v1538
    %2250 = vmatpush2.bf16.msra.mxu0 %v1537
    %2251 = vmatprep.subr.bf16.mxu0 %v1534
    %2252 = vmatpush2.bf16.msra.mxu0 %v1533
    %2253 = vmatprep.subr.bf16.mxu0 %v1530
    %2254 = vmatpush2.bf16.msra.mxu0 %v1529
    %2255 = vmatprep.subr.bf16.mxu0 %v1526
    %2256 = vmatpush2.bf16.msra.mxu0 %v1525
    %2257 = vmatprep.subr.bf16.mxu0 %v1522
    %2258 = vmatpush2.bf16.msra.mxu0 %v1521
    %2259 = vmatprep.subr.bf16.mxu0 %v1518
    %2260 = vmatpush2.bf16.msra.mxu0 %v1517
    %2261 = vmatprep.subr.bf16.mxu0 %v1514
    %2262 = vmatpush2.bf16.msra.mxu0 %v1513
    %2263 = vmatprep.subr.bf16.mxu0 %v1510
    %2264 = vmatpush2.bf16.msra.mxu0 %v1509
    %2265 = vmatprep.mubr.bf16.mxu0 %v532
    %2266 = vmatmul.mubr.bf16.gmra.mxu0 %v531
    %v2267 = vpop.f32.mrf.mxu0
    %v2268 = vadd.f32 %v2227, %v2267
    %v2269 = vpop.f32.mrf.mxu0
    %v2270 = vadd.f32 %v2229, %v2269
    %v2271 = vpop.f32.mrf.mxu0
    %v2272 = vpop.f32.mrf.mxu0
    %2273 = vdwg.mxu0
    %2274 = vmatprep.subr.bf16.mxu0 %v1570
    %2275 = vmatpush1.bf16.msra.mxu0 %v1569
    %2276 = vmatprep.subr.bf16.mxu0 %v1566
    %2277 = vmatpush1.bf16.msra.mxu0 %v1565
    %2278 = vmatprep.subr.bf16.mxu0 %v1562
    %2279 = vmatpush1.bf16.msra.mxu0 %v1561
    %2280 = vmatprep.subr.bf16.mxu0 %v1558
    %2281 = vmatpush1.bf16.msra.mxu0 %v1557
    %2282 = vmatprep.subr.bf16.mxu0 %v1554
    %2283 = vmatpush1.bf16.msra.mxu0 %v1553
    %2284 = vmatprep.subr.bf16.mxu0 %v1550
    %2285 = vmatpush1.bf16.msra.mxu0 %v1549
    %2286 = vmatprep.subr.bf16.mxu0 %v1546
    %2287 = vmatpush1.bf16.msra.mxu0 %v1545
    %2288 = vmatprep.subr.bf16.mxu0 %v1542
    %2289 = vmatpush1.bf16.msra.mxu0 %v1541
    %2290 = vmatprep.subr.bf16.mxu0 %v1602
    %2291 = vmatpush2.bf16.msra.mxu0 %v1601
    %2292 = vmatprep.subr.bf16.mxu0 %v1598
    %2293 = vmatpush2.bf16.msra.mxu0 %v1597
    %2294 = vmatprep.subr.bf16.mxu0 %v1594
    %2295 = vmatpush2.bf16.msra.mxu0 %v1593
    %2296 = vmatprep.subr.bf16.mxu0 %v1590
    %2297 = vmatpush2.bf16.msra.mxu0 %v1589
    %2298 = vmatprep.subr.bf16.mxu0 %v1586
    %2299 = vmatpush2.bf16.msra.mxu0 %v1585
    %2300 = vmatprep.subr.bf16.mxu0 %v1582
    %2301 = vmatpush2.bf16.msra.mxu0 %v1581
    %2302 = vmatprep.subr.bf16.mxu0 %v1578
    %2303 = vmatpush2.bf16.msra.mxu0 %v1577
    %2304 = vmatprep.subr.bf16.mxu0 %v1574
    %2305 = vmatpush2.bf16.msra.mxu0 %v1573
    %2306 = vmatprep.mubr.bf16.mxu0 %v534
    %2307 = vmatmul.mubr.bf16.gmra.mxu0 %v533
    %v2308 = vpop.f32.mrf.mxu0
    %v2309 = vadd.f32 %v2268, %v2308
    %v2310 = vpop.f32.mrf.mxu0
    %v2311 = vadd.f32 %v2270, %v2310
    %v2312 = vpop.f32.mrf.mxu0
    %v2313 = vpop.f32.mrf.mxu0
    %2314 = vdwg.mxu0
    %2315 = vmatprep.subr.bf16.mxu0 %v1634
    %2316 = vmatpush1.bf16.msra.mxu0 %v1633
    %2317 = vmatprep.subr.bf16.mxu0 %v1630
    %2318 = vmatpush1.bf16.msra.mxu0 %v1629
    %2319 = vmatprep.subr.bf16.mxu0 %v1626
    %2320 = vmatpush1.bf16.msra.mxu0 %v1625
    %2321 = vmatprep.subr.bf16.mxu0 %v1622
    %2322 = vmatpush1.bf16.msra.mxu0 %v1621
    %2323 = vmatprep.subr.bf16.mxu0 %v1618
    %2324 = vmatpush1.bf16.msra.mxu0 %v1617
    %2325 = vmatprep.subr.bf16.mxu0 %v1614
    %2326 = vmatpush1.bf16.msra.mxu0 %v1613
    %2327 = vmatprep.subr.bf16.mxu0 %v1610
    %2328 = vmatpush1.bf16.msra.mxu0 %v1609
    %2329 = vmatprep.subr.bf16.mxu0 %v1606
    %2330 = vmatpush1.bf16.msra.mxu0 %v1605
    %2331 = vmatprep.subr.bf16.mxu0 %v1666
    %2332 = vmatpush2.bf16.msra.mxu0 %v1665
    %2333 = vmatprep.subr.bf16.mxu0 %v1662
    %2334 = vmatpush2.bf16.msra.mxu0 %v1661
    %2335 = vmatprep.subr.bf16.mxu0 %v1658
    %2336 = vmatpush2.bf16.msra.mxu0 %v1657
    %2337 = vmatprep.subr.bf16.mxu0 %v1654
    %2338 = vmatpush2.bf16.msra.mxu0 %v1653
    %2339 = vmatprep.subr.bf16.mxu0 %v1650
    %2340 = vmatpush2.bf16.msra.mxu0 %v1649
    %2341 = vmatprep.subr.bf16.mxu0 %v1646
    %2342 = vmatpush2.bf16.msra.mxu0 %v1645
    %2343 = vmatprep.subr.bf16.mxu0 %v1642
    %2344 = vmatpush2.bf16.msra.mxu0 %v1641
    %2345 = vmatprep.subr.bf16.mxu0 %v1638
    %2346 = vmatpush2.bf16.msra.mxu0 %v1637
    %2347 = vmatprep.mubr.bf16.mxu0 %v536
    %2348 = vmatmul.mubr.bf16.gmra.mxu0 %v535
    %v2349 = vpop.f32.mrf.mxu0
    %v2350 = vadd.f32 %v2309, %v2349
    %v2351 = vpop.f32.mrf.mxu0
    %v2352 = vadd.f32 %v2311, %v2351
    %v2353 = vpop.f32.mrf.mxu0
    %v2354 = vpop.f32.mrf.mxu0
    %2355 = vdwg.mxu0
    %2356 = vmatprep.subr.bf16.mxu0 %v1698
    %2357 = vmatpush1.bf16.msra.mxu0 %v1697
    %2358 = vmatprep.subr.bf16.mxu0 %v1694
    %2359 = vmatpush1.bf16.msra.mxu0 %v1693
    %2360 = vmatprep.subr.bf16.mxu0 %v1690
    %2361 = vmatpush1.bf16.msra.mxu0 %v1689
    %2362 = vmatprep.subr.bf16.mxu0 %v1686
    %2363 = vmatpush1.bf16.msra.mxu0 %v1685
    %2364 = vmatprep.subr.bf16.mxu0 %v1682
    %2365 = vmatpush1.bf16.msra.mxu0 %v1681
    %2366 = vmatprep.subr.bf16.mxu0 %v1678
    %2367 = vmatpush1.bf16.msra.mxu0 %v1677
    %2368 = vmatprep.subr.bf16.mxu0 %v1674
    %2369 = vmatpush1.bf16.msra.mxu0 %v1673
    %2370 = vmatprep.subr.bf16.mxu0 %v1670
    %2371 = vmatpush1.bf16.msra.mxu0 %v1669
    %2372 = vmatprep.subr.bf16.mxu0 0
    %2373 = vmatpush2.bf16.msra.mxu0 0
    %2374 = vmatprep.subr.bf16.mxu0 0
    %2375 = vmatpush2.bf16.msra.mxu0 0
    %2376 = vmatprep.subr.bf16.mxu0 0
    %2377 = vmatpush2.bf16.msra.mxu0 0
    %2378 = vmatprep.subr.bf16.mxu0 0
    %2379 = vmatpush2.bf16.msra.mxu0 0
    %2380 = vmatprep.subr.bf16.mxu0 0
    %2381 = vmatpush2.bf16.msra.mxu0 0
    %2382 = vmatprep.subr.bf16.mxu0 0
    %2383 = vmatpush2.bf16.msra.mxu0 0
    %2384 = vmatprep.subr.bf16.mxu0 0
    %2385 = vmatpush2.bf16.msra.mxu0 0
    %2386 = vmatprep.subr.bf16.mxu0 0
    %2387 = vmatpush2.bf16.msra.mxu0 0
    %2388 = vmatprep.mubr.bf16.mxu0 0
    %2389 = vmatmul.mubr.bf16.gmra.mxu0 %v537
    %v2390 = vpop.f32.mrf.mxu0
    %v2391 = vadd.f32 %v2350, %v2390
    %v2392 = vpop.f32.mrf.mxu0
    %v2393 = vadd.f32 %v2352, %v2392
    %v2394 = vpop.f32.mrf.mxu0
    %v2395 = vpop.f32.mrf.mxu0
    %2396 = vdwg.mxu0
    %v2397 = vmax.f32 %v2186, 0.0
    %v2398 = vmax.f32 %v2188, 0.0
    %v2399 = vmax.f32 %v2391, 0.0
    %v2400 = vmax.f32 %v2393, 0.0
    %v2401 = vpack.c.bf16 %v2397, %v2397
    %v2402 = vpack.c.bf16 %v2398, %v2398
    %v2403 = vpack.c.bf16 %v2399, %v2399
    %v2404 = vpack.c.bf16 %v2400, %v2400
    %v2405 = vld [vmem:[#allocation7] sm:$0xf]
    %v2406 = vld [vmem:[#allocation7 + $0x4] sm:$0xf]
    %v2407 = vld [vmem:[#allocation7 + $0x8] sm:$0xf]
    %v2408 = vld [vmem:[#allocation7 + $0xc] sm:$0xf]
    %v2409 = vld [vmem:[#allocation7 + $0x10] sm:$0xf]
    %v2410 = vld [vmem:[#allocation7 + $0x14] sm:$0xf]
    %v2411 = vld [vmem:[#allocation7 + $0x18] sm:$0xf]
    %v2412 = vld [vmem:[#allocation7 + $0x1c] sm:$0xf]
    %v2413 = vld [vmem:[#allocation7 + $0x20] sm:$0xf]
    %v2414 = vld [vmem:[#allocation7 + $0x24] sm:$0xf]
    %v2415 = vld [vmem:[#allocation7 + $0x28] sm:$0xf]
    %v2416 = vld [vmem:[#allocation7 + $0x2c] sm:$0xf]
    %v2417 = vld [vmem:[#allocation7 + $0x30] sm:$0xf]
    %v2418 = vld [vmem:[#allocation7 + $0x34] sm:$0xf]
    %v2419 = vld [vmem:[#allocation7 + $0x38] sm:$0xf]
    %v2420 = vld [vmem:[#allocation7 + $0x3c] sm:$0xf]
    %v2421 = vld [vmem:[#allocation7 + $0x40] sm:$0xf]
    %v2422 = vld [vmem:[#allocation7 + $0x44] sm:$0xf]
    %v2423 = vld [vmem:[#allocation7 + $0x48] sm:$0xf]
    %v2424 = vld [vmem:[#allocation7 + $0x4c] sm:$0xf]
    %v2425 = vld [vmem:[#allocation7 + $0x50] sm:$0xf]
    %v2426 = vld [vmem:[#allocation7 + $0x54] sm:$0xf]
    %v2427 = vld [vmem:[#allocation7 + $0x58] sm:$0xf]
    %v2428 = vld [vmem:[#allocation7 + $0x5c] sm:$0xf]
    %v2429 = vld [vmem:[#allocation7 + $0x60] sm:$0xf]
    %v2430 = vld [vmem:[#allocation7 + $0x64] sm:$0xf]
    %v2431 = vld [vmem:[#allocation7 + $0x68] sm:$0xf]
    %v2432 = vld [vmem:[#allocation7 + $0x6c] sm:$0xf]
    %v2433 = vld [vmem:[#allocation7 + $0x70] sm:$0xf]
    %v2434 = vld [vmem:[#allocation7 + $0x74] sm:$0xf]
    %v2435 = vld [vmem:[#allocation7 + $0x78] sm:$0xf]
    %v2436 = vld [vmem:[#allocation7 + $0x7c] sm:$0xf]
    %v2437 = vld [vmem:[#allocation7 + $0x80] sm:$0xf]
    %v2438 = vld [vmem:[#allocation7 + $0x84] sm:$0xf]
    %v2439 = vld [vmem:[#allocation7 + $0x88] sm:$0xf]
    %v2440 = vld [vmem:[#allocation7 + $0x8c] sm:$0xf]
    %v2441 = vld [vmem:[#allocation7 + $0x90] sm:$0xf]
    %v2442 = vld [vmem:[#allocation7 + $0x94] sm:$0xf]
    %v2443 = vld [vmem:[#allocation7 + $0x98] sm:$0xf]
    %v2444 = vld [vmem:[#allocation7 + $0x9c] sm:$0xf]
    %v2445 = vld [vmem:[#allocation7 + $0xa0] sm:$0xf]
    %v2446 = vld [vmem:[#allocation7 + $0xa4] sm:$0xf]
    %v2447 = vld [vmem:[#allocation7 + $0xa8] sm:$0xf]
    %v2448 = vld [vmem:[#allocation7 + $0xac] sm:$0xf]
    %v2449 = vld [vmem:[#allocation7 + $0xb0] sm:$0xf]
    %v2450 = vld [vmem:[#allocation7 + $0xb4] sm:$0xf]
    %v2451 = vld [vmem:[#allocation7 + $0xb8] sm:$0xf]
    %v2452 = vld [vmem:[#allocation7 + $0xbc] sm:$0xf]
    %v2453 = vld [vmem:[#allocation7 + $0xc0] sm:$0xf]
    %v2454 = vld [vmem:[#allocation7 + $0xc4] sm:$0xf]
    %v2455 = vld [vmem:[#allocation7 + $0xc8] sm:$0xf]
    %v2456 = vld [vmem:[#allocation7 + $0xcc] sm:$0xf]
    %v2457 = vld [vmem:[#allocation7 + $0xd0] sm:$0xf]
    %v2458 = vld [vmem:[#allocation7 + $0xd4] sm:$0xf]
    %v2459 = vld [vmem:[#allocation7 + $0xd8] sm:$0xf]
    %v2460 = vld [vmem:[#allocation7 + $0xdc] sm:$0xf]
    %v2461 = vld [vmem:[#allocation7 + $0xe0] sm:$0xf]
    %v2462 = vld [vmem:[#allocation7 + $0xe4] sm:$0xf]
    %v2463 = vld [vmem:[#allocation7 + $0xe8] sm:$0xf]
    %v2464 = vld [vmem:[#allocation7 + $0xec] sm:$0xf]
    %v2465 = vld [vmem:[#allocation7 + $0xf0] sm:$0xf]
    %v2466 = vld [vmem:[#allocation7 + $0xf4] sm:$0xf]
    %v2467 = vld [vmem:[#allocation7 + $0xf8] sm:$0xf]
    %v2468 = vld [vmem:[#allocation7 + $0xfc] sm:$0xf]
    %v2469 = vld [vmem:[#allocation8] sm:$0x1]
    %v2471 = vlaneseq
    %v2472 = vshrl.u32 %v2471, 7
    %v2473 = vsub.s32 0, %v2472
    %v2474 = vrot.slane %v2469, %v2473
    %v2540 = vunpack.c.l.b16 %v2405
    %v2541 = vunpack.c.l.b16 %v2406
    %v2542 = vunpack.c.l.b16 %v2407
    %v2543 = vunpack.c.l.b16 %v2408
    %v2544 = vunpack.c.l.b16 %v2409
    %v2545 = vunpack.c.l.b16 %v2410
    %v2546 = vunpack.c.l.b16 %v2411
    %v2547 = vunpack.c.l.b16 %v2412
    %v2548 = vunpack.c.l.b16 %v2413
    %v2549 = vunpack.c.l.b16 %v2414
    %v2550 = vunpack.c.l.b16 %v2415
    %v2551 = vunpack.c.l.b16 %v2416
    %v2552 = vunpack.c.l.b16 %v2417
    %v2553 = vunpack.c.l.b16 %v2418
    %v2554 = vunpack.c.l.b16 %v2419
    %v2555 = vunpack.c.l.b16 %v2420
    %v2556 = vunpack.c.l.b16 %v2421
    %v2557 = vunpack.c.l.b16 %v2422
    %v2558 = vunpack.c.l.b16 %v2423
    %v2559 = vunpack.c.l.b16 %v2424
    %v2560 = vunpack.c.l.b16 %v2425
    %v2561 = vunpack.c.l.b16 %v2426
    %v2562 = vunpack.c.l.b16 %v2427
    %v2563 = vunpack.c.l.b16 %v2428
    %v2564 = vunpack.c.l.b16 %v2429
    %v2565 = vunpack.c.l.b16 %v2430
    %v2566 = vunpack.c.l.b16 %v2431
    %v2567 = vunpack.c.l.b16 %v2432
    %v2568 = vunpack.c.l.b16 %v2433
    %v2569 = vunpack.c.l.b16 %v2434
    %v2570 = vunpack.c.l.b16 %v2435
    %v2571 = vunpack.c.l.b16 %v2436
    %v2572 = vunpack.c.l.b16 %v2437
    %v2573 = vunpack.c.l.b16 %v2438
    %v2574 = vunpack.c.l.b16 %v2439
    %v2575 = vunpack.c.l.b16 %v2440
    %v2576 = vunpack.c.l.b16 %v2441
    %v2577 = vunpack.c.l.b16 %v2442
    %v2578 = vunpack.c.l.b16 %v2443
    %v2579 = vunpack.c.l.b16 %v2444
    %v2580 = vunpack.c.l.b16 %v2445
    %v2581 = vunpack.c.l.b16 %v2446
    %v2582 = vunpack.c.l.b16 %v2447
    %v2583 = vunpack.c.l.b16 %v2448
    %v2584 = vunpack.c.l.b16 %v2449
    %v2585 = vunpack.c.l.b16 %v2450
    %v2586 = vunpack.c.l.b16 %v2451
    %v2587 = vunpack.c.l.b16 %v2452
    %v2588 = vunpack.c.l.b16 %v2453
    %v2589 = vunpack.c.l.b16 %v2454
    %v2590 = vunpack.c.l.b16 %v2455
    %v2591 = vunpack.c.l.b16 %v2456
    %v2592 = vunpack.c.l.b16 %v2457
    %v2593 = vunpack.c.l.b16 %v2458
    %v2594 = vunpack.c.l.b16 %v2459
    %v2595 = vunpack.c.l.b16 %v2460
    %v2596 = vunpack.c.l.b16 %v2461
    %v2597 = vunpack.c.l.b16 %v2462
    %v2598 = vunpack.c.l.b16 %v2463
    %v2599 = vunpack.c.l.b16 %v2464
    %v2600 = vunpack.c.l.b16 %v2465
    %v2601 = vunpack.c.l.b16 %v2466
    %v2602 = vunpack.c.l.b16 %v2467
    %v2603 = vunpack.c.l.b16 %v2468
    %v2604 = vpack.c.b16 %v2541, %v2540
    %v2605 = vpack.c.b16 %v2543, %v2542
    %v2606 = vpack.c.b16 %v2545, %v2544
    %v2607 = vpack.c.b16 %v2547, %v2546
    %v2608 = vpack.c.b16 %v2549, %v2548
    %v2609 = vpack.c.b16 %v2551, %v2550
    %v2610 = vpack.c.b16 %v2553, %v2552
    %v2611 = vpack.c.b16 %v2555, %v2554
    %v2612 = vpack.c.b16 %v2557, %v2556
    %v2613 = vpack.c.b16 %v2559, %v2558
    %v2614 = vpack.c.b16 %v2561, %v2560
    %v2615 = vpack.c.b16 %v2563, %v2562
    %v2616 = vpack.c.b16 %v2565, %v2564
    %v2617 = vpack.c.b16 %v2567, %v2566
    %v2618 = vpack.c.b16 %v2569, %v2568
    %v2619 = vpack.c.b16 %v2571, %v2570
    %v2620 = vpack.c.b16 %v2573, %v2572
    %v2621 = vpack.c.b16 %v2575, %v2574
    %v2622 = vpack.c.b16 %v2577, %v2576
    %v2623 = vpack.c.b16 %v2579, %v2578
    %v2624 = vpack.c.b16 %v2581, %v2580
    %v2625 = vpack.c.b16 %v2583, %v2582
    %v2626 = vpack.c.b16 %v2585, %v2584
    %v2627 = vpack.c.b16 %v2587, %v2586
    %v2628 = vpack.c.b16 %v2589, %v2588
    %v2629 = vpack.c.b16 %v2591, %v2590
    %v2630 = vpack.c.b16 %v2593, %v2592
    %v2631 = vpack.c.b16 %v2595, %v2594
    %v2632 = vpack.c.b16 %v2597, %v2596
    %v2633 = vpack.c.b16 %v2599, %v2598
    %v2634 = vpack.c.b16 %v2601, %v2600
    %v2635 = vpack.c.b16 %v2603, %v2602
    %2668 = vmatprep.subr.bf16.mxu0 0
    %2669 = vmatpush1.bf16.msra.mxu0 %v2611
    %2670 = vmatprep.subr.bf16.mxu0 0
    %2671 = vmatpush1.bf16.msra.mxu0 %v2610
    %2672 = vmatprep.subr.bf16.mxu0 0
    %2673 = vmatpush1.bf16.msra.mxu0 %v2609
    %2674 = vmatprep.subr.bf16.mxu0 0
    %2675 = vmatpush1.bf16.msra.mxu0 %v2608
    %2676 = vmatprep.subr.bf16.mxu0 0
    %2677 = vmatpush1.bf16.msra.mxu0 %v2607
    %2678 = vmatprep.subr.bf16.mxu0 0
    %2679 = vmatpush1.bf16.msra.mxu0 %v2606
    %2680 = vmatprep.subr.bf16.mxu0 0
    %2681 = vmatpush1.bf16.msra.mxu0 %v2605
    %2682 = vmatprep.subr.bf16.mxu0 0
    %2683 = vmatpush1.bf16.msra.mxu0 %v2604
    %2684 = vmatprep.subr.bf16.mxu0 0
    %2685 = vmatpush2.bf16.msra.mxu0 %v2619
    %2686 = vmatprep.subr.bf16.mxu0 0
    %2687 = vmatpush2.bf16.msra.mxu0 %v2618
    %2688 = vmatprep.subr.bf16.mxu0 0
    %2689 = vmatpush2.bf16.msra.mxu0 %v2617
    %2690 = vmatprep.subr.bf16.mxu0 0
    %2691 = vmatpush2.bf16.msra.mxu0 %v2616
    %2692 = vmatprep.subr.bf16.mxu0 0
    %2693 = vmatpush2.bf16.msra.mxu0 %v2615
    %2694 = vmatprep.subr.bf16.mxu0 0
    %2695 = vmatpush2.bf16.msra.mxu0 %v2614
    %2696 = vmatprep.subr.bf16.mxu0 0
    %2697 = vmatpush2.bf16.msra.mxu0 %v2613
    %2698 = vmatprep.subr.bf16.mxu0 0
    %2699 = vmatpush2.bf16.msra.mxu0 %v2612
    %2700 = vmatprep.mubr.bf16.mxu0 %v2402
    %2701 = vmatmul.mubr.bf16.gmra.mxu0 %v2401
    %v2702 = vpop.f32.mrf.mxu0
    %v2703 = vadd.f32 %v2474, %v2702
    %v2704 = vpop.f32.mrf.mxu0
    %v2705 = vpop.f32.mrf.mxu0
    %v2706 = vpop.f32.mrf.mxu0
    %2707 = vdwg.mxu0
    %2708 = vmatprep.subr.bf16.mxu0 0
    %2709 = vmatpush1.bf16.msra.mxu0 %v2627
    %2710 = vmatprep.subr.bf16.mxu0 0
    %2711 = vmatpush1.bf16.msra.mxu0 %v2626
    %2712 = vmatprep.subr.bf16.mxu0 0
    %2713 = vmatpush1.bf16.msra.mxu0 %v2625
    %2714 = vmatprep.subr.bf16.mxu0 0
    %2715 = vmatpush1.bf16.msra.mxu0 %v2624
    %2716 = vmatprep.subr.bf16.mxu0 0
    %2717 = vmatpush1.bf16.msra.mxu0 %v2623
    %2718 = vmatprep.subr.bf16.mxu0 0
    %2719 = vmatpush1.bf16.msra.mxu0 %v2622
    %2720 = vmatprep.subr.bf16.mxu0 0
    %2721 = vmatpush1.bf16.msra.mxu0 %v2621
    %2722 = vmatprep.subr.bf16.mxu0 0
    %2723 = vmatpush1.bf16.msra.mxu0 %v2620
    %2724 = vmatprep.subr.bf16.mxu0 0
    %2725 = vmatpush2.bf16.msra.mxu0 %v2635
    %2726 = vmatprep.subr.bf16.mxu0 0
    %2727 = vmatpush2.bf16.msra.mxu0 %v2634
    %2728 = vmatprep.subr.bf16.mxu0 0
    %2729 = vmatpush2.bf16.msra.mxu0 %v2633
    %2730 = vmatprep.subr.bf16.mxu0 0
    %2731 = vmatpush2.bf16.msra.mxu0 %v2632
    %2732 = vmatprep.subr.bf16.mxu0 0
    %2733 = vmatpush2.bf16.msra.mxu0 %v2631
    %2734 = vmatprep.subr.bf16.mxu0 0
    %2735 = vmatpush2.bf16.msra.mxu0 %v2630
    %2736 = vmatprep.subr.bf16.mxu0 0
    %2737 = vmatpush2.bf16.msra.mxu0 %v2629
    %2738 = vmatprep.subr.bf16.mxu0 0
    %2739 = vmatpush2.bf16.msra.mxu0 %v2628
    %2740 = vmatprep.mubr.bf16.mxu0 %v2404
    %2741 = vmatmul.mubr.bf16.gmra.mxu0 %v2403
    %v2742 = vpop.f32.mrf.mxu0
    %v2743 = vadd.f32 %v2703, %v2742
    %v2744 = vpop.f32.mrf.mxu0
    %v2745 = vpop.f32.mrf.mxu0
    %v2746 = vpop.f32.mrf.mxu0
    %2747 = vdwg.mxu0
    %v2748 = vmax.f32 %v2743, 0.0
    %v2749 = vpack.c.bf16 %v2748, %v2748
    %v2750 = vld [vmem:[#allocation10] sm:$0xf]
    %v2751 = vld [vmem:[#allocation10 + $0x4] sm:$0xf]
    %v2752 = vld [vmem:[#allocation10 + $0x8] sm:$0xf]
    %v2753 = vld [vmem:[#allocation10 + $0xc] sm:$0xf]
    %v2754 = vld [vmem:[#allocation10 + $0x10] sm:$0xf]
    %v2755 = vld [vmem:[#allocation10 + $0x14] sm:$0xf]
    %v2756 = vld [vmem:[#allocation10 + $0x18] sm:$0xf]
    %v2757 = vld [vmem:[#allocation10 + $0x1c] sm:$0xf]
    %v2758 = vld [vmem:[#allocation10 + $0x20] sm:$0xf]
    %v2759 = vld [vmem:[#allocation10 + $0x24] sm:$0xf]
    %v2760 = vld [vmem:[#allocation10 + $0x28] sm:$0xf]
    %v2761 = vld [vmem:[#allocation10 + $0x2c] sm:$0xf]
    %v2762 = vld [vmem:[#allocation10 + $0x30] sm:$0xf]
    %v2763 = vld [vmem:[#allocation10 + $0x34] sm:$0xf]
    %v2764 = vld [vmem:[#allocation10 + $0x38] sm:$0xf]
    %v2765 = vld [vmem:[#allocation10 + $0x3c] sm:$0xf]
    %v2766 = vld [vmem:[#allocation11] sm:$0x1]
    %v2768 = vlaneseq
    %v2769 = vshrl.u32 %v2768, 7
    %v2770 = vsub.s32 0, %v2769
    %v2771 = vrot.slane %v2766, %v2770
    %v2789 = vunpack.c.l.b16 %v2750
    %v2790 = vunpack.c.l.b16 %v2751
    %v2791 = vunpack.c.l.b16 %v2752
    %v2792 = vunpack.c.l.b16 %v2753
    %v2793 = vunpack.c.l.b16 %v2754
    %v2794 = vunpack.c.l.b16 %v2755
    %v2795 = vunpack.c.l.b16 %v2756
    %v2796 = vunpack.c.l.b16 %v2757
    %v2797 = vunpack.c.l.b16 %v2758
    %v2798 = vunpack.c.l.b16 %v2759
    %v2799 = vunpack.c.l.b16 %v2760
    %v2800 = vunpack.c.l.b16 %v2761
    %v2801 = vunpack.c.l.b16 %v2762
    %v2802 = vunpack.c.l.b16 %v2763
    %v2803 = vunpack.c.l.b16 %v2764
    %v2804 = vunpack.c.l.b16 %v2765
    %v2805 = vpack.c.b16 %v2790, %v2789
    %v2806 = vpack.c.b16 %v2792, %v2791
    %v2807 = vpack.c.b16 %v2794, %v2793
    %v2808 = vpack.c.b16 %v2796, %v2795
    %v2809 = vpack.c.b16 %v2798, %v2797
    %v2810 = vpack.c.b16 %v2800, %v2799
    %v2811 = vpack.c.b16 %v2802, %v2801
    %v2812 = vpack.c.b16 %v2804, %v2803
    %2821 = vmatprep.subr.bf16.mxu0 0
    %2822 = vmatpush1.bf16.msra.mxu0 %v2812
    %2823 = vmatprep.subr.bf16.mxu0 0
    %2824 = vmatpush1.bf16.msra.mxu0 %v2811
    %2825 = vmatprep.subr.bf16.mxu0 0
    %2826 = vmatpush1.bf16.msra.mxu0 %v2810
    %2827 = vmatprep.subr.bf16.mxu0 0
    %2828 = vmatpush1.bf16.msra.mxu0 %v2809
    %2829 = vmatprep.subr.bf16.mxu0 0
    %2830 = vmatpush1.bf16.msra.mxu0 %v2808
    %2831 = vmatprep.subr.bf16.mxu0 0
    %2832 = vmatpush1.bf16.msra.mxu0 %v2807
    %2833 = vmatprep.subr.bf16.mxu0 0
    %2834 = vmatpush1.bf16.msra.mxu0 %v2806
    %2835 = vmatprep.subr.bf16.mxu0 0
    %2836 = vmatpush1.bf16.msra.mxu0 %v2805
    %2837 = vmatprep.subr.bf16.mxu0 0
    %2838 = vmatpush2.bf16.msra.mxu0 0
    %2839 = vmatprep.subr.bf16.mxu0 0
    %2840 = vmatpush2.bf16.msra.mxu0 0
    %2841 = vmatprep.subr.bf16.mxu0 0
    %2842 = vmatpush2.bf16.msra.mxu0 0
    %2843 = vmatprep.subr.bf16.mxu0 0
    %2844 = vmatpush2.bf16.msra.mxu0 0
    %2845 = vmatprep.subr.bf16.mxu0 0
    %2846 = vmatpush2.bf16.msra.mxu0 0
    %2847 = vmatprep.subr.bf16.mxu0 0
    %2848 = vmatpush2.bf16.msra.mxu0 0
    %2849 = vmatprep.subr.bf16.mxu0 0
    %2850 = vmatpush2.bf16.msra.mxu0 0
    %2851 = vmatprep.subr.bf16.mxu0 0
    %2852 = vmatpush2.bf16.msra.mxu0 0
    %2853 = vmatprep.mubr.bf16.mxu0 0
    %2854 = vmatmul.mubr.bf16.gmra.mxu0 %v2749
    %v2855 = vpop.f32.mrf.mxu0
    %v2856 = vadd.f32 %v2771, %v2855
    %v2857 = vpop.f32.mrf.mxu0
    %v2858 = vpop.f32.mrf.mxu0
    %v2859 = vpop.f32.mrf.mxu0
    %2860 = vdwg.mxu0
    %2861 = vst [vmem:[#allocation22] sm:$0xff] %v2856
    %v2862 = vpack.c.bf16 %v2856, %v2856
    %v2863 = vld [vmem:[#allocation13] sm:$0xf]
    %v2864 = vld [vmem:[#allocation13 + $0x4] sm:$0xf]
    %v2865 = vld [vmem:[#allocation13 + $0x8] sm:$0xf]
    %v2866 = vld [vmem:[#allocation13 + $0xc] sm:$0xf]
    %v2867 = vld [vmem:[#allocation13 + $0x10] sm:$0xf]
    %v2868 = vld [vmem:[#allocation13 + $0x14] sm:$0xf]
    %v2869 = vld [vmem:[#allocation13 + $0x18] sm:$0xf]
    %v2870 = vld [vmem:[#allocation13 + $0x1c] sm:$0xf]
    %v2871 = vld [vmem:[#allocation13 + $0x20] sm:$0xf]
    %v2872 = vld [vmem:[#allocation13 + $0x24] sm:$0xf]
    %v2873 = vld [vmem:[#allocation13 + $0x28] sm:$0xf]
    %v2874 = vld [vmem:[#allocation13 + $0x2c] sm:$0xf]
    %v2875 = vld [vmem:[#allocation13 + $0x30] sm:$0xf]
    %v2876 = vld [vmem:[#allocation13 + $0x34] sm:$0xf]
    %v2877 = vld [vmem:[#allocation13 + $0x38] sm:$0xf]
    %v2878 = vld [vmem:[#allocation13 + $0x3c] sm:$0xf]
    %v2879 = vld [vmem:[#allocation14] sm:$0x1]
    %v2881 = vlaneseq
    %v2882 = vshrl.u32 %v2881, 7
    %v2883 = vsub.s32 0, %v2882
    %v2884 = vrot.slane %v2879, %v2883
    %v2902 = vunpack.c.l.b16 %v2863
    %v2903 = vunpack.c.l.b16 %v2864
    %v2904 = vunpack.c.l.b16 %v2865
    %v2905 = vunpack.c.l.b16 %v2866
    %v2906 = vunpack.c.l.b16 %v2867
    %v2907 = vunpack.c.l.b16 %v2868
    %v2908 = vunpack.c.l.b16 %v2869
    %v2909 = vunpack.c.l.b16 %v2870
    %v2910 = vunpack.c.l.b16 %v2871
    %v2911 = vunpack.c.l.b16 %v2872
    %v2912 = vunpack.c.l.b16 %v2873
    %v2913 = vunpack.c.l.b16 %v2874
    %v2914 = vunpack.c.l.b16 %v2875
    %v2915 = vunpack.c.l.b16 %v2876
    %v2916 = vunpack.c.l.b16 %v2877
    %v2917 = vunpack.c.l.b16 %v2878
    %v2918 = vpack.c.b16 %v2903, %v2902
    %v2919 = vpack.c.b16 %v2905, %v2904
    %v2920 = vpack.c.b16 %v2907, %v2906
    %v2921 = vpack.c.b16 %v2909, %v2908
    %v2922 = vpack.c.b16 %v2911, %v2910
    %v2923 = vpack.c.b16 %v2913, %v2912
    %v2924 = vpack.c.b16 %v2915, %v2914
    %v2925 = vpack.c.b16 %v2917, %v2916
    %2934 = vmatprep.subr.bf16.mxu0 0
    %2935 = vmatpush1.bf16.msra.mxu0 %v2925
    %2936 = vmatprep.subr.bf16.mxu0 0
    %2937 = vmatpush1.bf16.msra.mxu0 %v2924
    %2938 = vmatprep.subr.bf16.mxu0 0
    %2939 = vmatpush1.bf16.msra.mxu0 %v2923
    %2940 = vmatprep.subr.bf16.mxu0 0
    %2941 = vmatpush1.bf16.msra.mxu0 %v2922
    %2942 = vmatprep.subr.bf16.mxu0 0
    %2943 = vmatpush1.bf16.msra.mxu0 %v2921
    %2944 = vmatprep.subr.bf16.mxu0 0
    %2945 = vmatpush1.bf16.msra.mxu0 %v2920
    %2946 = vmatprep.subr.bf16.mxu0 0
    %2947 = vmatpush1.bf16.msra.mxu0 %v2919
    %2948 = vmatprep.subr.bf16.mxu0 0
    %2949 = vmatpush1.bf16.msra.mxu0 %v2918
    %2950 = vmatprep.subr.bf16.mxu0 0
    %2951 = vmatpush2.bf16.msra.mxu0 0
    %2952 = vmatprep.subr.bf16.mxu0 0
    %2953 = vmatpush2.bf16.msra.mxu0 0
    %2954 = vmatprep.subr.bf16.mxu0 0
    %2955 = vmatpush2.bf16.msra.mxu0 0
    %2956 = vmatprep.subr.bf16.mxu0 0
    %2957 = vmatpush2.bf16.msra.mxu0 0
    %2958 = vmatprep.subr.bf16.mxu0 0
    %2959 = vmatpush2.bf16.msra.mxu0 0
    %2960 = vmatprep.subr.bf16.mxu0 0
    %2961 = vmatpush2.bf16.msra.mxu0 0
    %2962 = vmatprep.subr.bf16.mxu0 0
    %2963 = vmatpush2.bf16.msra.mxu0 0
    %2964 = vmatprep.subr.bf16.mxu0 0
    %2965 = vmatpush2.bf16.msra.mxu0 0
    %2966 = vmatprep.mubr.bf16.mxu0 0
    %2967 = vmatmul.mubr.bf16.gmra.mxu0 %v2862
    %v2968 = vpop.f32.mrf.mxu0
    %v2969 = vadd.f32 %v2884, %v2968
    %v2970 = vpop.f32.mrf.mxu0
    %v2971 = vpop.f32.mrf.mxu0
    %v2972 = vpop.f32.mrf.mxu0
    %2973 = vdwg.mxu0
    %v2974 = vmax.f32 %v2969, 0.0
    %v2975 = vpack.c.bf16 %v2974, %v2974
    %v2976 = vld [vmem:[#allocation16] sm:$0xff]
    %v2977 = vld [vmem:[#allocation16 + $0x8] sm:$0xff]
    %v2978 = vld [vmem:[#allocation16 + $0x10] sm:$0xff]
    %v2979 = vld [vmem:[#allocation16 + $0x18] sm:$0xff]
    %v2980 = vld [vmem:[#allocation16 + $0x20] sm:$0xff]
    %v2981 = vld [vmem:[#allocation16 + $0x28] sm:$0xff]
    %v2982 = vld [vmem:[#allocation16 + $0x30] sm:$0xff]
    %v2983 = vld [vmem:[#allocation16 + $0x38] sm:$0xff]
    %v2984 = vld [vmem:[#allocation16 + $0x40] sm:$0xff]
    %v2985 = vld [vmem:[#allocation16 + $0x48] sm:$0xff]
    %v2986 = vld [vmem:[#allocation16 + $0x50] sm:$0xff]
    %v2987 = vld [vmem:[#allocation16 + $0x58] sm:$0xff]
    %v2988 = vld [vmem:[#allocation16 + $0x60] sm:$0xff]
    %v2989 = vld [vmem:[#allocation16 + $0x68] sm:$0xff]
    %v2990 = vld [vmem:[#allocation16 + $0x70] sm:$0xff]
    %v2991 = vld [vmem:[#allocation16 + $0x78] sm:$0xff]
    %v2992 = vld [vmem:[#allocation16 + $0x80] sm:$0xff]
    %v2993 = vld [vmem:[#allocation16 + $0x88] sm:$0xff]
    %v2994 = vld [vmem:[#allocation16 + $0x90] sm:$0xff]
    %v2995 = vld [vmem:[#allocation16 + $0x98] sm:$0xff]
    %v2996 = vld [vmem:[#allocation16 + $0xa0] sm:$0xff]
    %v2997 = vld [vmem:[#allocation16 + $0xa8] sm:$0xff]
    %v2998 = vld [vmem:[#allocation16 + $0xb0] sm:$0xff]
    %v2999 = vld [vmem:[#allocation16 + $0xb8] sm:$0xff]
    %v3000 = vld [vmem:[#allocation16 + $0xc0] sm:$0xff]
    %v3001 = vld [vmem:[#allocation16 + $0xc8] sm:$0xff]
    %v3002 = vld [vmem:[#allocation16 + $0xd0] sm:$0xff]
    %v3003 = vld [vmem:[#allocation16 + $0xd8] sm:$0xff]
    %v3004 = vld [vmem:[#allocation16 + $0xe0] sm:$0xff]
    %v3005 = vld [vmem:[#allocation16 + $0xe8] sm:$0xff]
    %v3006 = vld [vmem:[#allocation16 + $0xf0] sm:$0xff]
    %v3007 = vld [vmem:[#allocation16 + $0xf8] sm:$0xff]
    %v3008 = vld [vmem:[#allocation17] sm:$0xf]
    %v3010 = vlaneseq
    %v3011 = vshrl.u32 %v3010, 7
    %v3012 = vsub.s32 0, %v3011
    %v3013 = vrot.slane %v3008, %v3012
    %v3014 = vlaneseq
    %v3015 = vshrl.u32 %v3014, 7
    %v3016 = vsub.s32 1, %v3015
    %v3017 = vrot.slane %v3008, %v3016
    %v3018 = vlaneseq
    %v3019 = vshrl.u32 %v3018, 7
    %v3020 = vsub.s32 2, %v3019
    %v3021 = vrot.slane %v3008, %v3020
    %v3022 = vlaneseq
    %v3023 = vshrl.u32 %v3022, 7
    %v3024 = vsub.s32 3, %v3023
    %v3025 = vrot.slane %v3008, %v3024
    %v3062 = vunpack.c.l.b16 %v2976
    %v3063 = vunpack.c.h.b16 %v2976
    %v3064 = vunpack.c.l.b16 %v2977
    %v3065 = vunpack.c.h.b16 %v2977
    %v3066 = vunpack.c.l.b16 %v2978
    %v3067 = vunpack.c.h.b16 %v2978
    %v3068 = vunpack.c.l.b16 %v2979
    %v3069 = vunpack.c.h.b16 %v2979
    %v3070 = vunpack.c.l.b16 %v2980
    %v3071 = vunpack.c.h.b16 %v2980
    %v3072 = vunpack.c.l.b16 %v2981
    %v3073 = vunpack.c.h.b16 %v2981
    %v3074 = vunpack.c.l.b16 %v2982
    %v3075 = vunpack.c.h.b16 %v2982
    %v3076 = vunpack.c.l.b16 %v2983
    %v3077 = vunpack.c.h.b16 %v2983
    %v3078 = vunpack.c.l.b16 %v2984
    %v3079 = vunpack.c.h.b16 %v2984
    %v3080 = vunpack.c.l.b16 %v2985
    %v3081 = vunpack.c.h.b16 %v2985
    %v3082 = vunpack.c.l.b16 %v2986
    %v3083 = vunpack.c.h.b16 %v2986
    %v3084 = vunpack.c.l.b16 %v2987
    %v3085 = vunpack.c.h.b16 %v2987
    %v3086 = vunpack.c.l.b16 %v2988
    %v3087 = vunpack.c.h.b16 %v2988
    %v3088 = vunpack.c.l.b16 %v2989
    %v3089 = vunpack.c.h.b16 %v2989
    %v3090 = vunpack.c.l.b16 %v2990
    %v3091 = vunpack.c.h.b16 %v2990
    %v3092 = vunpack.c.l.b16 %v2991
    %v3093 = vunpack.c.h.b16 %v2991
    %v3094 = vunpack.c.l.b16 %v2992
    %v3095 = vunpack.c.h.b16 %v2992
    %v3096 = vunpack.c.l.b16 %v2993
    %v3097 = vunpack.c.h.b16 %v2993
    %v3098 = vunpack.c.l.b16 %v2994
    %v3099 = vunpack.c.h.b16 %v2994
    %v3100 = vunpack.c.l.b16 %v2995
    %v3101 = vunpack.c.h.b16 %v2995
    %v3102 = vunpack.c.l.b16 %v2996
    %v3103 = vunpack.c.h.b16 %v2996
    %v3104 = vunpack.c.l.b16 %v2997
    %v3105 = vunpack.c.h.b16 %v2997
    %v3106 = vunpack.c.l.b16 %v2998
    %v3107 = vunpack.c.h.b16 %v2998
    %v3108 = vunpack.c.l.b16 %v2999
    %v3109 = vunpack.c.h.b16 %v2999
    %v3110 = vunpack.c.l.b16 %v3000
    %v3111 = vunpack.c.h.b16 %v3000
    %v3112 = vunpack.c.l.b16 %v3001
    %v3113 = vunpack.c.h.b16 %v3001
    %v3114 = vunpack.c.l.b16 %v3002
    %v3115 = vunpack.c.h.b16 %v3002
    %v3116 = vunpack.c.l.b16 %v3003
    %v3117 = vunpack.c.h.b16 %v3003
    %v3118 = vunpack.c.l.b16 %v3004
    %v3119 = vunpack.c.h.b16 %v3004
    %v3120 = vunpack.c.l.b16 %v3005
    %v3121 = vunpack.c.h.b16 %v3005
    %v3122 = vunpack.c.l.b16 %v3006
    %v3123 = vunpack.c.h.b16 %v3006
    %v3124 = vunpack.c.l.b16 %v3007
    %v3125 = vunpack.c.h.b16 %v3007
    %v3126 = vpack.c.b16 %v3066, %v3062
    %v3127 = vpack.c.b16 %v3067, %v3063
    %v3128 = vpack.c.b16 %v3068, %v3064
    %v3129 = vpack.c.b16 %v3069, %v3065
    %v3130 = vpack.c.b16 %v3074, %v3070
    %v3131 = vpack.c.b16 %v3075, %v3071
    %v3132 = vpack.c.b16 %v3076, %v3072
    %v3133 = vpack.c.b16 %v3077, %v3073
    %v3134 = vpack.c.b16 %v3082, %v3078
    %v3135 = vpack.c.b16 %v3083, %v3079
    %v3136 = vpack.c.b16 %v3084, %v3080
    %v3137 = vpack.c.b16 %v3085, %v3081
    %v3138 = vpack.c.b16 %v3090, %v3086
    %v3139 = vpack.c.b16 %v3091, %v3087
    %v3140 = vpack.c.b16 %v3092, %v3088
    %v3141 = vpack.c.b16 %v3093, %v3089
    %v3142 = vpack.c.b16 %v3098, %v3094
    %v3143 = vpack.c.b16 %v3099, %v3095
    %v3144 = vpack.c.b16 %v3100, %v3096
    %v3145 = vpack.c.b16 %v3101, %v3097
    %v3146 = vpack.c.b16 %v3106, %v3102
    %v3147 = vpack.c.b16 %v3107, %v3103
    %v3148 = vpack.c.b16 %v3108, %v3104
    %v3149 = vpack.c.b16 %v3109, %v3105
    %v3150 = vpack.c.b16 %v3114, %v3110
    %v3151 = vpack.c.b16 %v3115, %v3111
    %v3152 = vpack.c.b16 %v3116, %v3112
    %v3153 = vpack.c.b16 %v3117, %v3113
    %v3154 = vpack.c.b16 %v3122, %v3118
    %v3155 = vpack.c.b16 %v3123, %v3119
    %v3156 = vpack.c.b16 %v3124, %v3120
    %v3157 = vpack.c.b16 %v3125, %v3121
    %3190 = vmatprep.subr.bf16.mxu0 %v3155
    %3191 = vmatpush1.bf16.msra.mxu0 %v3154
    %3192 = vmatprep.subr.bf16.mxu0 %v3151
    %3193 = vmatpush1.bf16.msra.mxu0 %v3150
    %3194 = vmatprep.subr.bf16.mxu0 %v3147
    %3195 = vmatpush1.bf16.msra.mxu0 %v3146
    %3196 = vmatprep.subr.bf16.mxu0 %v3143
    %3197 = vmatpush1.bf16.msra.mxu0 %v3142
    %3198 = vmatprep.subr.bf16.mxu0 %v3139
    %3199 = vmatpush1.bf16.msra.mxu0 %v3138
    %3200 = vmatprep.subr.bf16.mxu0 %v3135
    %3201 = vmatpush1.bf16.msra.mxu0 %v3134
    %3202 = vmatprep.subr.bf16.mxu0 %v3131
    %3203 = vmatpush1.bf16.msra.mxu0 %v3130
    %3204 = vmatprep.subr.bf16.mxu0 %v3127
    %3205 = vmatpush1.bf16.msra.mxu0 %v3126
    %3206 = vmatprep.subr.bf16.mxu0 0
    %3207 = vmatpush2.bf16.msra.mxu0 0
    %3208 = vmatprep.subr.bf16.mxu0 0
    %3209 = vmatpush2.bf16.msra.mxu0 0
    %3210 = vmatprep.subr.bf16.mxu0 0
    %3211 = vmatpush2.bf16.msra.mxu0 0
    %3212 = vmatprep.subr.bf16.mxu0 0
    %3213 = vmatpush2.bf16.msra.mxu0 0
    %3214 = vmatprep.subr.bf16.mxu0 0
    %3215 = vmatpush2.bf16.msra.mxu0 0
    %3216 = vmatprep.subr.bf16.mxu0 0
    %3217 = vmatpush2.bf16.msra.mxu0 0
    %3218 = vmatprep.subr.bf16.mxu0 0
    %3219 = vmatpush2.bf16.msra.mxu0 0
    %3220 = vmatprep.subr.bf16.mxu0 0
    %3221 = vmatpush2.bf16.msra.mxu0 0
    %3222 = vmatprep.mubr.bf16.mxu0 0
    %3223 = vmatmul.mubr.bf16.gmra.mxu0 %v2975
    %v3224 = vpop.f32.mrf.mxu0
    %v3225 = vadd.f32 %v3013, %v3224
    %v3226 = vpop.f32.mrf.mxu0
    %v3227 = vadd.f32 %v3017, %v3226
    %v3228 = vpop.f32.mrf.mxu0
    %v3229 = vpop.f32.mrf.mxu0
    %3230 = vdwg.mxu0
    %3231 = vmatprep.subr.bf16.mxu0 %v3157
    %3232 = vmatpush1.bf16.msra.mxu0 %v3156
    %3233 = vmatprep.subr.bf16.mxu0 %v3153
    %3234 = vmatpush1.bf16.msra.mxu0 %v3152
    %3235 = vmatprep.subr.bf16.mxu0 %v3149
    %3236 = vmatpush1.bf16.msra.mxu0 %v3148
    %3237 = vmatprep.subr.bf16.mxu0 %v3145
    %3238 = vmatpush1.bf16.msra.mxu0 %v3144
    %3239 = vmatprep.subr.bf16.mxu0 %v3141
    %3240 = vmatpush1.bf16.msra.mxu0 %v3140
    %3241 = vmatprep.subr.bf16.mxu0 %v3137
    %3242 = vmatpush1.bf16.msra.mxu0 %v3136
    %3243 = vmatprep.subr.bf16.mxu0 %v3133
    %3244 = vmatpush1.bf16.msra.mxu0 %v3132
    %3245 = vmatprep.subr.bf16.mxu0 %v3129
    %3246 = vmatpush1.bf16.msra.mxu0 %v3128
    %3247 = vmatprep.subr.bf16.mxu0 0
    %3248 = vmatpush2.bf16.msra.mxu0 0
    %3249 = vmatprep.subr.bf16.mxu0 0
    %3250 = vmatpush2.bf16.msra.mxu0 0
    %3251 = vmatprep.subr.bf16.mxu0 0
    %3252 = vmatpush2.bf16.msra.mxu0 0
    %3253 = vmatprep.subr.bf16.mxu0 0
    %3254 = vmatpush2.bf16.msra.mxu0 0
    %3255 = vmatprep.subr.bf16.mxu0 0
    %3256 = vmatpush2.bf16.msra.mxu0 0
    %3257 = vmatprep.subr.bf16.mxu0 0
    %3258 = vmatpush2.bf16.msra.mxu0 0
    %3259 = vmatprep.subr.bf16.mxu0 0
    %3260 = vmatpush2.bf16.msra.mxu0 0
    %3261 = vmatprep.subr.bf16.mxu0 0
    %3262 = vmatpush2.bf16.msra.mxu0 0
    %3263 = vmatprep.mubr.bf16.mxu0 0
    %3264 = vmatmul.mubr.bf16.gmra.mxu0 %v2975
    %v3265 = vpop.f32.mrf.mxu0
    %v3266 = vadd.f32 %v3021, %v3265
    %v3267 = vpop.f32.mrf.mxu0
    %v3268 = vadd.f32 %v3025, %v3267
    %v3269 = vpop.f32.mrf.mxu0
    %v3270 = vpop.f32.mrf.mxu0
    %3271 = vdwg.mxu0
    %v3272 = vmax.f32 %v3225, 0.0
    %v3273 = vmax.f32 %v3227, 0.0
    %v3274 = vmax.f32 %v3266, 0.0
    %v3275 = vmax.f32 %v3268, 0.0
    %v3276 = vpack.c.bf16 %v3272, %v3272
    %v3277 = vpack.c.bf16 %v3273, %v3273
    %v3278 = vpack.c.bf16 %v3274, %v3274
    %v3279 = vpack.c.bf16 %v3275, %v3275
    %v3280 = vld [vmem:[#allocation19] sm:$0xff]
    %v3281 = vld [vmem:[#allocation19 + $0x8] sm:$0xff]
    %v3282 = vld [vmem:[#allocation19 + $0x10] sm:$0xff]
    %v3283 = vld [vmem:[#allocation19 + $0x18] sm:$0xff]
    %v3284 = vld [vmem:[#allocation19 + $0x20] sm:$0xf]
    %v3285 = vld [vmem:[#allocation19 + $0x24] sm:$0xff]
    %v3286 = vld [vmem:[#allocation19 + $0x2c] sm:$0xff]
    %v3287 = vld [vmem:[#allocation19 + $0x34] sm:$0xff]
    %v3288 = vld [vmem:[#allocation19 + $0x3c] sm:$0xff]
    %v3289 = vld [vmem:[#allocation19 + $0x44] sm:$0xf]
    %v3290 = vld [vmem:[#allocation19 + $0x48] sm:$0xff]
    %v3291 = vld [vmem:[#allocation19 + $0x50] sm:$0xff]
    %v3292 = vld [vmem:[#allocation19 + $0x58] sm:$0xff]
    %v3293 = vld [vmem:[#allocation19 + $0x60] sm:$0xff]
    %v3294 = vld [vmem:[#allocation19 + $0x68] sm:$0xf]
    %v3295 = vld [vmem:[#allocation19 + $0x6c] sm:$0xff]
    %v3296 = vld [vmem:[#allocation19 + $0x74] sm:$0xff]
    %v3297 = vld [vmem:[#allocation19 + $0x7c] sm:$0xff]
    %v3298 = vld [vmem:[#allocation19 + $0x84] sm:$0xff]
    %v3299 = vld [vmem:[#allocation19 + $0x8c] sm:$0xf]
    %v3300 = vld [vmem:[#allocation19 + $0x90] sm:$0xff]
    %v3301 = vld [vmem:[#allocation19 + $0x98] sm:$0xff]
    %v3302 = vld [vmem:[#allocation19 + $0xa0] sm:$0xff]
    %v3303 = vld [vmem:[#allocation19 + $0xa8] sm:$0xff]
    %v3304 = vld [vmem:[#allocation19 + $0xb0] sm:$0xf]
    %v3305 = vld [vmem:[#allocation19 + $0xb4] sm:$0xff]
    %v3306 = vld [vmem:[#allocation19 + $0xbc] sm:$0xff]
    %v3307 = vld [vmem:[#allocation19 + $0xc4] sm:$0xff]
    %v3308 = vld [vmem:[#allocation19 + $0xcc] sm:$0xff]
    %v3309 = vld [vmem:[#allocation19 + $0xd4] sm:$0xf]
    %v3310 = vld [vmem:[#allocation19 + $0xd8] sm:$0xff]
    %v3311 = vld [vmem:[#allocation19 + $0xe0] sm:$0xff]
    %v3312 = vld [vmem:[#allocation19 + $0xe8] sm:$0xff]
    %v3313 = vld [vmem:[#allocation19 + $0xf0] sm:$0xff]
    %v3314 = vld [vmem:[#allocation19 + $0xf8] sm:$0xf]
    %v3315 = vld [vmem:[#allocation19 + $0xfc] sm:$0xff]
    %v3316 = vld [vmem:[#allocation19 + $0x104] sm:$0xff]
    %v3317 = vld [vmem:[#allocation19 + $0x10c] sm:$0xff]
    %v3318 = vld [vmem:[#allocation19 + $0x114] sm:$0xff]
    %v3319 = vld [vmem:[#allocation19 + $0x11c] sm:$0xf]
    %v3320 = vld [vmem:[#allocation19 + $0x120] sm:$0xff]
    %v3321 = vld [vmem:[#allocation19 + $0x128] sm:$0xff]
    %v3322 = vld [vmem:[#allocation19 + $0x130] sm:$0xff]
    %v3323 = vld [vmem:[#allocation19 + $0x138] sm:$0xff]
    %v3324 = vld [vmem:[#allocation19 + $0x140] sm:$0xf]
    %v3325 = vld [vmem:[#allocation19 + $0x144] sm:$0xff]
    %v3326 = vld [vmem:[#allocation19 + $0x14c] sm:$0xff]
    %v3327 = vld [vmem:[#allocation19 + $0x154] sm:$0xff]
    %v3328 = vld [vmem:[#allocation19 + $0x15c] sm:$0xff]
    %v3329 = vld [vmem:[#allocation19 + $0x164] sm:$0xf]
    %v3330 = vld [vmem:[#allocation19 + $0x168] sm:$0xff]
    %v3331 = vld [vmem:[#allocation19 + $0x170] sm:$0xff]
    %v3332 = vld [vmem:[#allocation19 + $0x178] sm:$0xff]
    %v3333 = vld [vmem:[#allocation19 + $0x180] sm:$0xff]
    %v3334 = vld [vmem:[#allocation19 + $0x188] sm:$0xf]
    %v3335 = vld [vmem:[#allocation19 + $0x18c] sm:$0xff]
    %v3336 = vld [vmem:[#allocation19 + $0x194] sm:$0xff]
    %v3337 = vld [vmem:[#allocation19 + $0x19c] sm:$0xff]
    %v3338 = vld [vmem:[#allocation19 + $0x1a4] sm:$0xff]
    %v3339 = vld [vmem:[#allocation19 + $0x1ac] sm:$0xf]
    %v3340 = vld [vmem:[#allocation19 + $0x1b0] sm:$0xff]
    %v3341 = vld [vmem:[#allocation19 + $0x1b8] sm:$0xff]
    %v3342 = vld [vmem:[#allocation19 + $0x1c0] sm:$0xff]
    %v3343 = vld [vmem:[#allocation19 + $0x1c8] sm:$0xff]
    %v3344 = vld [vmem:[#allocation19 + $0x1d0] sm:$0xf]
    %v3345 = vld [vmem:[#allocation19 + $0x1d4] sm:$0xff]
    %v3346 = vld [vmem:[#allocation19 + $0x1dc] sm:$0xff]
    %v3347 = vld [vmem:[#allocation19 + $0x1e4] sm:$0xff]
    %v3348 = vld [vmem:[#allocation19 + $0x1ec] sm:$0xff]
    %v3349 = vld [vmem:[#allocation19 + $0x1f4] sm:$0xf]
    %v3350 = vld [vmem:[#allocation19 + $0x1f8] sm:$0xff]
    %v3351 = vld [vmem:[#allocation19 + $0x200] sm:$0xff]
    %v3352 = vld [vmem:[#allocation19 + $0x208] sm:$0xff]
    %v3353 = vld [vmem:[#allocation19 + $0x210] sm:$0xff]
    %v3354 = vld [vmem:[#allocation19 + $0x218] sm:$0xf]
    %v3355 = vld [vmem:[#allocation19 + $0x21c] sm:$0xff]
    %v3356 = vld [vmem:[#allocation19 + $0x224] sm:$0xff]
    %v3357 = vld [vmem:[#allocation19 + $0x22c] sm:$0xff]
    %v3358 = vld [vmem:[#allocation19 + $0x234] sm:$0xff]
    %v3359 = vld [vmem:[#allocation19 + $0x23c] sm:$0xf]
    %v3360 = vld [vmem:[#allocation19 + $0x240] sm:$0xff]
    %v3361 = vld [vmem:[#allocation19 + $0x248] sm:$0xff]
    %v3362 = vld [vmem:[#allocation19 + $0x250] sm:$0xff]
    %v3363 = vld [vmem:[#allocation19 + $0x258] sm:$0xff]
    %v3364 = vld [vmem:[#allocation19 + $0x260] sm:$0xf]
    %v3365 = vld [vmem:[#allocation19 + $0x264] sm:$0xff]
    %v3366 = vld [vmem:[#allocation19 + $0x26c] sm:$0xff]
    %v3367 = vld [vmem:[#allocation19 + $0x274] sm:$0xff]
    %v3368 = vld [vmem:[#allocation19 + $0x27c] sm:$0xff]
    %v3369 = vld [vmem:[#allocation19 + $0x284] sm:$0xf]
    %v3370 = vld [vmem:[#allocation19 + $0x288] sm:$0xff]
    %v3371 = vld [vmem:[#allocation19 + $0x290] sm:$0xff]
    %v3372 = vld [vmem:[#allocation19 + $0x298] sm:$0xff]
    %v3373 = vld [vmem:[#allocation19 + $0x2a0] sm:$0xff]
    %v3374 = vld [vmem:[#allocation19 + $0x2a8] sm:$0xf]
    %v3375 = vld [vmem:[#allocation19 + $0x2ac] sm:$0xff]
    %v3376 = vld [vmem:[#allocation19 + $0x2b4] sm:$0xff]
    %v3377 = vld [vmem:[#allocation19 + $0x2bc] sm:$0xff]
    %v3378 = vld [vmem:[#allocation19 + $0x2c4] sm:$0xff]
    %v3379 = vld [vmem:[#allocation19 + $0x2cc] sm:$0xf]
    %v3380 = vld [vmem:[#allocation19 + $0x2d0] sm:$0xff]
    %v3381 = vld [vmem:[#allocation19 + $0x2d8] sm:$0xff]
    %v3382 = vld [vmem:[#allocation19 + $0x2e0] sm:$0xff]
    %v3383 = vld [vmem:[#allocation19 + $0x2e8] sm:$0xff]
    %v3384 = vld [vmem:[#allocation19 + $0x2f0] sm:$0xf]
    %v3385 = vld [vmem:[#allocation19 + $0x2f4] sm:$0xff]
    %v3386 = vld [vmem:[#allocation19 + $0x2fc] sm:$0xff]
    %v3387 = vld [vmem:[#allocation19 + $0x304] sm:$0xff]
    %v3388 = vld [vmem:[#allocation19 + $0x30c] sm:$0xff]
    %v3389 = vld [vmem:[#allocation19 + $0x314] sm:$0xf]
    %v3390 = vld [vmem:[#allocation19 + $0x318] sm:$0xff]
    %v3391 = vld [vmem:[#allocation19 + $0x320] sm:$0xff]
    %v3392 = vld [vmem:[#allocation19 + $0x328] sm:$0xff]
    %v3393 = vld [vmem:[#allocation19 + $0x330] sm:$0xff]
    %v3394 = vld [vmem:[#allocation19 + $0x338] sm:$0xf]
    %v3395 = vld [vmem:[#allocation19 + $0x33c] sm:$0xff]
    %v3396 = vld [vmem:[#allocation19 + $0x344] sm:$0xff]
    %v3397 = vld [vmem:[#allocation19 + $0x34c] sm:$0xff]
    %v3398 = vld [vmem:[#allocation19 + $0x354] sm:$0xff]
    %v3399 = vld [vmem:[#allocation19 + $0x35c] sm:$0xf]
    %v3400 = vld [vmem:[#allocation19 + $0x360] sm:$0xff]
    %v3401 = vld [vmem:[#allocation19 + $0x368] sm:$0xff]
    %v3402 = vld [vmem:[#allocation19 + $0x370] sm:$0xff]
    %v3403 = vld [vmem:[#allocation19 + $0x378] sm:$0xff]
    %v3404 = vld [vmem:[#allocation19 + $0x380] sm:$0xf]
    %v3405 = vld [vmem:[#allocation19 + $0x384] sm:$0xff]
    %v3406 = vld [vmem:[#allocation19 + $0x38c] sm:$0xff]
    %v3407 = vld [vmem:[#allocation19 + $0x394] sm:$0xff]
    %v3408 = vld [vmem:[#allocation19 + $0x39c] sm:$0xff]
    %v3409 = vld [vmem:[#allocation19 + $0x3a4] sm:$0xf]
    %v3410 = vld [vmem:[#allocation19 + $0x3a8] sm:$0xff]
    %v3411 = vld [vmem:[#allocation19 + $0x3b0] sm:$0xff]
    %v3412 = vld [vmem:[#allocation19 + $0x3b8] sm:$0xff]
    %v3413 = vld [vmem:[#allocation19 + $0x3c0] sm:$0xff]
    %v3414 = vld [vmem:[#allocation19 + $0x3c8] sm:$0xf]
    %v3415 = vld [vmem:[#allocation19 + $0x3cc] sm:$0xff]
    %v3416 = vld [vmem:[#allocation19 + $0x3d4] sm:$0xff]
    %v3417 = vld [vmem:[#allocation19 + $0x3dc] sm:$0xff]
    %v3418 = vld [vmem:[#allocation19 + $0x3e4] sm:$0xff]
    %v3419 = vld [vmem:[#allocation19 + $0x3ec] sm:$0xf]
    %v3420 = vld [vmem:[#allocation19 + $0x3f0] sm:$0xff]
    %v3421 = vld [vmem:[#allocation19 + $0x3f8] sm:$0xff]
    %v3422 = vld [vmem:[#allocation19 + $0x400] sm:$0xff]
    %v3423 = vld [vmem:[#allocation19 + $0x408] sm:$0xff]
    %v3424 = vld [vmem:[#allocation19 + $0x410] sm:$0xf]
    %v3425 = vld [vmem:[#allocation19 + $0x414] sm:$0xff]
    %v3426 = vld [vmem:[#allocation19 + $0x41c] sm:$0xff]
    %v3427 = vld [vmem:[#allocation19 + $0x424] sm:$0xff]
    %v3428 = vld [vmem:[#allocation19 + $0x42c] sm:$0xff]
    %v3429 = vld [vmem:[#allocation19 + $0x434] sm:$0xf]
    %v3430 = vld [vmem:[#allocation19 + $0x438] sm:$0xff]
    %v3431 = vld [vmem:[#allocation19 + $0x440] sm:$0xff]
    %v3432 = vld [vmem:[#allocation19 + $0x448] sm:$0xff]
    %v3433 = vld [vmem:[#allocation19 + $0x450] sm:$0xff]
    %v3434 = vld [vmem:[#allocation19 + $0x458] sm:$0xf]
    %v3435 = vld [vmem:[#allocation19 + $0x45c] sm:$0xff]
    %v3436 = vld [vmem:[#allocation19 + $0x464] sm:$0xff]
    %v3437 = vld [vmem:[#allocation19 + $0x46c] sm:$0xff]
    %v3438 = vld [vmem:[#allocation19 + $0x474] sm:$0xff]
    %v3439 = vld [vmem:[#allocation19 + $0x47c] sm:$0xf]
    %v3440 = vld [vmem:[#allocation19 + $0x480] sm:$0xff]
    %v3441 = vld [vmem:[#allocation19 + $0x488] sm:$0xff]
    %v3442 = vld [vmem:[#allocation19 + $0x490] sm:$0xff]
    %v3443 = vld [vmem:[#allocation19 + $0x498] sm:$0xff]
    %v3444 = vld [vmem:[#allocation19 + $0x4a0] sm:$0xf]
    %v3445 = vld [vmem:[#allocation19 + $0x4a4] sm:$0xff]
    %v3446 = vld [vmem:[#allocation19 + $0x4ac] sm:$0xff]
    %v3447 = vld [vmem:[#allocation19 + $0x4b4] sm:$0xff]
    %v3448 = vld [vmem:[#allocation19 + $0x4bc] sm:$0xff]
    %v3449 = vld [vmem:[#allocation19 + $0x4c4] sm:$0xf]
    %v3450 = vld [vmem:[#allocation19 + $0x4c8] sm:$0xff]
    %v3451 = vld [vmem:[#allocation19 + $0x4d0] sm:$0xff]
    %v3452 = vld [vmem:[#allocation19 + $0x4d8] sm:$0xff]
    %v3453 = vld [vmem:[#allocation19 + $0x4e0] sm:$0xff]
    %v3454 = vld [vmem:[#allocation19 + $0x4e8] sm:$0xf]
    %v3455 = vld [vmem:[#allocation19 + $0x4ec] sm:$0xff]
    %v3456 = vld [vmem:[#allocation19 + $0x4f4] sm:$0xff]
    %v3457 = vld [vmem:[#allocation19 + $0x4fc] sm:$0xff]
    %v3458 = vld [vmem:[#allocation19 + $0x504] sm:$0xff]
    %v3459 = vld [vmem:[#allocation19 + $0x50c] sm:$0xf]
    %v3460 = vld [vmem:[#allocation19 + $0x510] sm:$0xff]
    %v3461 = vld [vmem:[#allocation19 + $0x518] sm:$0xff]
    %v3462 = vld [vmem:[#allocation19 + $0x520] sm:$0xff]
    %v3463 = vld [vmem:[#allocation19 + $0x528] sm:$0xff]
    %v3464 = vld [vmem:[#allocation19 + $0x530] sm:$0xf]
    %v3465 = vld [vmem:[#allocation19 + $0x534] sm:$0xff]
    %v3466 = vld [vmem:[#allocation19 + $0x53c] sm:$0xff]
    %v3467 = vld [vmem:[#allocation19 + $0x544] sm:$0xff]
    %v3468 = vld [vmem:[#allocation19 + $0x54c] sm:$0xff]
    %v3469 = vld [vmem:[#allocation19 + $0x554] sm:$0xf]
    %v3470 = vld [vmem:[#allocation19 + $0x558] sm:$0xff]
    %v3471 = vld [vmem:[#allocation19 + $0x560] sm:$0xff]
    %v3472 = vld [vmem:[#allocation19 + $0x568] sm:$0xff]
    %v3473 = vld [vmem:[#allocation19 + $0x570] sm:$0xff]
    %v3474 = vld [vmem:[#allocation19 + $0x578] sm:$0xf]
    %v3475 = vld [vmem:[#allocation19 + $0x57c] sm:$0xff]
    %v3476 = vld [vmem:[#allocation19 + $0x584] sm:$0xff]
    %v3477 = vld [vmem:[#allocation19 + $0x58c] sm:$0xff]
    %v3478 = vld [vmem:[#allocation19 + $0x594] sm:$0xff]
    %v3479 = vld [vmem:[#allocation19 + $0x59c] sm:$0xf]
    %v3480 = vld [vmem:[#allocation19 + $0x5a0] sm:$0xff]
    %v3481 = vld [vmem:[#allocation19 + $0x5a8] sm:$0xff]
    %v3482 = vld [vmem:[#allocation19 + $0x5b0] sm:$0xff]
    %v3483 = vld [vmem:[#allocation19 + $0x5b8] sm:$0xff]
    %v3484 = vld [vmem:[#allocation19 + $0x5c0] sm:$0xf]
    %v3485 = vld [vmem:[#allocation19 + $0x5c4] sm:$0xff]
    %v3486 = vld [vmem:[#allocation19 + $0x5cc] sm:$0xff]
    %v3487 = vld [vmem:[#allocation19 + $0x5d4] sm:$0xff]
    %v3488 = vld [vmem:[#allocation19 + $0x5dc] sm:$0xff]
    %v3489 = vld [vmem:[#allocation19 + $0x5e4] sm:$0xf]
    %v3490 = vld [vmem:[#allocation19 + $0x5e8] sm:$0xff]
    %v3491 = vld [vmem:[#allocation19 + $0x5f0] sm:$0xff]
    %v3492 = vld [vmem:[#allocation19 + $0x5f8] sm:$0xff]
    %v3493 = vld [vmem:[#allocation19 + $0x600] sm:$0xff]
    %v3494 = vld [vmem:[#allocation19 + $0x608] sm:$0xf]
    %v3495 = vld [vmem:[#allocation19 + $0x60c] sm:$0xff]
    %v3496 = vld [vmem:[#allocation19 + $0x614] sm:$0xff]
    %v3497 = vld [vmem:[#allocation19 + $0x61c] sm:$0xff]
    %v3498 = vld [vmem:[#allocation19 + $0x624] sm:$0xff]
    %v3499 = vld [vmem:[#allocation19 + $0x62c] sm:$0xf]
    %v3500 = vld [vmem:[#allocation19 + $0x630] sm:$0xff]
    %v3501 = vld [vmem:[#allocation19 + $0x638] sm:$0xff]
    %v3502 = vld [vmem:[#allocation19 + $0x640] sm:$0xff]
    %v3503 = vld [vmem:[#allocation19 + $0x648] sm:$0xff]
    %v3504 = vld [vmem:[#allocation19 + $0x650] sm:$0xf]
    %v3505 = vld [vmem:[#allocation19 + $0x654] sm:$0xff]
    %v3506 = vld [vmem:[#allocation19 + $0x65c] sm:$0xff]
    %v3507 = vld [vmem:[#allocation19 + $0x664] sm:$0xff]
    %v3508 = vld [vmem:[#allocation19 + $0x66c] sm:$0xff]
    %v3509 = vld [vmem:[#allocation19 + $0x674] sm:$0xf]
    %v3510 = vld [vmem:[#allocation19 + $0x678] sm:$0xff]
    %v3511 = vld [vmem:[#allocation19 + $0x680] sm:$0xff]
    %v3512 = vld [vmem:[#allocation19 + $0x688] sm:$0xff]
    %v3513 = vld [vmem:[#allocation19 + $0x690] sm:$0xff]
    %v3514 = vld [vmem:[#allocation19 + $0x698] sm:$0xf]
    %v3515 = vld [vmem:[#allocation19 + $0x69c] sm:$0xff]
    %v3516 = vld [vmem:[#allocation19 + $0x6a4] sm:$0xff]
    %v3517 = vld [vmem:[#allocation19 + $0x6ac] sm:$0xff]
    %v3518 = vld [vmem:[#allocation19 + $0x6b4] sm:$0xff]
    %v3519 = vld [vmem:[#allocation19 + $0x6bc] sm:$0xf]
    %v3520 = vld [vmem:[#allocation19 + $0x6c0] sm:$0xff]
    %v3521 = vld [vmem:[#allocation19 + $0x6c8] sm:$0xff]
    %v3522 = vld [vmem:[#allocation19 + $0x6d0] sm:$0xff]
    %v3523 = vld [vmem:[#allocation19 + $0x6d8] sm:$0xff]
    %v3524 = vld [vmem:[#allocation19 + $0x6e0] sm:$0xf]
    %v3525 = vld [vmem:[#allocation19 + $0x6e4] sm:$0xff]
    %v3526 = vld [vmem:[#allocation19 + $0x6ec] sm:$0xff]
    %v3527 = vld [vmem:[#allocation19 + $0x6f4] sm:$0xff]
    %v3528 = vld [vmem:[#allocation19 + $0x6fc] sm:$0xff]
    %v3529 = vld [vmem:[#allocation19 + $0x704] sm:$0xf]
    %v3530 = vld [vmem:[#allocation19 + $0x708] sm:$0xff]
    %v3531 = vld [vmem:[#allocation19 + $0x710] sm:$0xff]
    %v3532 = vld [vmem:[#allocation19 + $0x718] sm:$0xff]
    %v3533 = vld [vmem:[#allocation19 + $0x720] sm:$0xff]
    %v3534 = vld [vmem:[#allocation19 + $0x728] sm:$0xf]
    %v3535 = vld [vmem:[#allocation19 + $0x72c] sm:$0xff]
    %v3536 = vld [vmem:[#allocation19 + $0x734] sm:$0xff]
    %v3537 = vld [vmem:[#allocation19 + $0x73c] sm:$0xff]
    %v3538 = vld [vmem:[#allocation19 + $0x744] sm:$0xff]
    %v3539 = vld [vmem:[#allocation19 + $0x74c] sm:$0xf]
    %v3540 = vld [vmem:[#allocation19 + $0x750] sm:$0xff]
    %v3541 = vld [vmem:[#allocation19 + $0x758] sm:$0xff]
    %v3542 = vld [vmem:[#allocation19 + $0x760] sm:$0xff]
    %v3543 = vld [vmem:[#allocation19 + $0x768] sm:$0xff]
    %v3544 = vld [vmem:[#allocation19 + $0x770] sm:$0xf]
    %v3545 = vld [vmem:[#allocation19 + $0x774] sm:$0xff]
    %v3546 = vld [vmem:[#allocation19 + $0x77c] sm:$0xff]
    %v3547 = vld [vmem:[#allocation19 + $0x784] sm:$0xff]
    %v3548 = vld [vmem:[#allocation19 + $0x78c] sm:$0xff]
    %v3549 = vld [vmem:[#allocation19 + $0x794] sm:$0xf]
    %v3550 = vld [vmem:[#allocation19 + $0x798] sm:$0xff]
    %v3551 = vld [vmem:[#allocation19 + $0x7a0] sm:$0xff]
    %v3552 = vld [vmem:[#allocation19 + $0x7a8] sm:$0xff]
    %v3553 = vld [vmem:[#allocation19 + $0x7b0] sm:$0xff]
    %v3554 = vld [vmem:[#allocation19 + $0x7b8] sm:$0xf]
    %v3555 = vld [vmem:[#allocation19 + $0x7bc] sm:$0xff]
    %v3556 = vld [vmem:[#allocation19 + $0x7c4] sm:$0xff]
    %v3557 = vld [vmem:[#allocation19 + $0x7cc] sm:$0xff]
    %v3558 = vld [vmem:[#allocation19 + $0x7d4] sm:$0xff]
    %v3559 = vld [vmem:[#allocation19 + $0x7dc] sm:$0xf]
    %v3560 = vld [vmem:[#allocation19 + $0x7e0] sm:$0xff]
    %v3561 = vld [vmem:[#allocation19 + $0x7e8] sm:$0xff]
    %v3562 = vld [vmem:[#allocation19 + $0x7f0] sm:$0xff]
    %v3563 = vld [vmem:[#allocation19 + $0x7f8] sm:$0xff]
    %v3564 = vld [vmem:[#allocation19 + $0x800] sm:$0xf]
    %v3565 = vld [vmem:[#allocation19 + $0x804] sm:$0xff]
    %v3566 = vld [vmem:[#allocation19 + $0x80c] sm:$0xff]
    %v3567 = vld [vmem:[#allocation19 + $0x814] sm:$0xff]
    %v3568 = vld [vmem:[#allocation19 + $0x81c] sm:$0xff]
    %v3569 = vld [vmem:[#allocation19 + $0x824] sm:$0xf]
    %v3570 = vld [vmem:[#allocation19 + $0x828] sm:$0xff]
    %v3571 = vld [vmem:[#allocation19 + $0x830] sm:$0xff]
    %v3572 = vld [vmem:[#allocation19 + $0x838] sm:$0xff]
    %v3573 = vld [vmem:[#allocation19 + $0x840] sm:$0xff]
    %v3574 = vld [vmem:[#allocation19 + $0x848] sm:$0xf]
    %v3575 = vld [vmem:[#allocation19 + $0x84c] sm:$0xff]
    %v3576 = vld [vmem:[#allocation19 + $0x854] sm:$0xff]
    %v3577 = vld [vmem:[#allocation19 + $0x85c] sm:$0xff]
    %v3578 = vld [vmem:[#allocation19 + $0x864] sm:$0xff]
    %v3579 = vld [vmem:[#allocation19 + $0x86c] sm:$0xf]
    %v3580 = vld [vmem:[#allocation19 + $0x870] sm:$0xff]
    %v3581 = vld [vmem:[#allocation19 + $0x878] sm:$0xff]
    %v3582 = vld [vmem:[#allocation19 + $0x880] sm:$0xff]
    %v3583 = vld [vmem:[#allocation19 + $0x888] sm:$0xff]
    %v3584 = vld [vmem:[#allocation19 + $0x890] sm:$0xf]
    %v3585 = vld [vmem:[#allocation19 + $0x894] sm:$0xff]
    %v3586 = vld [vmem:[#allocation19 + $0x89c] sm:$0xff]
    %v3587 = vld [vmem:[#allocation19 + $0x8a4] sm:$0xff]
    %v3588 = vld [vmem:[#allocation19 + $0x8ac] sm:$0xff]
    %v3589 = vld [vmem:[#allocation19 + $0x8b4] sm:$0xf]
    %v3590 = vld [vmem:[#allocation19 + $0x8b8] sm:$0xff]
    %v3591 = vld [vmem:[#allocation19 + $0x8c0] sm:$0xff]
    %v3592 = vld [vmem:[#allocation19 + $0x8c8] sm:$0xff]
    %v3593 = vld [vmem:[#allocation19 + $0x8d0] sm:$0xff]
    %v3594 = vld [vmem:[#allocation19 + $0x8d8] sm:$0xf]
    %v3595 = vld [vmem:[#allocation19 + $0x8dc] sm:$0xff]
    %v3596 = vld [vmem:[#allocation19 + $0x8e4] sm:$0xff]
    %v3597 = vld [vmem:[#allocation19 + $0x8ec] sm:$0xff]
    %v3598 = vld [vmem:[#allocation19 + $0x8f4] sm:$0xff]
    %v3599 = vld [vmem:[#allocation19 + $0x8fc] sm:$0xf]
    %v3600 = vld [vmem:[#allocation20] sm:$0xff]
    %v3601 = vld [vmem:[#allocation20 + $0x8] sm:$0x1]
    %v3604 = vlaneseq
    %v3605 = vshrl.u32 %v3604, 7
    %v3606 = vsub.s32 0, %v3605
    %v3607 = vrot.slane %v3600, %v3606
    %v3608 = vlaneseq
    %v3609 = vshrl.u32 %v3608, 7
    %v3610 = vsub.s32 1, %v3609
    %v3611 = vrot.slane %v3600, %v3610
    %v3612 = vlaneseq
    %v3613 = vshrl.u32 %v3612, 7
    %v3614 = vsub.s32 2, %v3613
    %v3615 = vrot.slane %v3600, %v3614
    %v3616 = vlaneseq
    %v3617 = vshrl.u32 %v3616, 7
    %v3618 = vsub.s32 3, %v3617
    %v3619 = vrot.slane %v3600, %v3618
    %v3620 = vlaneseq
    %v3621 = vshrl.u32 %v3620, 7
    %v3622 = vsub.s32 4, %v3621
    %v3623 = vrot.slane %v3600, %v3622
    %v3624 = vlaneseq
    %v3625 = vshrl.u32 %v3624, 7
    %v3626 = vsub.s32 5, %v3625
    %v3627 = vrot.slane %v3600, %v3626
    %v3628 = vlaneseq
    %v3629 = vshrl.u32 %v3628, 7
    %v3630 = vsub.s32 6, %v3629
    %v3631 = vrot.slane %v3600, %v3630
    %v3632 = vlaneseq
    %v3633 = vshrl.u32 %v3632, 7
    %v3634 = vsub.s32 7, %v3633
    %v3635 = vrot.slane %v3600, %v3634
    %v3636 = vlaneseq
    %v3637 = vshrl.u32 %v3636, 7
    %v3638 = vsub.s32 0, %v3637
    %v3639 = vrot.slane %v3601, %v3638
    %v3969 = vunpack.c.l.b16 %v3280
    %v3970 = vunpack.c.h.b16 %v3280
    %v3971 = vunpack.c.l.b16 %v3281
    %v3972 = vunpack.c.h.b16 %v3281
    %v3973 = vunpack.c.l.b16 %v3282
    %v3974 = vunpack.c.h.b16 %v3282
    %v3975 = vunpack.c.l.b16 %v3283
    %v3976 = vunpack.c.h.b16 %v3283
    %v3977 = vunpack.c.l.b16 %v3284
    %v3978 = vunpack.c.l.b16 %v3285
    %v3979 = vunpack.c.h.b16 %v3285
    %v3980 = vunpack.c.l.b16 %v3286
    %v3981 = vunpack.c.h.b16 %v3286
    %v3982 = vunpack.c.l.b16 %v3287
    %v3983 = vunpack.c.h.b16 %v3287
    %v3984 = vunpack.c.l.b16 %v3288
    %v3985 = vunpack.c.h.b16 %v3288
    %v3986 = vunpack.c.l.b16 %v3289
    %v3987 = vunpack.c.l.b16 %v3290
    %v3988 = vunpack.c.h.b16 %v3290
    %v3989 = vunpack.c.l.b16 %v3291
    %v3990 = vunpack.c.h.b16 %v3291
    %v3991 = vunpack.c.l.b16 %v3292
    %v3992 = vunpack.c.h.b16 %v3292
    %v3993 = vunpack.c.l.b16 %v3293
    %v3994 = vunpack.c.h.b16 %v3293
    %v3995 = vunpack.c.l.b16 %v3294
    %v3996 = vunpack.c.l.b16 %v3295
    %v3997 = vunpack.c.h.b16 %v3295
    %v3998 = vunpack.c.l.b16 %v3296
    %v3999 = vunpack.c.h.b16 %v3296
    %v4000 = vunpack.c.l.b16 %v3297
    %v4001 = vunpack.c.h.b16 %v3297
    %v4002 = vunpack.c.l.b16 %v3298
    %v4003 = vunpack.c.h.b16 %v3298
    %v4004 = vunpack.c.l.b16 %v3299
    %v4005 = vunpack.c.l.b16 %v3300
    %v4006 = vunpack.c.h.b16 %v3300
    %v4007 = vunpack.c.l.b16 %v3301
    %v4008 = vunpack.c.h.b16 %v3301
    %v4009 = vunpack.c.l.b16 %v3302
    %v4010 = vunpack.c.h.b16 %v3302
    %v4011 = vunpack.c.l.b16 %v3303
    %v4012 = vunpack.c.h.b16 %v3303
    %v4013 = vunpack.c.l.b16 %v3304
    %v4014 = vunpack.c.l.b16 %v3305
    %v4015 = vunpack.c.h.b16 %v3305
    %v4016 = vunpack.c.l.b16 %v3306
    %v4017 = vunpack.c.h.b16 %v3306
    %v4018 = vunpack.c.l.b16 %v3307
    %v4019 = vunpack.c.h.b16 %v3307
    %v4020 = vunpack.c.l.b16 %v3308
    %v4021 = vunpack.c.h.b16 %v3308
    %v4022 = vunpack.c.l.b16 %v3309
    %v4023 = vunpack.c.l.b16 %v3310
    %v4024 = vunpack.c.h.b16 %v3310
    %v4025 = vunpack.c.l.b16 %v3311
    %v4026 = vunpack.c.h.b16 %v3311
    %v4027 = vunpack.c.l.b16 %v3312
    %v4028 = vunpack.c.h.b16 %v3312
    %v4029 = vunpack.c.l.b16 %v3313
    %v4030 = vunpack.c.h.b16 %v3313
    %v4031 = vunpack.c.l.b16 %v3314
    %v4032 = vunpack.c.l.b16 %v3315
    %v4033 = vunpack.c.h.b16 %v3315
    %v4034 = vunpack.c.l.b16 %v3316
    %v4035 = vunpack.c.h.b16 %v3316
    %v4036 = vunpack.c.l.b16 %v3317
    %v4037 = vunpack.c.h.b16 %v3317
    %v4038 = vunpack.c.l.b16 %v3318
    %v4039 = vunpack.c.h.b16 %v3318
    %v4040 = vunpack.c.l.b16 %v3319
    %v4041 = vunpack.c.l.b16 %v3320
    %v4042 = vunpack.c.h.b16 %v3320
    %v4043 = vunpack.c.l.b16 %v3321
    %v4044 = vunpack.c.h.b16 %v3321
    %v4045 = vunpack.c.l.b16 %v3322
    %v4046 = vunpack.c.h.b16 %v3322
    %v4047 = vunpack.c.l.b16 %v3323
    %v4048 = vunpack.c.h.b16 %v3323
    %v4049 = vunpack.c.l.b16 %v3324
    %v4050 = vunpack.c.l.b16 %v3325
    %v4051 = vunpack.c.h.b16 %v3325
    %v4052 = vunpack.c.l.b16 %v3326
    %v4053 = vunpack.c.h.b16 %v3326
    %v4054 = vunpack.c.l.b16 %v3327
    %v4055 = vunpack.c.h.b16 %v3327
    %v4056 = vunpack.c.l.b16 %v3328
    %v4057 = vunpack.c.h.b16 %v3328
    %v4058 = vunpack.c.l.b16 %v3329
    %v4059 = vunpack.c.l.b16 %v3330
    %v4060 = vunpack.c.h.b16 %v3330
    %v4061 = vunpack.c.l.b16 %v3331
    %v4062 = vunpack.c.h.b16 %v3331
    %v4063 = vunpack.c.l.b16 %v3332
    %v4064 = vunpack.c.h.b16 %v3332
    %v4065 = vunpack.c.l.b16 %v3333
    %v4066 = vunpack.c.h.b16 %v3333
    %v4067 = vunpack.c.l.b16 %v3334
    %v4068 = vunpack.c.l.b16 %v3335
    %v4069 = vunpack.c.h.b16 %v3335
    %v4070 = vunpack.c.l.b16 %v3336
    %v4071 = vunpack.c.h.b16 %v3336
    %v4072 = vunpack.c.l.b16 %v3337
    %v4073 = vunpack.c.h.b16 %v3337
    %v4074 = vunpack.c.l.b16 %v3338
    %v4075 = vunpack.c.h.b16 %v3338
    %v4076 = vunpack.c.l.b16 %v3339
    %v4077 = vunpack.c.l.b16 %v3340
    %v4078 = vunpack.c.h.b16 %v3340
    %v4079 = vunpack.c.l.b16 %v3341
    %v4080 = vunpack.c.h.b16 %v3341
    %v4081 = vunpack.c.l.b16 %v3342
    %v4082 = vunpack.c.h.b16 %v3342
    %v4083 = vunpack.c.l.b16 %v3343
    %v4084 = vunpack.c.h.b16 %v3343
    %v4085 = vunpack.c.l.b16 %v3344
    %v4086 = vunpack.c.l.b16 %v3345
    %v4087 = vunpack.c.h.b16 %v3345
    %v4088 = vunpack.c.l.b16 %v3346
    %v4089 = vunpack.c.h.b16 %v3346
    %v4090 = vunpack.c.l.b16 %v3347
    %v4091 = vunpack.c.h.b16 %v3347
    %v4092 = vunpack.c.l.b16 %v3348
    %v4093 = vunpack.c.h.b16 %v3348
    %v4094 = vunpack.c.l.b16 %v3349
    %v4095 = vunpack.c.l.b16 %v3350
    %v4096 = vunpack.c.h.b16 %v3350
    %v4097 = vunpack.c.l.b16 %v3351
    %v4098 = vunpack.c.h.b16 %v3351
    %v4099 = vunpack.c.l.b16 %v3352
    %v4100 = vunpack.c.h.b16 %v3352
    %v4101 = vunpack.c.l.b16 %v3353
    %v4102 = vunpack.c.h.b16 %v3353
    %v4103 = vunpack.c.l.b16 %v3354
    %v4104 = vunpack.c.l.b16 %v3355
    %v4105 = vunpack.c.h.b16 %v3355
    %v4106 = vunpack.c.l.b16 %v3356
    %v4107 = vunpack.c.h.b16 %v3356
    %v4108 = vunpack.c.l.b16 %v3357
    %v4109 = vunpack.c.h.b16 %v3357
    %v4110 = vunpack.c.l.b16 %v3358
    %v4111 = vunpack.c.h.b16 %v3358
    %v4112 = vunpack.c.l.b16 %v3359
    %v4113 = vunpack.c.l.b16 %v3360
    %v4114 = vunpack.c.h.b16 %v3360
    %v4115 = vunpack.c.l.b16 %v3361
    %v4116 = vunpack.c.h.b16 %v3361
    %v4117 = vunpack.c.l.b16 %v3362
    %v4118 = vunpack.c.h.b16 %v3362
    %v4119 = vunpack.c.l.b16 %v3363
    %v4120 = vunpack.c.h.b16 %v3363
    %v4121 = vunpack.c.l.b16 %v3364
    %v4122 = vunpack.c.l.b16 %v3365
    %v4123 = vunpack.c.h.b16 %v3365
    %v4124 = vunpack.c.l.b16 %v3366
    %v4125 = vunpack.c.h.b16 %v3366
    %v4126 = vunpack.c.l.b16 %v3367
    %v4127 = vunpack.c.h.b16 %v3367
    %v4128 = vunpack.c.l.b16 %v3368
    %v4129 = vunpack.c.h.b16 %v3368
    %v4130 = vunpack.c.l.b16 %v3369
    %v4131 = vunpack.c.l.b16 %v3370
    %v4132 = vunpack.c.h.b16 %v3370
    %v4133 = vunpack.c.l.b16 %v3371
    %v4134 = vunpack.c.h.b16 %v3371
    %v4135 = vunpack.c.l.b16 %v3372
    %v4136 = vunpack.c.h.b16 %v3372
    %v4137 = vunpack.c.l.b16 %v3373
    %v4138 = vunpack.c.h.b16 %v3373
    %v4139 = vunpack.c.l.b16 %v3374
    %v4140 = vunpack.c.l.b16 %v3375
    %v4141 = vunpack.c.h.b16 %v3375
    %v4142 = vunpack.c.l.b16 %v3376
    %v4143 = vunpack.c.h.b16 %v3376
    %v4144 = vunpack.c.l.b16 %v3377
    %v4145 = vunpack.c.h.b16 %v3377
    %v4146 = vunpack.c.l.b16 %v3378
    %v4147 = vunpack.c.h.b16 %v3378
    %v4148 = vunpack.c.l.b16 %v3379
    %v4149 = vunpack.c.l.b16 %v3380
    %v4150 = vunpack.c.h.b16 %v3380
    %v4151 = vunpack.c.l.b16 %v3381
    %v4152 = vunpack.c.h.b16 %v3381
    %v4153 = vunpack.c.l.b16 %v3382
    %v4154 = vunpack.c.h.b16 %v3382
    %v4155 = vunpack.c.l.b16 %v3383
    %v4156 = vunpack.c.h.b16 %v3383
    %v4157 = vunpack.c.l.b16 %v3384
    %v4158 = vunpack.c.l.b16 %v3385
    %v4159 = vunpack.c.h.b16 %v3385
    %v4160 = vunpack.c.l.b16 %v3386
    %v4161 = vunpack.c.h.b16 %v3386
    %v4162 = vunpack.c.l.b16 %v3387
    %v4163 = vunpack.c.h.b16 %v3387
    %v4164 = vunpack.c.l.b16 %v3388
    %v4165 = vunpack.c.h.b16 %v3388
    %v4166 = vunpack.c.l.b16 %v3389
    %v4167 = vunpack.c.l.b16 %v3390
    %v4168 = vunpack.c.h.b16 %v3390
    %v4169 = vunpack.c.l.b16 %v3391
    %v4170 = vunpack.c.h.b16 %v3391
    %v4171 = vunpack.c.l.b16 %v3392
    %v4172 = vunpack.c.h.b16 %v3392
    %v4173 = vunpack.c.l.b16 %v3393
    %v4174 = vunpack.c.h.b16 %v3393
    %v4175 = vunpack.c.l.b16 %v3394
    %v4176 = vunpack.c.l.b16 %v3395
    %v4177 = vunpack.c.h.b16 %v3395
    %v4178 = vunpack.c.l.b16 %v3396
    %v4179 = vunpack.c.h.b16 %v3396
    %v4180 = vunpack.c.l.b16 %v3397
    %v4181 = vunpack.c.h.b16 %v3397
    %v4182 = vunpack.c.l.b16 %v3398
    %v4183 = vunpack.c.h.b16 %v3398
    %v4184 = vunpack.c.l.b16 %v3399
    %v4185 = vunpack.c.l.b16 %v3400
    %v4186 = vunpack.c.h.b16 %v3400
    %v4187 = vunpack.c.l.b16 %v3401
    %v4188 = vunpack.c.h.b16 %v3401
    %v4189 = vunpack.c.l.b16 %v3402
    %v4190 = vunpack.c.h.b16 %v3402
    %v4191 = vunpack.c.l.b16 %v3403
    %v4192 = vunpack.c.h.b16 %v3403
    %v4193 = vunpack.c.l.b16 %v3404
    %v4194 = vunpack.c.l.b16 %v3405
    %v4195 = vunpack.c.h.b16 %v3405
    %v4196 = vunpack.c.l.b16 %v3406
    %v4197 = vunpack.c.h.b16 %v3406
    %v4198 = vunpack.c.l.b16 %v3407
    %v4199 = vunpack.c.h.b16 %v3407
    %v4200 = vunpack.c.l.b16 %v3408
    %v4201 = vunpack.c.h.b16 %v3408
    %v4202 = vunpack.c.l.b16 %v3409
    %v4203 = vunpack.c.l.b16 %v3410
    %v4204 = vunpack.c.h.b16 %v3410
    %v4205 = vunpack.c.l.b16 %v3411
    %v4206 = vunpack.c.h.b16 %v3411
    %v4207 = vunpack.c.l.b16 %v3412
    %v4208 = vunpack.c.h.b16 %v3412
    %v4209 = vunpack.c.l.b16 %v3413
    %v4210 = vunpack.c.h.b16 %v3413
    %v4211 = vunpack.c.l.b16 %v3414
    %v4212 = vunpack.c.l.b16 %v3415
    %v4213 = vunpack.c.h.b16 %v3415
    %v4214 = vunpack.c.l.b16 %v3416
    %v4215 = vunpack.c.h.b16 %v3416
    %v4216 = vunpack.c.l.b16 %v3417
    %v4217 = vunpack.c.h.b16 %v3417
    %v4218 = vunpack.c.l.b16 %v3418
    %v4219 = vunpack.c.h.b16 %v3418
    %v4220 = vunpack.c.l.b16 %v3419
    %v4221 = vunpack.c.l.b16 %v3420
    %v4222 = vunpack.c.h.b16 %v3420
    %v4223 = vunpack.c.l.b16 %v3421
    %v4224 = vunpack.c.h.b16 %v3421
    %v4225 = vunpack.c.l.b16 %v3422
    %v4226 = vunpack.c.h.b16 %v3422
    %v4227 = vunpack.c.l.b16 %v3423
    %v4228 = vunpack.c.h.b16 %v3423
    %v4229 = vunpack.c.l.b16 %v3424
    %v4230 = vunpack.c.l.b16 %v3425
    %v4231 = vunpack.c.h.b16 %v3425
    %v4232 = vunpack.c.l.b16 %v3426
    %v4233 = vunpack.c.h.b16 %v3426
    %v4234 = vunpack.c.l.b16 %v3427
    %v4235 = vunpack.c.h.b16 %v3427
    %v4236 = vunpack.c.l.b16 %v3428
    %v4237 = vunpack.c.h.b16 %v3428
    %v4238 = vunpack.c.l.b16 %v3429
    %v4239 = vunpack.c.l.b16 %v3430
    %v4240 = vunpack.c.h.b16 %v3430
    %v4241 = vunpack.c.l.b16 %v3431
    %v4242 = vunpack.c.h.b16 %v3431
    %v4243 = vunpack.c.l.b16 %v3432
    %v4244 = vunpack.c.h.b16 %v3432
    %v4245 = vunpack.c.l.b16 %v3433
    %v4246 = vunpack.c.h.b16 %v3433
    %v4247 = vunpack.c.l.b16 %v3434
    %v4248 = vunpack.c.l.b16 %v3435
    %v4249 = vunpack.c.h.b16 %v3435
    %v4250 = vunpack.c.l.b16 %v3436
    %v4251 = vunpack.c.h.b16 %v3436
    %v4252 = vunpack.c.l.b16 %v3437
    %v4253 = vunpack.c.h.b16 %v3437
    %v4254 = vunpack.c.l.b16 %v3438
    %v4255 = vunpack.c.h.b16 %v3438
    %v4256 = vunpack.c.l.b16 %v3439
    %v4257 = vunpack.c.l.b16 %v3440
    %v4258 = vunpack.c.h.b16 %v3440
    %v4259 = vunpack.c.l.b16 %v3441
    %v4260 = vunpack.c.h.b16 %v3441
    %v4261 = vunpack.c.l.b16 %v3442
    %v4262 = vunpack.c.h.b16 %v3442
    %v4263 = vunpack.c.l.b16 %v3443
    %v4264 = vunpack.c.h.b16 %v3443
    %v4265 = vunpack.c.l.b16 %v3444
    %v4266 = vunpack.c.l.b16 %v3445
    %v4267 = vunpack.c.h.b16 %v3445
    %v4268 = vunpack.c.l.b16 %v3446
    %v4269 = vunpack.c.h.b16 %v3446
    %v4270 = vunpack.c.l.b16 %v3447
    %v4271 = vunpack.c.h.b16 %v3447
    %v4272 = vunpack.c.l.b16 %v3448
    %v4273 = vunpack.c.h.b16 %v3448
    %v4274 = vunpack.c.l.b16 %v3449
    %v4275 = vunpack.c.l.b16 %v3450
    %v4276 = vunpack.c.h.b16 %v3450
    %v4277 = vunpack.c.l.b16 %v3451
    %v4278 = vunpack.c.h.b16 %v3451
    %v4279 = vunpack.c.l.b16 %v3452
    %v4280 = vunpack.c.h.b16 %v3452
    %v4281 = vunpack.c.l.b16 %v3453
    %v4282 = vunpack.c.h.b16 %v3453
    %v4283 = vunpack.c.l.b16 %v3454
    %v4284 = vunpack.c.l.b16 %v3455
    %v4285 = vunpack.c.h.b16 %v3455
    %v4286 = vunpack.c.l.b16 %v3456
    %v4287 = vunpack.c.h.b16 %v3456
    %v4288 = vunpack.c.l.b16 %v3457
    %v4289 = vunpack.c.h.b16 %v3457
    %v4290 = vunpack.c.l.b16 %v3458
    %v4291 = vunpack.c.h.b16 %v3458
    %v4292 = vunpack.c.l.b16 %v3459
    %v4293 = vunpack.c.l.b16 %v3460
    %v4294 = vunpack.c.h.b16 %v3460
    %v4295 = vunpack.c.l.b16 %v3461
    %v4296 = vunpack.c.h.b16 %v3461
    %v4297 = vunpack.c.l.b16 %v3462
    %v4298 = vunpack.c.h.b16 %v3462
    %v4299 = vunpack.c.l.b16 %v3463
    %v4300 = vunpack.c.h.b16 %v3463
    %v4301 = vunpack.c.l.b16 %v3464
    %v4302 = vunpack.c.l.b16 %v3465
    %v4303 = vunpack.c.h.b16 %v3465
    %v4304 = vunpack.c.l.b16 %v3466
    %v4305 = vunpack.c.h.b16 %v3466
    %v4306 = vunpack.c.l.b16 %v3467
    %v4307 = vunpack.c.h.b16 %v3467
    %v4308 = vunpack.c.l.b16 %v3468
    %v4309 = vunpack.c.h.b16 %v3468
    %v4310 = vunpack.c.l.b16 %v3469
    %v4311 = vunpack.c.l.b16 %v3470
    %v4312 = vunpack.c.h.b16 %v3470
    %v4313 = vunpack.c.l.b16 %v3471
    %v4314 = vunpack.c.h.b16 %v3471
    %v4315 = vunpack.c.l.b16 %v3472
    %v4316 = vunpack.c.h.b16 %v3472
    %v4317 = vunpack.c.l.b16 %v3473
    %v4318 = vunpack.c.h.b16 %v3473
    %v4319 = vunpack.c.l.b16 %v3474
    %v4320 = vunpack.c.l.b16 %v3475
    %v4321 = vunpack.c.h.b16 %v3475
    %v4322 = vunpack.c.l.b16 %v3476
    %v4323 = vunpack.c.h.b16 %v3476
    %v4324 = vunpack.c.l.b16 %v3477
    %v4325 = vunpack.c.h.b16 %v3477
    %v4326 = vunpack.c.l.b16 %v3478
    %v4327 = vunpack.c.h.b16 %v3478
    %v4328 = vunpack.c.l.b16 %v3479
    %v4329 = vunpack.c.l.b16 %v3480
    %v4330 = vunpack.c.h.b16 %v3480
    %v4331 = vunpack.c.l.b16 %v3481
    %v4332 = vunpack.c.h.b16 %v3481
    %v4333 = vunpack.c.l.b16 %v3482
    %v4334 = vunpack.c.h.b16 %v3482
    %v4335 = vunpack.c.l.b16 %v3483
    %v4336 = vunpack.c.h.b16 %v3483
    %v4337 = vunpack.c.l.b16 %v3484
    %v4338 = vunpack.c.l.b16 %v3485
    %v4339 = vunpack.c.h.b16 %v3485
    %v4340 = vunpack.c.l.b16 %v3486
    %v4341 = vunpack.c.h.b16 %v3486
    %v4342 = vunpack.c.l.b16 %v3487
    %v4343 = vunpack.c.h.b16 %v3487
    %v4344 = vunpack.c.l.b16 %v3488
    %v4345 = vunpack.c.h.b16 %v3488
    %v4346 = vunpack.c.l.b16 %v3489
    %v4347 = vunpack.c.l.b16 %v3490
    %v4348 = vunpack.c.h.b16 %v3490
    %v4349 = vunpack.c.l.b16 %v3491
    %v4350 = vunpack.c.h.b16 %v3491
    %v4351 = vunpack.c.l.b16 %v3492
    %v4352 = vunpack.c.h.b16 %v3492
    %v4353 = vunpack.c.l.b16 %v3493
    %v4354 = vunpack.c.h.b16 %v3493
    %v4355 = vunpack.c.l.b16 %v3494
    %v4356 = vunpack.c.l.b16 %v3495
    %v4357 = vunpack.c.h.b16 %v3495
    %v4358 = vunpack.c.l.b16 %v3496
    %v4359 = vunpack.c.h.b16 %v3496
    %v4360 = vunpack.c.l.b16 %v3497
    %v4361 = vunpack.c.h.b16 %v3497
    %v4362 = vunpack.c.l.b16 %v3498
    %v4363 = vunpack.c.h.b16 %v3498
    %v4364 = vunpack.c.l.b16 %v3499
    %v4365 = vunpack.c.l.b16 %v3500
    %v4366 = vunpack.c.h.b16 %v3500
    %v4367 = vunpack.c.l.b16 %v3501
    %v4368 = vunpack.c.h.b16 %v3501
    %v4369 = vunpack.c.l.b16 %v3502
    %v4370 = vunpack.c.h.b16 %v3502
    %v4371 = vunpack.c.l.b16 %v3503
    %v4372 = vunpack.c.h.b16 %v3503
    %v4373 = vunpack.c.l.b16 %v3504
    %v4374 = vunpack.c.l.b16 %v3505
    %v4375 = vunpack.c.h.b16 %v3505
    %v4376 = vunpack.c.l.b16 %v3506
    %v4377 = vunpack.c.h.b16 %v3506
    %v4378 = vunpack.c.l.b16 %v3507
    %v4379 = vunpack.c.h.b16 %v3507
    %v4380 = vunpack.c.l.b16 %v3508
    %v4381 = vunpack.c.h.b16 %v3508
    %v4382 = vunpack.c.l.b16 %v3509
    %v4383 = vunpack.c.l.b16 %v3510
    %v4384 = vunpack.c.h.b16 %v3510
    %v4385 = vunpack.c.l.b16 %v3511
    %v4386 = vunpack.c.h.b16 %v3511
    %v4387 = vunpack.c.l.b16 %v3512
    %v4388 = vunpack.c.h.b16 %v3512
    %v4389 = vunpack.c.l.b16 %v3513
    %v4390 = vunpack.c.h.b16 %v3513
    %v4391 = vunpack.c.l.b16 %v3514
    %v4392 = vunpack.c.l.b16 %v3515
    %v4393 = vunpack.c.h.b16 %v3515
    %v4394 = vunpack.c.l.b16 %v3516
    %v4395 = vunpack.c.h.b16 %v3516
    %v4396 = vunpack.c.l.b16 %v3517
    %v4397 = vunpack.c.h.b16 %v3517
    %v4398 = vunpack.c.l.b16 %v3518
    %v4399 = vunpack.c.h.b16 %v3518
    %v4400 = vunpack.c.l.b16 %v3519
    %v4401 = vunpack.c.l.b16 %v3520
    %v4402 = vunpack.c.h.b16 %v3520
    %v4403 = vunpack.c.l.b16 %v3521
    %v4404 = vunpack.c.h.b16 %v3521
    %v4405 = vunpack.c.l.b16 %v3522
    %v4406 = vunpack.c.h.b16 %v3522
    %v4407 = vunpack.c.l.b16 %v3523
    %v4408 = vunpack.c.h.b16 %v3523
    %v4409 = vunpack.c.l.b16 %v3524
    %v4410 = vunpack.c.l.b16 %v3525
    %v4411 = vunpack.c.h.b16 %v3525
    %v4412 = vunpack.c.l.b16 %v3526
    %v4413 = vunpack.c.h.b16 %v3526
    %v4414 = vunpack.c.l.b16 %v3527
    %v4415 = vunpack.c.h.b16 %v3527
    %v4416 = vunpack.c.l.b16 %v3528
    %v4417 = vunpack.c.h.b16 %v3528
    %v4418 = vunpack.c.l.b16 %v3529
    %v4419 = vunpack.c.l.b16 %v3530
    %v4420 = vunpack.c.h.b16 %v3530
    %v4421 = vunpack.c.l.b16 %v3531
    %v4422 = vunpack.c.h.b16 %v3531
    %v4423 = vunpack.c.l.b16 %v3532
    %v4424 = vunpack.c.h.b16 %v3532
    %v4425 = vunpack.c.l.b16 %v3533
    %v4426 = vunpack.c.h.b16 %v3533
    %v4427 = vunpack.c.l.b16 %v3534
    %v4428 = vunpack.c.l.b16 %v3535
    %v4429 = vunpack.c.h.b16 %v3535
    %v4430 = vunpack.c.l.b16 %v3536
    %v4431 = vunpack.c.h.b16 %v3536
    %v4432 = vunpack.c.l.b16 %v3537
    %v4433 = vunpack.c.h.b16 %v3537
    %v4434 = vunpack.c.l.b16 %v3538
    %v4435 = vunpack.c.h.b16 %v3538
    %v4436 = vunpack.c.l.b16 %v3539
    %v4437 = vunpack.c.l.b16 %v3540
    %v4438 = vunpack.c.h.b16 %v3540
    %v4439 = vunpack.c.l.b16 %v3541
    %v4440 = vunpack.c.h.b16 %v3541
    %v4441 = vunpack.c.l.b16 %v3542
    %v4442 = vunpack.c.h.b16 %v3542
    %v4443 = vunpack.c.l.b16 %v3543
    %v4444 = vunpack.c.h.b16 %v3543
    %v4445 = vunpack.c.l.b16 %v3544
    %v4446 = vunpack.c.l.b16 %v3545
    %v4447 = vunpack.c.h.b16 %v3545
    %v4448 = vunpack.c.l.b16 %v3546
    %v4449 = vunpack.c.h.b16 %v3546
    %v4450 = vunpack.c.l.b16 %v3547
    %v4451 = vunpack.c.h.b16 %v3547
    %v4452 = vunpack.c.l.b16 %v3548
    %v4453 = vunpack.c.h.b16 %v3548
    %v4454 = vunpack.c.l.b16 %v3549
    %v4455 = vunpack.c.l.b16 %v3550
    %v4456 = vunpack.c.h.b16 %v3550
    %v4457 = vunpack.c.l.b16 %v3551
    %v4458 = vunpack.c.h.b16 %v3551
    %v4459 = vunpack.c.l.b16 %v3552
    %v4460 = vunpack.c.h.b16 %v3552
    %v4461 = vunpack.c.l.b16 %v3553
    %v4462 = vunpack.c.h.b16 %v3553
    %v4463 = vunpack.c.l.b16 %v3554
    %v4464 = vunpack.c.l.b16 %v3555
    %v4465 = vunpack.c.h.b16 %v3555
    %v4466 = vunpack.c.l.b16 %v3556
    %v4467 = vunpack.c.h.b16 %v3556
    %v4468 = vunpack.c.l.b16 %v3557
    %v4469 = vunpack.c.h.b16 %v3557
    %v4470 = vunpack.c.l.b16 %v3558
    %v4471 = vunpack.c.h.b16 %v3558
    %v4472 = vunpack.c.l.b16 %v3559
    %v4473 = vunpack.c.l.b16 %v3560
    %v4474 = vunpack.c.h.b16 %v3560
    %v4475 = vunpack.c.l.b16 %v3561
    %v4476 = vunpack.c.h.b16 %v3561
    %v4477 = vunpack.c.l.b16 %v3562
    %v4478 = vunpack.c.h.b16 %v3562
    %v4479 = vunpack.c.l.b16 %v3563
    %v4480 = vunpack.c.h.b16 %v3563
    %v4481 = vunpack.c.l.b16 %v3564
    %v4482 = vunpack.c.l.b16 %v3565
    %v4483 = vunpack.c.h.b16 %v3565
    %v4484 = vunpack.c.l.b16 %v3566
    %v4485 = vunpack.c.h.b16 %v3566
    %v4486 = vunpack.c.l.b16 %v3567
    %v4487 = vunpack.c.h.b16 %v3567
    %v4488 = vunpack.c.l.b16 %v3568
    %v4489 = vunpack.c.h.b16 %v3568
    %v4490 = vunpack.c.l.b16 %v3569
    %v4491 = vunpack.c.l.b16 %v3570
    %v4492 = vunpack.c.h.b16 %v3570
    %v4493 = vunpack.c.l.b16 %v3571
    %v4494 = vunpack.c.h.b16 %v3571
    %v4495 = vunpack.c.l.b16 %v3572
    %v4496 = vunpack.c.h.b16 %v3572
    %v4497 = vunpack.c.l.b16 %v3573
    %v4498 = vunpack.c.h.b16 %v3573
    %v4499 = vunpack.c.l.b16 %v3574
    %v4500 = vunpack.c.l.b16 %v3575
    %v4501 = vunpack.c.h.b16 %v3575
    %v4502 = vunpack.c.l.b16 %v3576
    %v4503 = vunpack.c.h.b16 %v3576
    %v4504 = vunpack.c.l.b16 %v3577
    %v4505 = vunpack.c.h.b16 %v3577
    %v4506 = vunpack.c.l.b16 %v3578
    %v4507 = vunpack.c.h.b16 %v3578
    %v4508 = vunpack.c.l.b16 %v3579
    %v4509 = vunpack.c.l.b16 %v3580
    %v4510 = vunpack.c.h.b16 %v3580
    %v4511 = vunpack.c.l.b16 %v3581
    %v4512 = vunpack.c.h.b16 %v3581
    %v4513 = vunpack.c.l.b16 %v3582
    %v4514 = vunpack.c.h.b16 %v3582
    %v4515 = vunpack.c.l.b16 %v3583
    %v4516 = vunpack.c.h.b16 %v3583
    %v4517 = vunpack.c.l.b16 %v3584
    %v4518 = vunpack.c.l.b16 %v3585
    %v4519 = vunpack.c.h.b16 %v3585
    %v4520 = vunpack.c.l.b16 %v3586
    %v4521 = vunpack.c.h.b16 %v3586
    %v4522 = vunpack.c.l.b16 %v3587
    %v4523 = vunpack.c.h.b16 %v3587
    %v4524 = vunpack.c.l.b16 %v3588
    %v4525 = vunpack.c.h.b16 %v3588
    %v4526 = vunpack.c.l.b16 %v3589
    %v4527 = vunpack.c.l.b16 %v3590
    %v4528 = vunpack.c.h.b16 %v3590
    %v4529 = vunpack.c.l.b16 %v3591
    %v4530 = vunpack.c.h.b16 %v3591
    %v4531 = vunpack.c.l.b16 %v3592
    %v4532 = vunpack.c.h.b16 %v3592
    %v4533 = vunpack.c.l.b16 %v3593
    %v4534 = vunpack.c.h.b16 %v3593
    %v4535 = vunpack.c.l.b16 %v3594
    %v4536 = vunpack.c.l.b16 %v3595
    %v4537 = vunpack.c.h.b16 %v3595
    %v4538 = vunpack.c.l.b16 %v3596
    %v4539 = vunpack.c.h.b16 %v3596
    %v4540 = vunpack.c.l.b16 %v3597
    %v4541 = vunpack.c.h.b16 %v3597
    %v4542 = vunpack.c.l.b16 %v3598
    %v4543 = vunpack.c.h.b16 %v3598
    %v4544 = vunpack.c.l.b16 %v3599
    %v4545 = vpack.c.b16 %v3978, %v3969
    %v4546 = vpack.c.b16 %v3979, %v3970
    %v4547 = vpack.c.b16 %v3980, %v3971
    %v4548 = vpack.c.b16 %v3981, %v3972
    %v4549 = vpack.c.b16 %v3982, %v3973
    %v4550 = vpack.c.b16 %v3983, %v3974
    %v4551 = vpack.c.b16 %v3984, %v3975
    %v4552 = vpack.c.b16 %v3985, %v3976
    %v4553 = vpack.c.b16 %v3986, %v3977
    %v4554 = vpack.c.b16 %v3996, %v3987
    %v4555 = vpack.c.b16 %v3997, %v3988
    %v4556 = vpack.c.b16 %v3998, %v3989
    %v4557 = vpack.c.b16 %v3999, %v3990
    %v4558 = vpack.c.b16 %v4000, %v3991
    %v4559 = vpack.c.b16 %v4001, %v3992
    %v4560 = vpack.c.b16 %v4002, %v3993
    %v4561 = vpack.c.b16 %v4003, %v3994
    %v4562 = vpack.c.b16 %v4004, %v3995
    %v4563 = vpack.c.b16 %v4014, %v4005
    %v4564 = vpack.c.b16 %v4015, %v4006
    %v4565 = vpack.c.b16 %v4016, %v4007
    %v4566 = vpack.c.b16 %v4017, %v4008
    %v4567 = vpack.c.b16 %v4018, %v4009
    %v4568 = vpack.c.b16 %v4019, %v4010
    %v4569 = vpack.c.b16 %v4020, %v4011
    %v4570 = vpack.c.b16 %v4021, %v4012
    %v4571 = vpack.c.b16 %v4022, %v4013
    %v4572 = vpack.c.b16 %v4032, %v4023
    %v4573 = vpack.c.b16 %v4033, %v4024
    %v4574 = vpack.c.b16 %v4034, %v4025
    %v4575 = vpack.c.b16 %v4035, %v4026
    %v4576 = vpack.c.b16 %v4036, %v4027
    %v4577 = vpack.c.b16 %v4037, %v4028
    %v4578 = vpack.c.b16 %v4038, %v4029
    %v4579 = vpack.c.b16 %v4039, %v4030
    %v4580 = vpack.c.b16 %v4040, %v4031
    %v4581 = vpack.c.b16 %v4050, %v4041
    %v4582 = vpack.c.b16 %v4051, %v4042
    %v4583 = vpack.c.b16 %v4052, %v4043
    %v4584 = vpack.c.b16 %v4053, %v4044
    %v4585 = vpack.c.b16 %v4054, %v4045
    %v4586 = vpack.c.b16 %v4055, %v4046
    %v4587 = vpack.c.b16 %v4056, %v4047
    %v4588 = vpack.c.b16 %v4057, %v4048
    %v4589 = vpack.c.b16 %v4058, %v4049
    %v4590 = vpack.c.b16 %v4068, %v4059
    %v4591 = vpack.c.b16 %v4069, %v4060
    %v4592 = vpack.c.b16 %v4070, %v4061
    %v4593 = vpack.c.b16 %v4071, %v4062
    %v4594 = vpack.c.b16 %v4072, %v4063
    %v4595 = vpack.c.b16 %v4073, %v4064
    %v4596 = vpack.c.b16 %v4074, %v4065
    %v4597 = vpack.c.b16 %v4075, %v4066
    %v4598 = vpack.c.b16 %v4076, %v4067
    %v4599 = vpack.c.b16 %v4086, %v4077
    %v4600 = vpack.c.b16 %v4087, %v4078
    %v4601 = vpack.c.b16 %v4088, %v4079
    %v4602 = vpack.c.b16 %v4089, %v4080
    %v4603 = vpack.c.b16 %v4090, %v4081
    %v4604 = vpack.c.b16 %v4091, %v4082
    %v4605 = vpack.c.b16 %v4092, %v4083
    %v4606 = vpack.c.b16 %v4093, %v4084
    %v4607 = vpack.c.b16 %v4094, %v4085
    %v4608 = vpack.c.b16 %v4104, %v4095
    %v4609 = vpack.c.b16 %v4105, %v4096
    %v4610 = vpack.c.b16 %v4106, %v4097
    %v4611 = vpack.c.b16 %v4107, %v4098
    %v4612 = vpack.c.b16 %v4108, %v4099
    %v4613 = vpack.c.b16 %v4109, %v4100
    %v4614 = vpack.c.b16 %v4110, %v4101
    %v4615 = vpack.c.b16 %v4111, %v4102
    %v4616 = vpack.c.b16 %v4112, %v4103
    %v4617 = vpack.c.b16 %v4122, %v4113
    %v4618 = vpack.c.b16 %v4123, %v4114
    %v4619 = vpack.c.b16 %v4124, %v4115
    %v4620 = vpack.c.b16 %v4125, %v4116
    %v4621 = vpack.c.b16 %v4126, %v4117
    %v4622 = vpack.c.b16 %v4127, %v4118
    %v4623 = vpack.c.b16 %v4128, %v4119
    %v4624 = vpack.c.b16 %v4129, %v4120
    %v4625 = vpack.c.b16 %v4130, %v4121
    %v4626 = vpack.c.b16 %v4140, %v4131
    %v4627 = vpack.c.b16 %v4141, %v4132
    %v4628 = vpack.c.b16 %v4142, %v4133
    %v4629 = vpack.c.b16 %v4143, %v4134
    %v4630 = vpack.c.b16 %v4144, %v4135
    %v4631 = vpack.c.b16 %v4145, %v4136
    %v4632 = vpack.c.b16 %v4146, %v4137
    %v4633 = vpack.c.b16 %v4147, %v4138
    %v4634 = vpack.c.b16 %v4148, %v4139
    %v4635 = vpack.c.b16 %v4158, %v4149
    %v4636 = vpack.c.b16 %v4159, %v4150
    %v4637 = vpack.c.b16 %v4160, %v4151
    %v4638 = vpack.c.b16 %v4161, %v4152
    %v4639 = vpack.c.b16 %v4162, %v4153
    %v4640 = vpack.c.b16 %v4163, %v4154
    %v4641 = vpack.c.b16 %v4164, %v4155
    %v4642 = vpack.c.b16 %v4165, %v4156
    %v4643 = vpack.c.b16 %v4166, %v4157
    %v4644 = vpack.c.b16 %v4176, %v4167
    %v4645 = vpack.c.b16 %v4177, %v4168
    %v4646 = vpack.c.b16 %v4178, %v4169
    %v4647 = vpack.c.b16 %v4179, %v4170
    %v4648 = vpack.c.b16 %v4180, %v4171
    %v4649 = vpack.c.b16 %v4181, %v4172
    %v4650 = vpack.c.b16 %v4182, %v4173
    %v4651 = vpack.c.b16 %v4183, %v4174
    %v4652 = vpack.c.b16 %v4184, %v4175
    %v4653 = vpack.c.b16 %v4194, %v4185
    %v4654 = vpack.c.b16 %v4195, %v4186
    %v4655 = vpack.c.b16 %v4196, %v4187
    %v4656 = vpack.c.b16 %v4197, %v4188
    %v4657 = vpack.c.b16 %v4198, %v4189
    %v4658 = vpack.c.b16 %v4199, %v4190
    %v4659 = vpack.c.b16 %v4200, %v4191
    %v4660 = vpack.c.b16 %v4201, %v4192
    %v4661 = vpack.c.b16 %v4202, %v4193
    %v4662 = vpack.c.b16 %v4212, %v4203
    %v4663 = vpack.c.b16 %v4213, %v4204
    %v4664 = vpack.c.b16 %v4214, %v4205
    %v4665 = vpack.c.b16 %v4215, %v4206
    %v4666 = vpack.c.b16 %v4216, %v4207
    %v4667 = vpack.c.b16 %v4217, %v4208
    %v4668 = vpack.c.b16 %v4218, %v4209
    %v4669 = vpack.c.b16 %v4219, %v4210
    %v4670 = vpack.c.b16 %v4220, %v4211
    %v4671 = vpack.c.b16 %v4230, %v4221
    %v4672 = vpack.c.b16 %v4231, %v4222
    %v4673 = vpack.c.b16 %v4232, %v4223
    %v4674 = vpack.c.b16 %v4233, %v4224
    %v4675 = vpack.c.b16 %v4234, %v4225
    %v4676 = vpack.c.b16 %v4235, %v4226
    %v4677 = vpack.c.b16 %v4236, %v4227
    %v4678 = vpack.c.b16 %v4237, %v4228
    %v4679 = vpack.c.b16 %v4238, %v4229
    %v4680 = vpack.c.b16 %v4248, %v4239
    %v4681 = vpack.c.b16 %v4249, %v4240
    %v4682 = vpack.c.b16 %v4250, %v4241
    %v4683 = vpack.c.b16 %v4251, %v4242
    %v4684 = vpack.c.b16 %v4252, %v4243
    %v4685 = vpack.c.b16 %v4253, %v4244
    %v4686 = vpack.c.b16 %v4254, %v4245
    %v4687 = vpack.c.b16 %v4255, %v4246
    %v4688 = vpack.c.b16 %v4256, %v4247
    %v4689 = vpack.c.b16 %v4266, %v4257
    %v4690 = vpack.c.b16 %v4267, %v4258
    %v4691 = vpack.c.b16 %v4268, %v4259
    %v4692 = vpack.c.b16 %v4269, %v4260
    %v4693 = vpack.c.b16 %v4270, %v4261
    %v4694 = vpack.c.b16 %v4271, %v4262
    %v4695 = vpack.c.b16 %v4272, %v4263
    %v4696 = vpack.c.b16 %v4273, %v4264
    %v4697 = vpack.c.b16 %v4274, %v4265
    %v4698 = vpack.c.b16 %v4284, %v4275
    %v4699 = vpack.c.b16 %v4285, %v4276
    %v4700 = vpack.c.b16 %v4286, %v4277
    %v4701 = vpack.c.b16 %v4287, %v4278
    %v4702 = vpack.c.b16 %v4288, %v4279
    %v4703 = vpack.c.b16 %v4289, %v4280
    %v4704 = vpack.c.b16 %v4290, %v4281
    %v4705 = vpack.c.b16 %v4291, %v4282
    %v4706 = vpack.c.b16 %v4292, %v4283
    %v4707 = vpack.c.b16 %v4302, %v4293
    %v4708 = vpack.c.b16 %v4303, %v4294
    %v4709 = vpack.c.b16 %v4304, %v4295
    %v4710 = vpack.c.b16 %v4305, %v4296
    %v4711 = vpack.c.b16 %v4306, %v4297
    %v4712 = vpack.c.b16 %v4307, %v4298
    %v4713 = vpack.c.b16 %v4308, %v4299
    %v4714 = vpack.c.b16 %v4309, %v4300
    %v4715 = vpack.c.b16 %v4310, %v4301
    %v4716 = vpack.c.b16 %v4320, %v4311
    %v4717 = vpack.c.b16 %v4321, %v4312
    %v4718 = vpack.c.b16 %v4322, %v4313
    %v4719 = vpack.c.b16 %v4323, %v4314
    %v4720 = vpack.c.b16 %v4324, %v4315
    %v4721 = vpack.c.b16 %v4325, %v4316
    %v4722 = vpack.c.b16 %v4326, %v4317
    %v4723 = vpack.c.b16 %v4327, %v4318
    %v4724 = vpack.c.b16 %v4328, %v4319
    %v4725 = vpack.c.b16 %v4338, %v4329
    %v4726 = vpack.c.b16 %v4339, %v4330
    %v4727 = vpack.c.b16 %v4340, %v4331
    %v4728 = vpack.c.b16 %v4341, %v4332
    %v4729 = vpack.c.b16 %v4342, %v4333
    %v4730 = vpack.c.b16 %v4343, %v4334
    %v4731 = vpack.c.b16 %v4344, %v4335
    %v4732 = vpack.c.b16 %v4345, %v4336
    %v4733 = vpack.c.b16 %v4346, %v4337
    %v4734 = vpack.c.b16 %v4356, %v4347
    %v4735 = vpack.c.b16 %v4357, %v4348
    %v4736 = vpack.c.b16 %v4358, %v4349
    %v4737 = vpack.c.b16 %v4359, %v4350
    %v4738 = vpack.c.b16 %v4360, %v4351
    %v4739 = vpack.c.b16 %v4361, %v4352
    %v4740 = vpack.c.b16 %v4362, %v4353
    %v4741 = vpack.c.b16 %v4363, %v4354
    %v4742 = vpack.c.b16 %v4364, %v4355
    %v4743 = vpack.c.b16 %v4374, %v4365
    %v4744 = vpack.c.b16 %v4375, %v4366
    %v4745 = vpack.c.b16 %v4376, %v4367
    %v4746 = vpack.c.b16 %v4377, %v4368
    %v4747 = vpack.c.b16 %v4378, %v4369
    %v4748 = vpack.c.b16 %v4379, %v4370
    %v4749 = vpack.c.b16 %v4380, %v4371
    %v4750 = vpack.c.b16 %v4381, %v4372
    %v4751 = vpack.c.b16 %v4382, %v4373
    %v4752 = vpack.c.b16 %v4392, %v4383
    %v4753 = vpack.c.b16 %v4393, %v4384
    %v4754 = vpack.c.b16 %v4394, %v4385
    %v4755 = vpack.c.b16 %v4395, %v4386
    %v4756 = vpack.c.b16 %v4396, %v4387
    %v4757 = vpack.c.b16 %v4397, %v4388
    %v4758 = vpack.c.b16 %v4398, %v4389
    %v4759 = vpack.c.b16 %v4399, %v4390
    %v4760 = vpack.c.b16 %v4400, %v4391
    %v4761 = vpack.c.b16 %v4410, %v4401
    %v4762 = vpack.c.b16 %v4411, %v4402
    %v4763 = vpack.c.b16 %v4412, %v4403
    %v4764 = vpack.c.b16 %v4413, %v4404
    %v4765 = vpack.c.b16 %v4414, %v4405
    %v4766 = vpack.c.b16 %v4415, %v4406
    %v4767 = vpack.c.b16 %v4416, %v4407
    %v4768 = vpack.c.b16 %v4417, %v4408
    %v4769 = vpack.c.b16 %v4418, %v4409
    %v4770 = vpack.c.b16 %v4428, %v4419
    %v4771 = vpack.c.b16 %v4429, %v4420
    %v4772 = vpack.c.b16 %v4430, %v4421
    %v4773 = vpack.c.b16 %v4431, %v4422
    %v4774 = vpack.c.b16 %v4432, %v4423
    %v4775 = vpack.c.b16 %v4433, %v4424
    %v4776 = vpack.c.b16 %v4434, %v4425
    %v4777 = vpack.c.b16 %v4435, %v4426
    %v4778 = vpack.c.b16 %v4436, %v4427
    %v4779 = vpack.c.b16 %v4446, %v4437
    %v4780 = vpack.c.b16 %v4447, %v4438
    %v4781 = vpack.c.b16 %v4448, %v4439
    %v4782 = vpack.c.b16 %v4449, %v4440
    %v4783 = vpack.c.b16 %v4450, %v4441
    %v4784 = vpack.c.b16 %v4451, %v4442
    %v4785 = vpack.c.b16 %v4452, %v4443
    %v4786 = vpack.c.b16 %v4453, %v4444
    %v4787 = vpack.c.b16 %v4454, %v4445
    %v4788 = vpack.c.b16 %v4464, %v4455
    %v4789 = vpack.c.b16 %v4465, %v4456
    %v4790 = vpack.c.b16 %v4466, %v4457
    %v4791 = vpack.c.b16 %v4467, %v4458
    %v4792 = vpack.c.b16 %v4468, %v4459
    %v4793 = vpack.c.b16 %v4469, %v4460
    %v4794 = vpack.c.b16 %v4470, %v4461
    %v4795 = vpack.c.b16 %v4471, %v4462
    %v4796 = vpack.c.b16 %v4472, %v4463
    %v4797 = vpack.c.b16 %v4482, %v4473
    %v4798 = vpack.c.b16 %v4483, %v4474
    %v4799 = vpack.c.b16 %v4484, %v4475
    %v4800 = vpack.c.b16 %v4485, %v4476
    %v4801 = vpack.c.b16 %v4486, %v4477
    %v4802 = vpack.c.b16 %v4487, %v4478
    %v4803 = vpack.c.b16 %v4488, %v4479
    %v4804 = vpack.c.b16 %v4489, %v4480
    %v4805 = vpack.c.b16 %v4490, %v4481
    %v4806 = vpack.c.b16 %v4500, %v4491
    %v4807 = vpack.c.b16 %v4501, %v4492
    %v4808 = vpack.c.b16 %v4502, %v4493
    %v4809 = vpack.c.b16 %v4503, %v4494
    %v4810 = vpack.c.b16 %v4504, %v4495
    %v4811 = vpack.c.b16 %v4505, %v4496
    %v4812 = vpack.c.b16 %v4506, %v4497
    %v4813 = vpack.c.b16 %v4507, %v4498
    %v4814 = vpack.c.b16 %v4508, %v4499
    %v4815 = vpack.c.b16 %v4518, %v4509
    %v4816 = vpack.c.b16 %v4519, %v4510
    %v4817 = vpack.c.b16 %v4520, %v4511
    %v4818 = vpack.c.b16 %v4521, %v4512
    %v4819 = vpack.c.b16 %v4522, %v4513
    %v4820 = vpack.c.b16 %v4523, %v4514
    %v4821 = vpack.c.b16 %v4524, %v4515
    %v4822 = vpack.c.b16 %v4525, %v4516
    %v4823 = vpack.c.b16 %v4526, %v4517
    %v4824 = vpack.c.b16 %v4536, %v4527
    %v4825 = vpack.c.b16 %v4537, %v4528
    %v4826 = vpack.c.b16 %v4538, %v4529
    %v4827 = vpack.c.b16 %v4539, %v4530
    %v4828 = vpack.c.b16 %v4540, %v4531
    %v4829 = vpack.c.b16 %v4541, %v4532
    %v4830 = vpack.c.b16 %v4542, %v4533
    %v4831 = vpack.c.b16 %v4543, %v4534
    %v4832 = vpack.c.b16 %v4544, %v4535
    %5121 = vmatprep.subr.bf16.mxu0 %v4609
    %5122 = vmatpush1.bf16.msra.mxu0 %v4608
    %5123 = vmatprep.subr.bf16.mxu0 %v4600
    %5124 = vmatpush1.bf16.msra.mxu0 %v4599
    %5125 = vmatprep.subr.bf16.mxu0 %v4591
    %5126 = vmatpush1.bf16.msra.mxu0 %v4590
    %5127 = vmatprep.subr.bf16.mxu0 %v4582
    %5128 = vmatpush1.bf16.msra.mxu0 %v4581
    %5129 = vmatprep.subr.bf16.mxu0 %v4573
    %5130 = vmatpush1.bf16.msra.mxu0 %v4572
    %5131 = vmatprep.subr.bf16.mxu0 %v4564
    %5132 = vmatpush1.bf16.msra.mxu0 %v4563
    %5133 = vmatprep.subr.bf16.mxu0 %v4555
    %5134 = vmatpush1.bf16.msra.mxu0 %v4554
    %5135 = vmatprep.subr.bf16.mxu0 %v4546
    %5136 = vmatpush1.bf16.msra.mxu0 %v4545
    %5137 = vmatprep.subr.bf16.mxu0 %v4681
    %5138 = vmatpush2.bf16.msra.mxu0 %v4680
    %5139 = vmatprep.subr.bf16.mxu0 %v4672
    %5140 = vmatpush2.bf16.msra.mxu0 %v4671
    %5141 = vmatprep.subr.bf16.mxu0 %v4663
    %5142 = vmatpush2.bf16.msra.mxu0 %v4662
    %5143 = vmatprep.subr.bf16.mxu0 %v4654
    %5144 = vmatpush2.bf16.msra.mxu0 %v4653
    %5145 = vmatprep.subr.bf16.mxu0 %v4645
    %5146 = vmatpush2.bf16.msra.mxu0 %v4644
    %5147 = vmatprep.subr.bf16.mxu0 %v4636
    %5148 = vmatpush2.bf16.msra.mxu0 %v4635
    %5149 = vmatprep.subr.bf16.mxu0 %v4627
    %5150 = vmatpush2.bf16.msra.mxu0 %v4626
    %5151 = vmatprep.subr.bf16.mxu0 %v4618
    %5152 = vmatpush2.bf16.msra.mxu0 %v4617
    %5153 = vmatprep.mubr.bf16.mxu0 %v3277
    %5154 = vmatmul.mubr.bf16.gmra.mxu0 %v3276
    %v5155 = vpop.f32.mrf.mxu0
    %v5156 = vadd.f32 %v3607, %v5155
    %v5157 = vpop.f32.mrf.mxu0
    %v5158 = vadd.f32 %v3611, %v5157
    %v5159 = vpop.f32.mrf.mxu0
    %v5160 = vpop.f32.mrf.mxu0
    %5161 = vdwg.mxu0
    %5162 = vmatprep.subr.bf16.mxu0 %v4753
    %5163 = vmatpush1.bf16.msra.mxu0 %v4752
    %5164 = vmatprep.subr.bf16.mxu0 %v4744
    %5165 = vmatpush1.bf16.msra.mxu0 %v4743
    %5166 = vmatprep.subr.bf16.mxu0 %v4735
    %5167 = vmatpush1.bf16.msra.mxu0 %v4734
    %5168 = vmatprep.subr.bf16.mxu0 %v4726
    %5169 = vmatpush1.bf16.msra.mxu0 %v4725
    %5170 = vmatprep.subr.bf16.mxu0 %v4717
    %5171 = vmatpush1.bf16.msra.mxu0 %v4716
    %5172 = vmatprep.subr.bf16.mxu0 %v4708
    %5173 = vmatpush1.bf16.msra.mxu0 %v4707
    %5174 = vmatprep.subr.bf16.mxu0 %v4699
    %5175 = vmatpush1.bf16.msra.mxu0 %v4698
    %5176 = vmatprep.subr.bf16.mxu0 %v4690
    %5177 = vmatpush1.bf16.msra.mxu0 %v4689
    %5178 = vmatprep.subr.bf16.mxu0 %v4825
    %5179 = vmatpush2.bf16.msra.mxu0 %v4824
    %5180 = vmatprep.subr.bf16.mxu0 %v4816
    %5181 = vmatpush2.bf16.msra.mxu0 %v4815
    %5182 = vmatprep.subr.bf16.mxu0 %v4807
    %5183 = vmatpush2.bf16.msra.mxu0 %v4806
    %5184 = vmatprep.subr.bf16.mxu0 %v4798
    %5185 = vmatpush2.bf16.msra.mxu0 %v4797
    %5186 = vmatprep.subr.bf16.mxu0 %v4789
    %5187 = vmatpush2.bf16.msra.mxu0 %v4788
    %5188 = vmatprep.subr.bf16.mxu0 %v4780
    %5189 = vmatpush2.bf16.msra.mxu0 %v4779
    %5190 = vmatprep.subr.bf16.mxu0 %v4771
    %5191 = vmatpush2.bf16.msra.mxu0 %v4770
    %5192 = vmatprep.subr.bf16.mxu0 %v4762
    %5193 = vmatpush2.bf16.msra.mxu0 %v4761
    %5194 = vmatprep.mubr.bf16.mxu0 %v3279
    %5195 = vmatmul.mubr.bf16.gmra.mxu0 %v3278
    %v5196 = vpop.f32.mrf.mxu0
    %v5197 = vadd.f32 %v5156, %v5196
    %v5198 = vpop.f32.mrf.mxu0
    %v5199 = vadd.f32 %v5158, %v5198
    %v5200 = vpop.f32.mrf.mxu0
    %v5201 = vpop.f32.mrf.mxu0
    %5202 = vdwg.mxu0
    %5203 = vmatprep.subr.bf16.mxu0 %v4611
    %5204 = vmatpush1.bf16.msra.mxu0 %v4610
    %5205 = vmatprep.subr.bf16.mxu0 %v4602
    %5206 = vmatpush1.bf16.msra.mxu0 %v4601
    %5207 = vmatprep.subr.bf16.mxu0 %v4593
    %5208 = vmatpush1.bf16.msra.mxu0 %v4592
    %5209 = vmatprep.subr.bf16.mxu0 %v4584
    %5210 = vmatpush1.bf16.msra.mxu0 %v4583
    %5211 = vmatprep.subr.bf16.mxu0 %v4575
    %5212 = vmatpush1.bf16.msra.mxu0 %v4574
    %5213 = vmatprep.subr.bf16.mxu0 %v4566
    %5214 = vmatpush1.bf16.msra.mxu0 %v4565
    %5215 = vmatprep.subr.bf16.mxu0 %v4557
    %5216 = vmatpush1.bf16.msra.mxu0 %v4556
    %5217 = vmatprep.subr.bf16.mxu0 %v4548
    %5218 = vmatpush1.bf16.msra.mxu0 %v4547
    %5219 = vmatprep.subr.bf16.mxu0 %v4683
    %5220 = vmatpush2.bf16.msra.mxu0 %v4682
    %5221 = vmatprep.subr.bf16.mxu0 %v4674
    %5222 = vmatpush2.bf16.msra.mxu0 %v4673
    %5223 = vmatprep.subr.bf16.mxu0 %v4665
    %5224 = vmatpush2.bf16.msra.mxu0 %v4664
    %5225 = vmatprep.subr.bf16.mxu0 %v4656
    %5226 = vmatpush2.bf16.msra.mxu0 %v4655
    %5227 = vmatprep.subr.bf16.mxu0 %v4647
    %5228 = vmatpush2.bf16.msra.mxu0 %v4646
    %5229 = vmatprep.subr.bf16.mxu0 %v4638
    %5230 = vmatpush2.bf16.msra.mxu0 %v4637
    %5231 = vmatprep.subr.bf16.mxu0 %v4629
    %5232 = vmatpush2.bf16.msra.mxu0 %v4628
    %5233 = vmatprep.subr.bf16.mxu0 %v4620
    %5234 = vmatpush2.bf16.msra.mxu0 %v4619
    %5235 = vmatprep.mubr.bf16.mxu0 %v3277
    %5236 = vmatmul.mubr.bf16.gmra.mxu0 %v3276
    %v5237 = vpop.f32.mrf.mxu0
    %v5238 = vadd.f32 %v3615, %v5237
    %v5239 = vpop.f32.mrf.mxu0
    %v5240 = vadd.f32 %v3619, %v5239
    %v5241 = vpop.f32.mrf.mxu0
    %v5242 = vpop.f32.mrf.mxu0
    %5243 = vdwg.mxu0
    %5244 = vmatprep.subr.bf16.mxu0 %v4755
    %5245 = vmatpush1.bf16.msra.mxu0 %v4754
    %5246 = vmatprep.subr.bf16.mxu0 %v4746
    %5247 = vmatpush1.bf16.msra.mxu0 %v4745
    %5248 = vmatprep.subr.bf16.mxu0 %v4737
    %5249 = vmatpush1.bf16.msra.mxu0 %v4736
    %5250 = vmatprep.subr.bf16.mxu0 %v4728
    %5251 = vmatpush1.bf16.msra.mxu0 %v4727
    %5252 = vmatprep.subr.bf16.mxu0 %v4719
    %5253 = vmatpush1.bf16.msra.mxu0 %v4718
    %5254 = vmatprep.subr.bf16.mxu0 %v4710
    %5255 = vmatpush1.bf16.msra.mxu0 %v4709
    %5256 = vmatprep.subr.bf16.mxu0 %v4701
    %5257 = vmatpush1.bf16.msra.mxu0 %v4700
    %5258 = vmatprep.subr.bf16.mxu0 %v4692
    %5259 = vmatpush1.bf16.msra.mxu0 %v4691
    %5260 = vmatprep.subr.bf16.mxu0 %v4827
    %5261 = vmatpush2.bf16.msra.mxu0 %v4826
    %5262 = vmatprep.subr.bf16.mxu0 %v4818
    %5263 = vmatpush2.bf16.msra.mxu0 %v4817
    %5264 = vmatprep.subr.bf16.mxu0 %v4809
    %5265 = vmatpush2.bf16.msra.mxu0 %v4808
    %5266 = vmatprep.subr.bf16.mxu0 %v4800
    %5267 = vmatpush2.bf16.msra.mxu0 %v4799
    %5268 = vmatprep.subr.bf16.mxu0 %v4791
    %5269 = vmatpush2.bf16.msra.mxu0 %v4790
    %5270 = vmatprep.subr.bf16.mxu0 %v4782
    %5271 = vmatpush2.bf16.msra.mxu0 %v4781
    %5272 = vmatprep.subr.bf16.mxu0 %v4773
    %5273 = vmatpush2.bf16.msra.mxu0 %v4772
    %5274 = vmatprep.subr.bf16.mxu0 %v4764
    %5275 = vmatpush2.bf16.msra.mxu0 %v4763
    %5276 = vmatprep.mubr.bf16.mxu0 %v3279
    %5277 = vmatmul.mubr.bf16.gmra.mxu0 %v3278
    %v5278 = vpop.f32.mrf.mxu0
    %v5279 = vadd.f32 %v5238, %v5278
    %v5280 = vpop.f32.mrf.mxu0
    %v5281 = vadd.f32 %v5240, %v5280
    %v5282 = vpop.f32.mrf.mxu0
    %v5283 = vpop.f32.mrf.mxu0
    %5284 = vdwg.mxu0
    %5285 = vmatprep.subr.bf16.mxu0 %v4613
    %5286 = vmatpush1.bf16.msra.mxu0 %v4612
    %5287 = vmatprep.subr.bf16.mxu0 %v4604
    %5288 = vmatpush1.bf16.msra.mxu0 %v4603
    %5289 = vmatprep.subr.bf16.mxu0 %v4595
    %5290 = vmatpush1.bf16.msra.mxu0 %v4594
    %5291 = vmatprep.subr.bf16.mxu0 %v4586
    %5292 = vmatpush1.bf16.msra.mxu0 %v4585
    %5293 = vmatprep.subr.bf16.mxu0 %v4577
    %5294 = vmatpush1.bf16.msra.mxu0 %v4576
    %5295 = vmatprep.subr.bf16.mxu0 %v4568
    %5296 = vmatpush1.bf16.msra.mxu0 %v4567
    %5297 = vmatprep.subr.bf16.mxu0 %v4559
    %5298 = vmatpush1.bf16.msra.mxu0 %v4558
    %5299 = vmatprep.subr.bf16.mxu0 %v4550
    %5300 = vmatpush1.bf16.msra.mxu0 %v4549
    %5301 = vmatprep.subr.bf16.mxu0 %v4685
    %5302 = vmatpush2.bf16.msra.mxu0 %v4684
    %5303 = vmatprep.subr.bf16.mxu0 %v4676
    %5304 = vmatpush2.bf16.msra.mxu0 %v4675
    %5305 = vmatprep.subr.bf16.mxu0 %v4667
    %5306 = vmatpush2.bf16.msra.mxu0 %v4666
    %5307 = vmatprep.subr.bf16.mxu0 %v4658
    %5308 = vmatpush2.bf16.msra.mxu0 %v4657
    %5309 = vmatprep.subr.bf16.mxu0 %v4649
    %5310 = vmatpush2.bf16.msra.mxu0 %v4648
    %5311 = vmatprep.subr.bf16.mxu0 %v4640
    %5312 = vmatpush2.bf16.msra.mxu0 %v4639
    %5313 = vmatprep.subr.bf16.mxu0 %v4631
    %5314 = vmatpush2.bf16.msra.mxu0 %v4630
    %5315 = vmatprep.subr.bf16.mxu0 %v4622
    %5316 = vmatpush2.bf16.msra.mxu0 %v4621
    %5317 = vmatprep.mubr.bf16.mxu0 %v3277
    %5318 = vmatmul.mubr.bf16.gmra.mxu0 %v3276
    %v5319 = vpop.f32.mrf.mxu0
    %v5320 = vadd.f32 %v3623, %v5319
    %v5321 = vpop.f32.mrf.mxu0
    %v5322 = vadd.f32 %v3627, %v5321
    %v5323 = vpop.f32.mrf.mxu0
    %v5324 = vpop.f32.mrf.mxu0
    %5325 = vdwg.mxu0
    %5326 = vmatprep.subr.bf16.mxu0 %v4757
    %5327 = vmatpush1.bf16.msra.mxu0 %v4756
    %5328 = vmatprep.subr.bf16.mxu0 %v4748
    %5329 = vmatpush1.bf16.msra.mxu0 %v4747
    %5330 = vmatprep.subr.bf16.mxu0 %v4739
    %5331 = vmatpush1.bf16.msra.mxu0 %v4738
    %5332 = vmatprep.subr.bf16.mxu0 %v4730
    %5333 = vmatpush1.bf16.msra.mxu0 %v4729
    %5334 = vmatprep.subr.bf16.mxu0 %v4721
    %5335 = vmatpush1.bf16.msra.mxu0 %v4720
    %5336 = vmatprep.subr.bf16.mxu0 %v4712
    %5337 = vmatpush1.bf16.msra.mxu0 %v4711
    %5338 = vmatprep.subr.bf16.mxu0 %v4703
    %5339 = vmatpush1.bf16.msra.mxu0 %v4702
    %5340 = vmatprep.subr.bf16.mxu0 %v4694
    %5341 = vmatpush1.bf16.msra.mxu0 %v4693
    %5342 = vmatprep.subr.bf16.mxu0 %v4829
    %5343 = vmatpush2.bf16.msra.mxu0 %v4828
    %5344 = vmatprep.subr.bf16.mxu0 %v4820
    %5345 = vmatpush2.bf16.msra.mxu0 %v4819
    %5346 = vmatprep.subr.bf16.mxu0 %v4811
    %5347 = vmatpush2.bf16.msra.mxu0 %v4810
    %5348 = vmatprep.subr.bf16.mxu0 %v4802
    %5349 = vmatpush2.bf16.msra.mxu0 %v4801
    %5350 = vmatprep.subr.bf16.mxu0 %v4793
    %5351 = vmatpush2.bf16.msra.mxu0 %v4792
    %5352 = vmatprep.subr.bf16.mxu0 %v4784
    %5353 = vmatpush2.bf16.msra.mxu0 %v4783
    %5354 = vmatprep.subr.bf16.mxu0 %v4775
    %5355 = vmatpush2.bf16.msra.mxu0 %v4774
    %5356 = vmatprep.subr.bf16.mxu0 %v4766
    %5357 = vmatpush2.bf16.msra.mxu0 %v4765
    %5358 = vmatprep.mubr.bf16.mxu0 %v3279
    %5359 = vmatmul.mubr.bf16.gmra.mxu0 %v3278
    %v5360 = vpop.f32.mrf.mxu0
    %v5361 = vadd.f32 %v5320, %v5360
    %v5362 = vpop.f32.mrf.mxu0
    %v5363 = vadd.f32 %v5322, %v5362
    %v5364 = vpop.f32.mrf.mxu0
    %v5365 = vpop.f32.mrf.mxu0
    %5366 = vdwg.mxu0
    %5367 = vmatprep.subr.bf16.mxu0 %v4615
    %5368 = vmatpush1.bf16.msra.mxu0 %v4614
    %5369 = vmatprep.subr.bf16.mxu0 %v4606
    %5370 = vmatpush1.bf16.msra.mxu0 %v4605
    %5371 = vmatprep.subr.bf16.mxu0 %v4597
    %5372 = vmatpush1.bf16.msra.mxu0 %v4596
    %5373 = vmatprep.subr.bf16.mxu0 %v4588
    %5374 = vmatpush1.bf16.msra.mxu0 %v4587
    %5375 = vmatprep.subr.bf16.mxu0 %v4579
    %5376 = vmatpush1.bf16.msra.mxu0 %v4578
    %5377 = vmatprep.subr.bf16.mxu0 %v4570
    %5378 = vmatpush1.bf16.msra.mxu0 %v4569
    %5379 = vmatprep.subr.bf16.mxu0 %v4561
    %5380 = vmatpush1.bf16.msra.mxu0 %v4560
    %5381 = vmatprep.subr.bf16.mxu0 %v4552
    %5382 = vmatpush1.bf16.msra.mxu0 %v4551
    %5383 = vmatprep.subr.bf16.mxu0 %v4687
    %5384 = vmatpush2.bf16.msra.mxu0 %v4686
    %5385 = vmatprep.subr.bf16.mxu0 %v4678
    %5386 = vmatpush2.bf16.msra.mxu0 %v4677
    %5387 = vmatprep.subr.bf16.mxu0 %v4669
    %5388 = vmatpush2.bf16.msra.mxu0 %v4668
    %5389 = vmatprep.subr.bf16.mxu0 %v4660
    %5390 = vmatpush2.bf16.msra.mxu0 %v4659
    %5391 = vmatprep.subr.bf16.mxu0 %v4651
    %5392 = vmatpush2.bf16.msra.mxu0 %v4650
    %5393 = vmatprep.subr.bf16.mxu0 %v4642
    %5394 = vmatpush2.bf16.msra.mxu0 %v4641
    %5395 = vmatprep.subr.bf16.mxu0 %v4633
    %5396 = vmatpush2.bf16.msra.mxu0 %v4632
    %5397 = vmatprep.subr.bf16.mxu0 %v4624
    %5398 = vmatpush2.bf16.msra.mxu0 %v4623
    %5399 = vmatprep.mubr.bf16.mxu0 %v3277
    %5400 = vmatmul.mubr.bf16.gmra.mxu0 %v3276
    %v5401 = vpop.f32.mrf.mxu0
    %v5402 = vadd.f32 %v3631, %v5401
    %v5403 = vpop.f32.mrf.mxu0
    %v5404 = vadd.f32 %v3635, %v5403
    %v5405 = vpop.f32.mrf.mxu0
    %v5406 = vpop.f32.mrf.mxu0
    %5407 = vdwg.mxu0
    %5408 = vmatprep.subr.bf16.mxu0 %v4759
    %5409 = vmatpush1.bf16.msra.mxu0 %v4758
    %5410 = vmatprep.subr.bf16.mxu0 %v4750
    %5411 = vmatpush1.bf16.msra.mxu0 %v4749
    %5412 = vmatprep.subr.bf16.mxu0 %v4741
    %5413 = vmatpush1.bf16.msra.mxu0 %v4740
    %5414 = vmatprep.subr.bf16.mxu0 %v4732
    %5415 = vmatpush1.bf16.msra.mxu0 %v4731
    %5416 = vmatprep.subr.bf16.mxu0 %v4723
    %5417 = vmatpush1.bf16.msra.mxu0 %v4722
    %5418 = vmatprep.subr.bf16.mxu0 %v4714
    %5419 = vmatpush1.bf16.msra.mxu0 %v4713
    %5420 = vmatprep.subr.bf16.mxu0 %v4705
    %5421 = vmatpush1.bf16.msra.mxu0 %v4704
    %5422 = vmatprep.subr.bf16.mxu0 %v4696
    %5423 = vmatpush1.bf16.msra.mxu0 %v4695
    %5424 = vmatprep.subr.bf16.mxu0 %v4831
    %5425 = vmatpush2.bf16.msra.mxu0 %v4830
    %5426 = vmatprep.subr.bf16.mxu0 %v4822
    %5427 = vmatpush2.bf16.msra.mxu0 %v4821
    %5428 = vmatprep.subr.bf16.mxu0 %v4813
    %5429 = vmatpush2.bf16.msra.mxu0 %v4812
    %5430 = vmatprep.subr.bf16.mxu0 %v4804
    %5431 = vmatpush2.bf16.msra.mxu0 %v4803
    %5432 = vmatprep.subr.bf16.mxu0 %v4795
    %5433 = vmatpush2.bf16.msra.mxu0 %v4794
    %5434 = vmatprep.subr.bf16.mxu0 %v4786
    %5435 = vmatpush2.bf16.msra.mxu0 %v4785
    %5436 = vmatprep.subr.bf16.mxu0 %v4777
    %5437 = vmatpush2.bf16.msra.mxu0 %v4776
    %5438 = vmatprep.subr.bf16.mxu0 %v4768
    %5439 = vmatpush2.bf16.msra.mxu0 %v4767
    %5440 = vmatprep.mubr.bf16.mxu0 %v3279
    %5441 = vmatmul.mubr.bf16.gmra.mxu0 %v3278
    %v5442 = vpop.f32.mrf.mxu0
    %v5443 = vadd.f32 %v5402, %v5442
    %v5444 = vpop.f32.mrf.mxu0
    %v5445 = vadd.f32 %v5404, %v5444
    %v5446 = vpop.f32.mrf.mxu0
    %v5447 = vpop.f32.mrf.mxu0
    %5448 = vdwg.mxu0
    %5449 = vmatprep.subr.bf16.mxu0 0
    %5450 = vmatpush1.bf16.msra.mxu0 %v4616
    %5451 = vmatprep.subr.bf16.mxu0 0
    %5452 = vmatpush1.bf16.msra.mxu0 %v4607
    %5453 = vmatprep.subr.bf16.mxu0 0
    %5454 = vmatpush1.bf16.msra.mxu0 %v4598
    %5455 = vmatprep.subr.bf16.mxu0 0
    %5456 = vmatpush1.bf16.msra.mxu0 %v4589
    %5457 = vmatprep.subr.bf16.mxu0 0
    %5458 = vmatpush1.bf16.msra.mxu0 %v4580
    %5459 = vmatprep.subr.bf16.mxu0 0
    %5460 = vmatpush1.bf16.msra.mxu0 %v4571
    %5461 = vmatprep.subr.bf16.mxu0 0
    %5462 = vmatpush1.bf16.msra.mxu0 %v4562
    %5463 = vmatprep.subr.bf16.mxu0 0
    %5464 = vmatpush1.bf16.msra.mxu0 %v4553
    %5465 = vmatprep.subr.bf16.mxu0 0
    %5466 = vmatpush2.bf16.msra.mxu0 %v4688
    %5467 = vmatprep.subr.bf16.mxu0 0
    %5468 = vmatpush2.bf16.msra.mxu0 %v4679
    %5469 = vmatprep.subr.bf16.mxu0 0
    %5470 = vmatpush2.bf16.msra.mxu0 %v4670
    %5471 = vmatprep.subr.bf16.mxu0 0
    %5472 = vmatpush2.bf16.msra.mxu0 %v4661
    %5473 = vmatprep.subr.bf16.mxu0 0
    %5474 = vmatpush2.bf16.msra.mxu0 %v4652
    %5475 = vmatprep.subr.bf16.mxu0 0
    %5476 = vmatpush2.bf16.msra.mxu0 %v4643
    %5477 = vmatprep.subr.bf16.mxu0 0
    %5478 = vmatpush2.bf16.msra.mxu0 %v4634
    %5479 = vmatprep.subr.bf16.mxu0 0
    %5480 = vmatpush2.bf16.msra.mxu0 %v4625
    %5481 = vmatprep.mubr.bf16.mxu0 %v3277
    %5482 = vmatmul.mubr.bf16.gmra.mxu0 %v3276
    %v5483 = vpop.f32.mrf.mxu0
    %v5484 = vadd.f32 %v3639, %v5483
    %v5485 = vpop.f32.mrf.mxu0
    %v5486 = vpop.f32.mrf.mxu0
    %v5487 = vpop.f32.mrf.mxu0
    %5488 = vdwg.mxu0
    %5489 = vmatprep.subr.bf16.mxu0 0
    %5490 = vmatpush1.bf16.msra.mxu0 %v4760
    %5491 = vmatprep.subr.bf16.mxu0 0
    %5492 = vmatpush1.bf16.msra.mxu0 %v4751
    %5493 = vmatprep.subr.bf16.mxu0 0
    %5494 = vmatpush1.bf16.msra.mxu0 %v4742
    %5495 = vmatprep.subr.bf16.mxu0 0
    %5496 = vmatpush1.bf16.msra.mxu0 %v4733
    %5497 = vmatprep.subr.bf16.mxu0 0
    %5498 = vmatpush1.bf16.msra.mxu0 %v4724
    %5499 = vmatprep.subr.bf16.mxu0 0
    %5500 = vmatpush1.bf16.msra.mxu0 %v4715
    %5501 = vmatprep.subr.bf16.mxu0 0
    %5502 = vmatpush1.bf16.msra.mxu0 %v4706
    %5503 = vmatprep.subr.bf16.mxu0 0
    %5504 = vmatpush1.bf16.msra.mxu0 %v4697
    %5505 = vmatprep.subr.bf16.mxu0 0
    %5506 = vmatpush2.bf16.msra.mxu0 %v4832
    %5507 = vmatprep.subr.bf16.mxu0 0
    %5508 = vmatpush2.bf16.msra.mxu0 %v4823
    %5509 = vmatprep.subr.bf16.mxu0 0
    %5510 = vmatpush2.bf16.msra.mxu0 %v4814
    %5511 = vmatprep.subr.bf16.mxu0 0
    %5512 = vmatpush2.bf16.msra.mxu0 %v4805
    %5513 = vmatprep.subr.bf16.mxu0 0
    %5514 = vmatpush2.bf16.msra.mxu0 %v4796
    %5515 = vmatprep.subr.bf16.mxu0 0
    %5516 = vmatpush2.bf16.msra.mxu0 %v4787
    %5517 = vmatprep.subr.bf16.mxu0 0
    %5518 = vmatpush2.bf16.msra.mxu0 %v4778
    %5519 = vmatprep.subr.bf16.mxu0 0
    %5520 = vmatpush2.bf16.msra.mxu0 %v4769
    %5521 = vmatprep.mubr.bf16.mxu0 %v3279
    %5522 = vmatmul.mubr.bf16.gmra.mxu0 %v3278
    %v5523 = vpop.f32.mrf.mxu0
    %v5524 = vadd.f32 %v5484, %v5523
    %v5525 = vpop.f32.mrf.mxu0
    %v5526 = vpop.f32.mrf.mxu0
    %v5527 = vpop.f32.mrf.mxu0
    %5528 = vdwg.mxu0
    %v5529 = vpack.c.bf16 %v5197, %v5197
    %v5530 = vpack.c.bf16 %v5199, %v5199
    %v5531 = vpack.c.bf16 %v5279, %v5279
    %v5532 = vpack.c.bf16 %v5281, %v5281
    %v5533 = vpack.c.bf16 %v5361, %v5361
    %v5534 = vpack.c.bf16 %v5363, %v5363
    %v5535 = vpack.c.bf16 %v5443, %v5443
    %v5536 = vpack.c.bf16 %v5445, %v5445
    %v5537 = vpack.c.bf16 %v5524, %v5524
    %v5547 = vunpack.c.l.b16 %v5529
    %v5548 = vunpack.c.l.b16 %v5530
    %v5549 = vunpack.c.l.b16 %v5531
    %v5550 = vunpack.c.l.b16 %v5532
    %v5551 = vunpack.c.l.b16 %v5533
    %v5552 = vunpack.c.l.b16 %v5534
    %v5553 = vunpack.c.l.b16 %v5535
    %v5554 = vunpack.c.l.b16 %v5536
    %v5555 = vunpack.c.l.b16 %v5537
    %v5556 = vpack.c.b16 %v5548, %v5547
    %v5557 = vpack.c.b16 %v5550, %v5549
    %v5558 = vpack.c.b16 %v5552, %v5551
    %v5559 = vpack.c.b16 %v5554, %v5553
    %v5560 = vpack.c.b16 %v5555, %v5555
    %5566 = vst [vmem:[#allocation23] sm:$0xff] %v5556
    %5567 = vst [vmem:[#allocation23 + $0x8] sm:$0xff] %v5557
    %5568 = vst [vmem:[#allocation23 + $0x10] sm:$0xff] %v5558
    %5569 = vst [vmem:[#allocation23 + $0x18] sm:$0xff] %v5559
    %5570 = vst [vmem:[#allocation23 + $0x20] sm:$0xf] %v5560
    // Predicated region
    $region102: #{autoencoder_forward.1} parent=1 // pred_check
      _
    $region103: #{autoencoder_forward.1} parent=1 // pred_check_branch
      %5572 = sbr.rel (0) target = $region105
    $region104: #{autoencoder_forward.1} parent=1 // pred_region
      %s5574 = ssub.s32 128, 128
      %5575 = vsyncadd [#allocation4], %s5574
      %s5577 = sshll.u32 [#allocation22], 4
      %s5578 = int_to_ptr.vmem [resolvable:$true] %s5577
      %5580 = dma.vmem_to_hbm [thread:$0]  %s5578, 128, %s13, [#allocation4]
    $region105: #{autoencoder_forward.1} parent=1 // pred_fallthru
      _
    // Predicated region
    $region106: #{autoencoder_forward.1} parent=1 // pred_check
      _
    $region107: #{autoencoder_forward.1} parent=1 // pred_check_branch
      %5582 = sbr.rel (0) target = $region109
    $region108: #{autoencoder_forward.1} parent=1 // pred_region
      %s5584 = ssub.s32 576, 576
      %5585 = vsyncadd [#allocation24], %s5584
      %s5587 = sshll.u32 [#allocation23], 4
      %s5588 = int_to_ptr.vmem [resolvable:$true] %s5587
      %5590 = dma.vmem_to_hbm [thread:$0]  %s5588, 576, %s14, [#allocation24]
    $region109: #{autoencoder_forward.1} parent=1 // pred_fallthru
      _
    // Predicated region
    $region110: #{autoencoder_forward.1} parent=1 // pred_check
      _
    $region111: #{autoencoder_forward.1} parent=1 // pred_check_branch
      %5592 = sbr.rel (0) target = $region113
    $region112: #{autoencoder_forward.1} parent=1 // pred_region
      %5593 = dma.done [#allocation4], 128
    $region113: #{autoencoder_forward.1} parent=1 // pred_fallthru
      _
    // Predicated region
    $region114: #{autoencoder_forward.1} parent=1 // pred_check
      _
    $region115: #{autoencoder_forward.1} parent=1 // pred_check_branch
      %5595 = sbr.rel (0) target = $region117
    $region116: #{autoencoder_forward.1} parent=1 // pred_region
      %5596 = dma.done [#allocation24], 576
    $region117: #{autoencoder_forward.1} parent=1 // pred_fallthru
      _
    %5597 = vsyncpa [#allocation3], 1
    %5598 = vsyncpa [#allocation6], 1
    %5599 = vsyncpa [#allocation9], 1
    %5600 = vsyncpa [#allocation12], 1
    %5601 = vsyncpa [#allocation15], 1
    %5602 = vsyncpa [#allocation18], 1
    %5603 = vsyncpa [#allocation21], 1
    %5604 = vsyncpa [#allocation4], 1
    %5605 = vsyncpa [#allocation24], 1

</llo_original>
